<compile_context>
chip_gen: v6e
topology: v6e:2x2x1
jax: 0.10.0
libtpu: 0.0.40
codegen_flags: <defaults>
</compile_context>

<pallas_src>
import math

import jax
import jax.numpy as jnp
from jax.experimental import pallas as pl
from jax.experimental.pallas import tpu as pltpu


# ----------------------------------------------------------------------------
# Shared per-head attention core (softmax scale already folded into Q).
# ----------------------------------------------------------------------------
def _attend_heads(q_tile, read_kh, read_vh, num_heads, head_dim, attn_ref):
    """q_tile: (TQ, D) bf16.  read_kh(h)/read_vh(h): (N, hd) bf16 slices of head h.
    attn_ref: (TQ, D) bf16 VMEM scratch; head h lands at lanes [h*hd, (h+1)*hd)."""
    for h in range(num_heads):
        lo = h * head_dim
        qh = q_tile[:, lo:lo + head_dim]                      # (TQ, hd) bf16
        kh = read_kh(h)                                       # (N,  hd) bf16
        vh = read_vh(h)                                       # (N,  hd) bf16

        # scores = qh @ kh.T (contract the lane dim; no transposed copy).
        s = jax.lax.dot_general(qh, kh, (((1,), (1,)), ((), ())),
                                preferred_element_type=jnp.float32)  # (TQ, N) f32

        # Softmax with deferred normalization: only exp() touches the (TQ, N)
        # tile; the 1/denom multiply is applied to the (TQ, hd) PV result.
        # TODO(synk): for long sequences (esp. v7x, 64 MiB VMEM) add a KV grid
        # axis with online (flash) softmax instead of full-(N, hd) K/V slices.
        m = jnp.max(s, axis=-1, keepdims=True)
        e = jnp.exp(s - m)                                    # (TQ, N) f32
        denom = jnp.sum(e, axis=-1, keepdims=True)            # (TQ, 1) f32

        pv = jnp.dot(e.astype(jnp.bfloat16), vh,
                     preferred_element_type=jnp.float32)      # (TQ, hd) f32
        attn_ref[:, lo:lo + head_dim] = (
            pv * pl.reciprocal(denom, approx=True)).astype(jnp.bfloat16)


# ----------------------------------------------------------------------------
# Kernels.
# ----------------------------------------------------------------------------
def _mha_self_kernel(num_heads, head_dim, d_model, tq):
    """Self-attention (q = k = v): fused (D, 3D) QKV projection cached in VMEM."""
    D = d_model

    def kernel(x_ref, wqkv_ref, bqkv_ref, wo_ref, bo_ref, o_ref, qkv_sc, attn_sc):
        qi = pl.program_id(1)

        # Fused QKV projection, once per batch element; cached as bf16.
        @pl.when(qi == 0)
        def _():
            x = x_ref[0].astype(jnp.bfloat16)                           # (N, D)
            proj = jnp.dot(x, wqkv_ref[...],
                           preferred_element_type=jnp.float32) + bqkv_ref[...]
            qkv_sc[...] = proj.astype(jnp.bfloat16)                     # (N, 3D)

        row = pl.multiple_of(qi * tq, tq)
        q_tile = qkv_sc[pl.ds(row, tq), pl.ds(0, D)]                    # (TQ, D)

        _attend_heads(
            q_tile,
            lambda h: qkv_sc[:, D + h * head_dim: D + (h + 1) * head_dim],
            lambda h: qkv_sc[:, 2 * D + h * head_dim: 2 * D + (h + 1) * head_dim],
            num_heads, head_dim, attn_sc)

        out = jnp.dot(attn_sc[...], wo_ref[...],
                      preferred_element_type=jnp.float32) + bo_ref[...]
        o_ref[0] = out.astype(o_ref.dtype)

    return kernel


def _mha_general_kernel(num_heads, head_dim, d_model):
    """General (cross-attention capable) path: K/V projections cached in VMEM."""
    D = d_model

    def kernel(xq_ref, xk_ref, xv_ref,
               wq_ref, bq_ref, wk_ref, bk_ref, wv_ref, bv_ref, wo_ref, bo_ref,
               o_ref, kv_sc, attn_sc):
        qi = pl.program_id(1)

        # K / V projections once per batch element (not per query tile).
        @pl.when(qi == 0)
        def _():
            xk = xk_ref[0].astype(jnp.bfloat16)                         # (N, D)
            xv = xv_ref[0].astype(jnp.bfloat16)
            kw = jnp.dot(xk, wk_ref[...],
                         preferred_element_type=jnp.float32) + bk_ref[...]
            vw = jnp.dot(xv, wv_ref[...],
                         preferred_element_type=jnp.float32) + bv_ref[...]
            kv_sc[:, 0:D] = kw.astype(jnp.bfloat16)
            kv_sc[:, D:2 * D] = vw.astype(jnp.bfloat16)

        # Q projection for this (TQ, D) tile only (scale folded into wq/bq).
        xq = xq_ref[0].astype(jnp.bfloat16)
        q_tile = (jnp.dot(xq, wq_ref[...],
                          preferred_element_type=jnp.float32) + bq_ref[...]
                  ).astype(jnp.bfloat16)

        _attend_heads(
            q_tile,
            lambda h: kv_sc[:, h * head_dim:(h + 1) * head_dim],
            lambda h: kv_sc[:, D + h * head_dim: D + (h + 1) * head_dim],
            num_heads, head_dim, attn_sc)

        out = jnp.dot(attn_sc[...], wo_ref[...],
                      preferred_element_type=jnp.float32) + bo_ref[...]
        o_ref[0] = out.astype(o_ref.dtype)

    return kernel


# ----------------------------------------------------------------------------
# One-time parameter prep (outside the per-call hot path).
# ----------------------------------------------------------------------------
def prepare_params(params, d_model, num_heads, *, fuse_qkv=False):
    """Transpose nn.Linear weights (out,in)->(in,out), cast to bf16, fold the
    1/sqrt(head_dim) attention scale into Wq/bq, and (optionally) fuse
    Wq/Wk/Wv into one (D, 3D) matrix for the self-attention path.  Biases stay
    f32 (added after the f32 MXU accumulation)."""
    head_dim = d_model // num_heads
    scale = 1.0 / math.sqrt(head_dim)

    wq = jnp.asarray(params["wq_w"], jnp.float32).T * scale
    bq = jnp.asarray(params["wq_b"], jnp.float32) * scale
    wk = jnp.asarray(params["wk_w"], jnp.float32).T
    bk = jnp.asarray(params["wk_b"], jnp.float32)
    wv = jnp.asarray(params["wv_w"], jnp.float32).T
    bv = jnp.asarray(params["wv_b"], jnp.float32)
    wo = jnp.asarray(params["wo_w"], jnp.float32).T
    bo = jnp.asarray(params["wo_b"], jnp.float32)

    prepped = {"wo_w": wo.astype(jnp.bfloat16),
               "wo_b": bo.reshape(1, d_model)}
    if fuse_qkv:
        prepped["fused"] = True
        prepped["wqkv_w"] = jnp.concatenate([wq, wk, wv], axis=1).astype(jnp.bfloat16)
        prepped["wqkv_b"] = jnp.concatenate([bq, bk, bv]).reshape(1, 3 * d_model)
    else:
        prepped["fused"] = False
        prepped["wq_w"] = wq.astype(jnp.bfloat16); prepped["wq_b"] = bq.reshape(1, d_model)
        prepped["wk_w"] = wk.astype(jnp.bfloat16); prepped["wk_b"] = bk.reshape(1, d_model)
        prepped["wv_w"] = wv.astype(jnp.bfloat16); prepped["wv_b"] = bv.reshape(1, d_model)
    return prepped


# ----------------------------------------------------------------------------
# Wrappers.
# ----------------------------------------------------------------------------
def _vmem_cap_bytes():
    # 3/4 of physical VMEM: ~96 MiB on v5e/v6e (128 MiB), ~48 MiB on v7x (64 MiB).
    try:
        phys = pltpu.get_tpu_info().vmem_capacity_bytes
    except Exception:
        phys = 64 * 1024 * 1024
    return int(phys * 3) // 4


def _tile_and_check(N, D, num_heads, tq):
    assert D % num_heads == 0, "d_model must divide evenly across heads"
    assert D % 128 == 0, "d_model must be a multiple of 128 (lane-dense tiles)"
    TQ = min(tq, N)
    # TODO(synk): sequences that no valid TQ divides (e.g. ViT's N=197 with
    # multi-tile grids) need padding + masking; TQ == N (whole sequence) works.
    assert N % TQ == 0 and (TQ % 8 == 0 or TQ == N)
    return TQ, N // TQ


def multi_head_attention_self(x, prepped, num_heads, *, tq=256):
    """Self-attention fast path (q = k = v = x).  x: (B, N, D), f32 or bf16."""
    assert prepped["fused"]
    B, N, D = x.shape
    head_dim = D // num_heads
    TQ, num_q_tiles = _tile_and_check(N, D, num_heads, tq)
    in_sz = x.dtype.itemsize

    x_spec = pl.BlockSpec((1, N, D), lambda b, qi: (b, 0, 0))
    # Constant index_map -> Pallas skips re-DMA of these blocks between steps.
    # TODO(synk): on v7x at large D, add pipeline_mode=pl.Buffered(1) to the
    # weight/bias specs to single-buffer the constant blocks (VMEM headroom).
    wqkv_spec = pl.BlockSpec((D, 3 * D), lambda b, qi: (0, 0))
    bqkv_spec = pl.BlockSpec((1, 3 * D), lambda b, qi: (0, 0))
    wo_spec = pl.BlockSpec((D, D), lambda b, qi: (0, 0))
    bo_spec = pl.BlockSpec((1, D), lambda b, qi: (0, 0))
    out_spec = pl.BlockSpec((1, TQ, D), lambda b, qi: (b, qi, 0))

    # Explicit VMEM budget: double-buffered pipeline blocks + persistent scratch
    # + in-kernel f32 temporaries, 25% headroom, capped at 3/4 physical VMEM.
    blocks = (2 * N * D * in_sz                      # x block
              + 2 * (3 * D * D * 2 + 3 * D * 4)      # fused QKV weight + bias
              + 2 * (D * D * 2 + D * 4)              # output-proj weight + bias
              + 2 * TQ * D * in_sz)                  # output tile
    scratch = N * 3 * D * 2 + TQ * D * 2             # QKV cache + head merge (bf16)
    temps = N * 3 * D * 4 + 2 * TQ * N * 4 + TQ * D * 4
    vmem_limit = min(max(int((blocks + scratch + temps) * 1.25),
                         16 * 1024 * 1024), _vmem_cap_bytes())

    return pl.pallas_call(
        _mha_self_kernel(num_heads, head_dim, D, TQ),
        out_shape=jax.ShapeDtypeStruct((B, N, D), x.dtype),
        grid_spec=pltpu.PrefetchScalarGridSpec(
            num_scalar_prefetch=0,
            grid=(B, num_q_tiles),
            in_specs=[x_spec, wqkv_spec, bqkv_spec, wo_spec, bo_spec],
            out_specs=out_spec,
            scratch_shapes=[pltpu.VMEM((N, 3 * D), jnp.bfloat16),
                            pltpu.VMEM((TQ, D), jnp.bfloat16)]),
        # Query-tile axis carries the cached projection -> "arbitrary"; batch
        # axis stays "parallel" so v7x's two TensorCores split work by batch.
        compiler_params=pltpu.CompilerParams(
            dimension_semantics=("parallel", "arbitrary"),
            vmem_limit_bytes=vmem_limit),
    )(x, prepped["wqkv_w"], prepped["wqkv_b"], prepped["wo_w"], prepped["wo_b"])


def multi_head_attention(q, k, v, prepped, num_heads, *, tq=256):
    """General path (distinct q, k, v).  q, k, v: (B, N, D), f32 or bf16."""
    assert not prepped["fused"]
    B, N, D = q.shape
    assert k.shape == (B, N, D) and v.shape == (B, N, D)
    head_dim = D // num_heads
    TQ, num_q_tiles = _tile_and_check(N, D, num_heads, tq)
    in_sz = q.dtype.itemsize

    q_spec = pl.BlockSpec((1, TQ, D), lambda b, qi: (b, qi, 0))
    kv_spec = pl.BlockSpec((1, N, D), lambda b, qi: (b, 0, 0))
    w_spec = pl.BlockSpec((D, D), lambda b, qi: (0, 0))
    b_spec = pl.BlockSpec((1, D), lambda b, qi: (0, 0))
    out_spec = pl.BlockSpec((1, TQ, D), lambda b, qi: (b, qi, 0))

    blocks = (2 * TQ * D * in_sz                     # q tile
              + 2 * 2 * N * D * in_sz                # k, v (full sequence)
              + 2 * 4 * (D * D * 2 + D * 4)          # 4 weights + biases
              + 2 * TQ * D * in_sz)                  # output tile
    scratch = N * 2 * D * 2 + TQ * D * 2             # K/V cache + head merge (bf16)
    temps = N * 2 * D * 4 + TQ * D * 4 + 2 * TQ * N * 4 + TQ * D * 4
    vmem_limit = min(max(int((blocks + scratch + temps) * 1.25),
                         16 * 1024 * 1024), _vmem_cap_bytes())

    return pl.pallas_call(
        _mha_general_kernel(num_heads, head_dim, D),
        out_shape=jax.ShapeDtypeStruct((B, N, D), q.dtype),
        grid_spec=pltpu.PrefetchScalarGridSpec(
            num_scalar_prefetch=0,
            grid=(B, num_q_tiles),
            in_specs=[q_spec, kv_spec, kv_spec,
                      w_spec, b_spec, w_spec, b_spec, w_spec, b_spec,
                      w_spec, b_spec],
            out_specs=out_spec,
            scratch_shapes=[pltpu.VMEM((N, 2 * D), jnp.bfloat16),
                            pltpu.VMEM((TQ, D), jnp.bfloat16)]),
        compiler_params=pltpu.CompilerParams(
            dimension_semantics=("parallel", "arbitrary"),
            vmem_limit_bytes=vmem_limit),
    )(q, k, v,
      prepped["wq_w"], prepped["wq_b"],
      prepped["wk_w"], prepped["wk_b"],
      prepped["wv_w"], prepped["wv_b"],
      prepped["wo_w"], prepped["wo_b"])


# ----------------------------------------------------------------------------
# Pure-JAX f32 reference mirroring the PyTorch module exactly.
# ----------------------------------------------------------------------------
def _reference_mha(q, k, v, params, num_heads):
    B, N, D = q.shape
    hd = D // num_heads

    def linear(x, w, b):
        return x @ w.T + b

    qw = linear(q, params["wq_w"], params["wq_b"])
    kw = linear(k, params["wk_w"], params["wk_b"])
    vw = linear(v, params["wv_w"], params["wv_b"])

    def split(x):
        return x.reshape(B, N, num_heads, hd).transpose(0, 2, 1, 3)

    qh, kh, vh = split(qw), split(kw), split(vw)
    scores = jnp.matmul(qh, jnp.swapaxes(kh, -2, -1)) / jnp.sqrt(jnp.float32(hd))
    w = jax.nn.softmax(scores, axis=-1)
    attn = jnp.matmul(w, vh).transpose(0, 2, 1, 3).reshape(B, N, D)
    return linear(attn, params["wo_w"], params["wo_b"])


if __name__ == "__main__":
    # Small but lane-aligned shapes: 256-token sequence, 256-dim model,
    # head_dim = 128.  tq=128 -> 2 query tiles per batch element, which
    # exercises the cached-projection reuse across the "arbitrary" grid axis.
    B, N, d_model, num_heads = 2, 256, 256, 2

    key = jax.random.PRNGKey(0)
    keys = jax.random.split(key, 12)

    def init_linear(kw_key, kb_key, fan_in):
        bound = 1.0 / math.sqrt(fan_in)
        w = jax.random.uniform(kw_key, (d_model, d_model), jnp.float32, -bound, bound)
        b = jax.random.uniform(kb_key, (d_model,), jnp.float32, -bound, bound)
        return w, b

    params = {}
    for i, name in enumerate(["wq", "wk", "wv", "wo"]):
        w, b = init_linear(keys[2 * i], keys[2 * i + 1], d_model)
        params[f"{name}_w"] = w
        params[f"{name}_b"] = b

    q = jax.random.normal(keys[8], (B, N, d_model), jnp.float32)
    k = jax.random.normal(keys[9], (B, N, d_model), jnp.float32)
    v = jax.random.normal(keys[10], (B, N, d_model), jnp.float32)
    x = jax.random.normal(keys[11], (B, N, d_model), jnp.float32)

    # One-time weight prep (transpose + bf16 cast + scale folding / QKV fusion).
    prepped_general = prepare_params(params, d_model, num_heads, fuse_qkv=False)
    prepped_self = prepare_params(params, d_model, num_heads, fuse_qkv=True)

    # Self-attention (ViT) fast path: activation DMA'd once, fused QKV matmul.
    out_self = jax.block_until_ready(
        multi_head_attention_self(x, prepped_self, num_heads, tq=128))
    ref_self = _reference_mha(x, x, x, params, num_heads)
    assert out_self.shape == (B, N, d_model)
    assert jnp.allclose(out_self, ref_self, atol=2e-2, rtol=2e-2), (
        "self-attention mismatch vs reference, max abs diff = "
        f"{float(jnp.max(jnp.abs(out_self - ref_self)))}")

    # General path (distinct q, k, v): K/V projections cached across query tiles.
    out_gen = jax.block_until_ready(
        multi_head_attention(q, k, v, prepped_general, num_heads, tq=128))
    ref_gen = _reference_mha(q, k, v, params, num_heads)
    assert out_gen.shape == (B, N, d_model)
    assert jnp.allclose(out_gen, ref_gen, atol=2e-2, rtol=2e-2), (
        "general-path mismatch vs reference, max abs diff = "
        f"{float(jnp.max(jnp.abs(out_gen - ref_gen)))}")

    print("KERNEL_OK")
</pallas_src>

<mosaic_0001>
module attributes {stable_mosaic.version = 11 : i64} {
  func.func @kernel(%arg0: i32, %arg1: i32, %arg2: memref<1x256x256xf32, #tpu.memory_space<vmem>>, %arg3: memref<256x768xbf16, #tpu.memory_space<vmem>>, %arg4: memref<1x768xf32, #tpu.memory_space<vmem>>, %arg5: memref<256x256xbf16, #tpu.memory_space<vmem>>, %arg6: memref<1x256xf32, #tpu.memory_space<vmem>>, %arg7: memref<1x128x256xf32, #tpu.memory_space<vmem>>, %arg8: memref<256x768xbf16, #tpu.memory_space<vmem>>, %arg9: memref<128x256xbf16, #tpu.memory_space<vmem>>) attributes {dimension_semantics = [#tpu.dimension_semantics<parallel>, #tpu.dimension_semantics<arbitrary>], iteration_bounds = array<i64: 2, 2>, scalar_prefetch = 0 : i64, scratch_operands = 2 : i64, tpu.core_type = #tpu.core_type<tc>, window_params = [{transform_indices = @transform_0, window_bounds = array<i64: 1, 256, 256>}, {pipeline_mode = #tpu.pipeline_mode<synchronous>, transform_indices = @transform_1, window_bounds = array<i64: 256, 768>}, {pipeline_mode = #tpu.pipeline_mode<synchronous>, transform_indices = @transform_2, window_bounds = array<i64: 1, 768>}, {pipeline_mode = #tpu.pipeline_mode<synchronous>, transform_indices = @transform_3, window_bounds = array<i64: 256, 256>}, {pipeline_mode = #tpu.pipeline_mode<synchronous>, transform_indices = @transform_4, window_bounds = array<i64: 1, 256>}, {transform_indices = @transform_5, window_bounds = array<i64: 1, 128, 256>}]} {
    %c0_i32 = arith.constant 0 : i32
    %0 = arith.cmpi eq, %arg1, %c0_i32 : i32
    %1 = arith.extui %0 : i1 to i32
    %c0_i32_0 = arith.constant 0 : i32
    %2 = arith.cmpi ne, %1, %c0_i32_0 : i32
    scf.if %2 {
      %c0_25 = arith.constant 0 : index
      %c0_26 = arith.constant 0 : index
      %c0_27 = arith.constant 0 : index
      %52 = vector.load %arg2[%c0_25, %c0_26, %c0_27] : memref<1x256x256xf32, #tpu.memory_space<vmem>>, vector<1x256x256xf32>
      %53 = vector.shape_cast %52 : vector<1x256x256xf32> to vector<256x256xf32>
      %54 = arith.truncf %53 : vector<256x256xf32> to vector<256x256xbf16>
      %c0_28 = arith.constant 0 : index
      %c0_29 = arith.constant 0 : index
      %55 = vector.load %arg3[%c0_28, %c0_29] : memref<256x768xbf16, #tpu.memory_space<vmem>>, vector<256x768xbf16>
      %cst_30 = arith.constant dense<0.000000e+00> : vector<256x768xf32>
      %56 = tpu.matmul %54, %55, %cst_30 {dimension_numbers = #tpu.dot_dimension_numbers<[1], [0], [0], [1], [0, 0, 1, 1], [], []>} : vector<256x256xbf16>, vector<256x768xbf16>, vector<256x768xf32> -> vector<256x768xf32>
      %c0_31 = arith.constant 0 : index
      %c0_32 = arith.constant 0 : index
      %57 = vector.load %arg4[%c0_31, %c0_32] : memref<1x768xf32, #tpu.memory_space<vmem>>, vector<1x768xf32>
      %58 = vector.broadcast %57 : vector<1x768xf32> to vector<256x768xf32>
      %59 = arith.addf %56, %58 : vector<256x768xf32>
      %60 = arith.truncf %59 : vector<256x768xf32> to vector<256x768xbf16>
      %c0_33 = arith.constant 0 : index
      %c0_34 = arith.constant 0 : index
      %61 = vector.load %arg8[%c0_33, %c0_34] : memref<256x768xbf16, #tpu.memory_space<vmem>>, vector<256x768xbf16>
      tpu.vector_store %arg8[%c0_33, %c0_34], %60 {strides = array<i32>} : memref<256x768xbf16, #tpu.memory_space<vmem>>, vector<256x768xbf16>,
    } else {
    }
    %c128_i32 = arith.constant 128 : i32
    %3 = arith.muli %arg1, %c128_i32 : i32
    %4 = tpu.assume_multiple %3, 128 : i32
    %5 = arith.index_cast %4 : i32 to index
    %c0 = arith.constant 0 : index
    %6 = vector.load %arg8[%5, %c0] : memref<256x768xbf16, #tpu.memory_space<vmem>>, vector<128x256xbf16>
    %7 = vector.extract_strided_slice %6 {offsets = [0, 0], sizes = [128, 128], strides = [1, 1]} : vector<128x256xbf16> to vector<128x128xbf16>
    %c0_1 = arith.constant 0 : index
    %c256 = arith.constant 256 : index
    %8 = vector.load %arg8[%c0_1, %c256] : memref<256x768xbf16, #tpu.memory_space<vmem>>, vector<256x128xbf16>
    %c0_2 = arith.constant 0 : index
    %c512 = arith.constant 512 : index
    %9 = vector.load %arg8[%c0_2, %c512] : memref<256x768xbf16, #tpu.memory_space<vmem>>, vector<256x128xbf16>
    %cst = arith.constant dense<0.000000e+00> : vector<128x256xf32>
    %10 = tpu.matmul %7, %8, %cst {dimension_numbers = #tpu.dot_dimension_numbers<[1], [1], [0], [0], [0, 0, 1, 0], [], []>} : vector<128x128xbf16>, vector<256x128xbf16>, vector<128x256xf32> -> vector<128x256xf32>
    %cst_3 = arith.constant dense<0xFF800000> : vector<128xf32>
    %11 = vector.multi_reduction <maximumf>, %10, %cst_3 [1] : vector<128x256xf32> to vector<128xf32>
    %12 = vector.shape_cast %11 : vector<128xf32> to vector<128x1xf32>
    %13 = vector.broadcast %12 : vector<128x1xf32> to vector<128x256xf32>
    %14 = arith.subf %10, %13 : vector<128x256xf32>
    %15 = math.exp %14 : vector<128x256xf32>
    %cst_4 = arith.constant dense<0.000000e+00> : vector<128xf32>
    %16 = vector.multi_reduction <add>, %15, %cst_4 [1] : vector<128x256xf32> to vector<128xf32>
    %17 = vector.shape_cast %16 : vector<128xf32> to vector<128x1xf32>
    %18 = arith.truncf %15 : vector<128x256xf32> to vector<128x256xbf16>
    %cst_5 = arith.constant dense<0.000000e+00> : vector<128x128xf32>
    %19 = tpu.matmul %18, %9, %cst_5 {dimension_numbers = #tpu.dot_dimension_numbers<[1], [0], [0], [1], [0, 0, 1, 1], [], []>} : vector<128x256xbf16>, vector<256x128xbf16>, vector<128x128xf32> -> vector<128x128xf32>
    %20 = tpu.reciprocal %17 {approx = true} : vector<128x1xf32> -> vector<128x1xf32>
    %21 = vector.broadcast %20 : vector<128x1xf32> to vector<128x128xf32>
    %22 = arith.mulf %19, %21 : vector<128x128xf32>
    %23 = arith.truncf %22 : vector<128x128xf32> to vector<128x128xbf16>
    %c0_6 = arith.constant 0 : index
    %c0_7 = arith.constant 0 : index
    %24 = vector.load %arg9[%c0_6, %c0_7] : memref<128x256xbf16, #tpu.memory_space<vmem>>, vector<128x128xbf16>
    tpu.vector_store %arg9[%c0_6, %c0_7], %23 {strides = array<i32>} : memref<128x256xbf16, #tpu.memory_space<vmem>>, vector<128x128xbf16>,
    %25 = vector.extract_strided_slice %6 {offsets = [0, 128], sizes = [128, 128], strides = [1, 1]} : vector<128x256xbf16> to vector<128x128xbf16>
    %c0_8 = arith.constant 0 : index
    %c384 = arith.constant 384 : index
    %26 = vector.load %arg8[%c0_8, %c384] : memref<256x768xbf16, #tpu.memory_space<vmem>>, vector<256x128xbf16>
    %c0_9 = arith.constant 0 : index
    %c640 = arith.constant 640 : index
    %27 = vector.load %arg8[%c0_9, %c640] : memref<256x768xbf16, #tpu.memory_space<vmem>>, vector<256x128xbf16>
    %cst_10 = arith.constant dense<0.000000e+00> : vector<128x256xf32>
    %28 = tpu.matmul %25, %26, %cst_10 {dimension_numbers = #tpu.dot_dimension_numbers<[1], [1], [0], [0], [0, 0, 1, 0], [], []>} : vector<128x128xbf16>, vector<256x128xbf16>, vector<128x256xf32> -> vector<128x256xf32>
    %cst_11 = arith.constant dense<0xFF800000> : vector<128xf32>
    %29 = vector.multi_reduction <maximumf>, %28, %cst_11 [1] : vector<128x256xf32> to vector<128xf32>
    %30 = vector.shape_cast %29 : vector<128xf32> to vector<128x1xf32>
    %31 = vector.broadcast %30 : vector<128x1xf32> to vector<128x256xf32>
    %32 = arith.subf %28, %31 : vector<128x256xf32>
    %33 = math.exp %32 : vector<128x256xf32>
    %cst_12 = arith.constant dense<0.000000e+00> : vector<128xf32>
    %34 = vector.multi_reduction <add>, %33, %cst_12 [1] : vector<128x256xf32> to vector<128xf32>
    %35 = vector.shape_cast %34 : vector<128xf32> to vector<128x1xf32>
    %36 = arith.truncf %33 : vector<128x256xf32> to vector<128x256xbf16>
    %cst_13 = arith.constant dense<0.000000e+00> : vector<128x128xf32>
    %37 = tpu.matmul %36, %27, %cst_13 {dimension_numbers = #tpu.dot_dimension_numbers<[1], [0], [0], [1], [0, 0, 1, 1], [], []>} : vector<128x256xbf16>, vector<256x128xbf16>, vector<128x128xf32> -> vector<128x128xf32>
    %38 = tpu.reciprocal %35 {approx = true} : vector<128x1xf32> -> vector<128x1xf32>
    %39 = vector.broadcast %38 : vector<128x1xf32> to vector<128x128xf32>
    %40 = arith.mulf %37, %39 : vector<128x128xf32>
    %41 = arith.truncf %40 : vector<128x128xf32> to vector<128x128xbf16>
    %c0_14 = arith.constant 0 : index
    %c128 = arith.constant 128 : index
    %42 = vector.load %arg9[%c0_14, %c128] : memref<128x256xbf16, #tpu.memory_space<vmem>>, vector<128x128xbf16>
    tpu.vector_store %arg9[%c0_14, %c128], %41 {strides = array<i32>} : memref<128x256xbf16, #tpu.memory_space<vmem>>, vector<128x128xbf16>,
    %c0_15 = arith.constant 0 : index
    %c0_16 = arith.constant 0 : index
    %43 = vector.load %arg9[%c0_15, %c0_16] : memref<128x256xbf16, #tpu.memory_space<vmem>>, vector<128x256xbf16>
    %c0_17 = arith.constant 0 : index
    %c0_18 = arith.constant 0 : index
    %44 = vector.load %arg5[%c0_17, %c0_18] : memref<256x256xbf16, #tpu.memory_space<vmem>>, vector<256x256xbf16>
    %cst_19 = arith.constant dense<0.000000e+00> : vector<128x256xf32>
    %45 = tpu.matmul %43, %44, %cst_19 {dimension_numbers = #tpu.dot_dimension_numbers<[1], [0], [0], [1], [0, 0, 1, 1], [], []>} : vector<128x256xbf16>, vector<256x256xbf16>, vector<128x256xf32> -> vector<128x256xf32>
    %c0_20 = arith.constant 0 : index
    %c0_21 = arith.constant 0 : index
    %46 = vector.load %arg6[%c0_20, %c0_21] : memref<1x256xf32, #tpu.memory_space<vmem>>, vector<1x256xf32>
    %47 = vector.broadcast %46 : vector<1x256xf32> to vector<128x256xf32>
    %48 = arith.addf %45, %47 : vector<128x256xf32>
    %c0_22 = arith.constant 0 : index
    %c0_23 = arith.constant 0 : index
    %c0_24 = arith.constant 0 : index
    %49 = vector.load %arg7[%c0_22, %c0_23, %c0_24] : memref<1x128x256xf32, #tpu.memory_space<vmem>>, vector<1x128x256xf32>
    %50 = vector.shape_cast %49 : vector<1x128x256xf32> to vector<128x256xf32>
    %51 = vector.shape_cast %48 : vector<128x256xf32> to vector<1x128x256xf32>
    tpu.vector_store %arg7[%c0_22, %c0_23, %c0_24], %51 {strides = array<i32>} : memref<1x128x256xf32, #tpu.memory_space<vmem>>, vector<1x128x256xf32>,
    return
  }
  func.func @transform_0(%arg0: i32, %arg1: i32) -> (i32, i32, i32) {
    %c0_i32 = arith.constant 0 : i32
    %c0_i32_0 = arith.constant 0 : i32
    %c0_i32_1 = arith.constant 0 : i32
    return %arg0, %c0_i32, %c0_i32_0 : i32, i32, i32
  }
  func.func @transform_1(%arg0: i32, %arg1: i32) -> (i32, i32) {
    %c0_i32 = arith.constant 0 : i32
    %c0_i32_0 = arith.constant 0 : i32
    %c0_i32_1 = arith.constant 0 : i32
    return %c0_i32, %c0_i32_0 : i32, i32
  }
  func.func @transform_2(%arg0: i32, %arg1: i32) -> (i32, i32) {
    %c0_i32 = arith.constant 0 : i32
    %c0_i32_0 = arith.constant 0 : i32
    %c0_i32_1 = arith.constant 0 : i32
    return %c0_i32, %c0_i32_0 : i32, i32
  }
  func.func @transform_3(%arg0: i32, %arg1: i32) -> (i32, i32) {
    %c0_i32 = arith.constant 0 : i32
    %c0_i32_0 = arith.constant 0 : i32
    %c0_i32_1 = arith.constant 0 : i32
    return %c0_i32, %c0_i32_0 : i32, i32
  }
  func.func @transform_4(%arg0: i32, %arg1: i32) -> (i32, i32) {
    %c0_i32 = arith.constant 0 : i32
    %c0_i32_0 = arith.constant 0 : i32
    %c0_i32_1 = arith.constant 0 : i32
    return %c0_i32, %c0_i32_0 : i32, i32
  }
  func.func @transform_5(%arg0: i32, %arg1: i32) -> (i32, i32, i32) {
    %c0_i32 = arith.constant 0 : i32
    %c0_i32_0 = arith.constant 0 : i32
    return %arg0, %arg1, %c0_i32 : i32, i32, i32
  }
}

</mosaic_0001>

<llo_original>
// kernel: tpu_custom_call.1
$region0: #{tpu_custom_call.1}
  #allocation0 [shape = 'u32[]', space=smem, size = 0x4, offset = 0x4, fixed_abs, tag = 'smem constant byte address 0x4 - core index']
  #allocation1 [shape = 'u32[144,128]{1,0:T(1,128)}', space=vmem, size = 0x12000, scoped, tag = 'internal scratch']
  #allocation2 [shape = 'bf16[256,768]{1,0:T(8,128)(2,1)}', space=vmem, size = 0x60000, scoped, tag = 'scratch operand']
  #allocation3 [shape = 'bf16[128,256]{1,0:T(8,128)(2,1)}', space=vmem, size = 0x10000, scoped, tag = 'scratch operand']
  %s0 = inlined_call_operand.hbm [shape: f32[2,256,256], index: 0, kind: input, shape index: {}]
  %s1 = inlined_call_operand.hbm [shape: bf16[256,768], index: 1, kind: input, shape index: {}]
  %s2 = inlined_call_operand.hbm [shape: f32[1,768], index: 2, kind: input, shape index: {}]
  %s3 = inlined_call_operand.hbm [shape: bf16[256,256], index: 3, kind: input, shape index: {}]
  %s4 = inlined_call_operand.vmem [shape: f32[1,256], index: 4, kind: input, shape index: {}]
  %s5 = inlined_call_operand.hbm [shape: f32[2,256,256], index: 5, kind: output, shape index: {}]
  %s6 = sld [smem:[#allocation0]]
  $region73: #{tpu_custom_call.1} parent=0
    _
  %s8 = ssub.s32 1, %s6
  %s9 = scalar_select 0, %s8, %s6
  $region1: #{tpu_custom_call.1} parent=0
    #allocation4 [shape = 'u8[524288]{0}', space=vmem, size = 0x80000, scoped, tag = 'input window, operand 0']
    #allocation5 [shape = 's32[2]{0}', space=sflag, size = 0x8, scoped, tag = 'scoped memory for tpu_custom_call.1']
    #allocation6 [shape = 's32[2]{0}', space=sflag, size = 0x8, scoped, tag = 'scoped memory for tpu_custom_call.1']
    #allocation7 [shape = 'u8[393216]{0}', space=vmem, size = 0x60000, scoped, tag = 'input window, operand 1, single buffered']
    #allocation8 [shape = 's32[1]{0}', space=sflag, size = 0x4, scoped, tag = 'scoped memory for tpu_custom_call.1']
    #allocation9 [shape = 'u8[3072]{0}', space=vmem, size = 0xc00, scoped, tag = 'input window, operand 2, single buffered']
    #allocation10 [shape = 'u8[131072]{0}', space=vmem, size = 0x20000, scoped, tag = 'input window, operand 3, single buffered']
    #allocation11 [shape = 's32[1]{0}', space=sflag, size = 0x4, scoped, tag = 'scoped memory for tpu_custom_call.1']
    #allocation12 [shape = 'u8[262144]{0}', space=vmem, size = 0x40000, scoped, tag = 'output window, operand 0']
    %10 = vsyncpa [#allocation5], 0
    %s11 = scalar_lea.sflag [#allocation5], 1
    %12 = vsyncpa %s11, 0
    %13 = vsyncpa [#allocation8], 0
    %14 = vsyncpa [#allocation11], 0
    %15 = vsyncpa [#allocation6], 0
    %s16 = scalar_lea.sflag [#allocation6], 1
    %17 = vsyncpa %s16, 0
    loop: start=0, step=1, limit=6
    $region2: #{tpu_custom_call.1} parent=1 // loop_pre_header
      _
    $region3: #{tpu_custom_call.1} parent=1 // loop_header
      %s19 = sphi 0, %s23
      %p20 = scmp.ge.s32.totalorder %s19, 6
      %s26 = sphi 0, %s38
      %s27 = sphi 0, %s34
      %s28 = sphi 0, %s26
      %s29 = sphi 0, %s27
      %s30 = sphi 0, %s28
      %s31 = sphi 0, %s29
      %s41 = sphi 0, %s43
      %s44 = sphi 0, %s41
      %s45 = sphi 0, %s44
      %s61 = sphi 0, %s45
      %s65 = sphi 0, %s65
      %s67 = sphi 0, %s65
      %s68 = sphi 0, %s67
      %s82 = sphi 0, %s68
      %s86 = sphi 0, %s86
      %s88 = sphi 0, %s86
      %s89 = sphi 0, %s88
      %s103 = sphi 0, %s89
      %s107 = sphi 0, %s107
      %s109 = sphi 0, %s107
      %s110 = sphi 0, %s109
      %s124 = sphi 0, %s110
      %s128 = sphi 0, %s128
      %s130 = sphi 0, %s128
      %s131 = sphi 0, %s130
      %s145 = sphi 0, %s131
      %s153 = sphi 0, %s155
      %s156 = sphi 0, %s153
      %s157 = sphi 0, %s156
      %s173 = sphi 0, %s157
    $region4: #{tpu_custom_call.1} parent=1 // loop_header_branch
      %22 = sbr.rel (%p20) target = $region8
    $region5: #{tpu_custom_call.1} parent=1 // loop_body
      %s24 = ssub.s32 %s19, 1
      %s25 = ssub.s32 %s19, 2
      %s32 = sadd.s32 1, %s27
      %p33 = scmp.ge.s32.totalorder %s32, 2
      %s34 = scalar_select %p33, 0, %s32
      %s35 = sadd.s32 1, %s26
      %s36 = scalar_select %p33, %s35, %s26
      %p37 = scmp.ge.s32.totalorder %s36, 2
      %s38 = scalar_select %p37, 0, %s36
      %s39 = ssub.s32 %s26, %s38
      %p40 = scmp.eq.s32.totalorder %s39, 0
      %s42 = sadd.s32 %s41, 1
      %s43 = scalar_select %p40, %s41, %s42
      %p46 = pneg %p40
      %p47 = scmp.eq.s32.totalorder %s19, 3
      %p48 = por %p46, %p47
      %p49 = scmp.ne.s32.totalorder %s41, %s44
      %p50 = scmp.eq.s32.totalorder %s19, 0
      %p51 = por %p49, %p50
      %p52 = scmp.ne.s32.totalorder %s41, %s44
      %p53 = scmp.eq.s32.totalorder %s24, 3
      %p54 = por %p52, %p53
      %p55 = scmp.ne.s32.totalorder %s44, %s45
      %p56 = scmp.eq.s32.totalorder %s24, 0
      %p57 = por %p55, %p56
      %p58 = scmp.ne.s32.totalorder %s44, %s45
      %p59 = scmp.eq.s32.totalorder %s25, 3
      %p60 = por %p58, %p59
      %p62 = scmp.ne.s32.totalorder %s45, %s61
      %p63 = scmp.eq.s32.totalorder %s25, 0
      %p64 = por %p62, %p63
      %s66 = sadd.s32 %s65, 1
      %p69 = scmp.eq.s32.totalorder %s19, 3
      %p70 = scmp.ne.s32.totalorder %s65, %s67
      %p71 = scmp.eq.s32.totalorder %s19, 0
      %p72 = por %p70, %p71
      %p73 = scmp.ne.s32.totalorder %s65, %s67
      %p74 = scmp.eq.s32.totalorder %s24, 3
      %p75 = por %p73, %p74
      %p76 = scmp.ne.s32.totalorder %s67, %s68
      %p77 = scmp.eq.s32.totalorder %s24, 0
      %p78 = por %p76, %p77
      %p79 = scmp.ne.s32.totalorder %s67, %s68
      %p80 = scmp.eq.s32.totalorder %s25, 3
      %p81 = por %p79, %p80
      %p83 = scmp.ne.s32.totalorder %s68, %s82
      %p84 = scmp.eq.s32.totalorder %s25, 0
      %p85 = por %p83, %p84
      %s87 = sadd.s32 %s86, 1
      %p90 = scmp.eq.s32.totalorder %s19, 3
      %p91 = scmp.ne.s32.totalorder %s86, %s88
      %p92 = scmp.eq.s32.totalorder %s19, 0
      %p93 = por %p91, %p92
      %p94 = scmp.ne.s32.totalorder %s86, %s88
      %p95 = scmp.eq.s32.totalorder %s24, 3
      %p96 = por %p94, %p95
      %p97 = scmp.ne.s32.totalorder %s88, %s89
      %p98 = scmp.eq.s32.totalorder %s24, 0
      %p99 = por %p97, %p98
      %p100 = scmp.ne.s32.totalorder %s88, %s89
      %p101 = scmp.eq.s32.totalorder %s25, 3
      %p102 = por %p100, %p101
      %p104 = scmp.ne.s32.totalorder %s89, %s103
      %p105 = scmp.eq.s32.totalorder %s25, 0
      %p106 = por %p104, %p105
      %s108 = sadd.s32 %s107, 1
      %p111 = scmp.eq.s32.totalorder %s19, 3
      %p112 = scmp.ne.s32.totalorder %s107, %s109
      %p113 = scmp.eq.s32.totalorder %s19, 0
      %p114 = por %p112, %p113
      %p115 = scmp.ne.s32.totalorder %s107, %s109
      %p116 = scmp.eq.s32.totalorder %s24, 3
      %p117 = por %p115, %p116
      %p118 = scmp.ne.s32.totalorder %s109, %s110
      %p119 = scmp.eq.s32.totalorder %s24, 0
      %p120 = por %p118, %p119
      %p121 = scmp.ne.s32.totalorder %s109, %s110
      %p122 = scmp.eq.s32.totalorder %s25, 3
      %p123 = por %p121, %p122
      %p125 = scmp.ne.s32.totalorder %s110, %s124
      %p126 = scmp.eq.s32.totalorder %s25, 0
      %p127 = por %p125, %p126
      %s129 = sadd.s32 %s128, 1
      %p132 = scmp.eq.s32.totalorder %s19, 3
      %p133 = scmp.ne.s32.totalorder %s128, %s130
      %p134 = scmp.eq.s32.totalorder %s19, 0
      %p135 = por %p133, %p134
      %p136 = scmp.ne.s32.totalorder %s128, %s130
      %p137 = scmp.eq.s32.totalorder %s24, 3
      %p138 = por %p136, %p137
      %p139 = scmp.ne.s32.totalorder %s130, %s131
      %p140 = scmp.eq.s32.totalorder %s24, 0
      %p141 = por %p139, %p140
      %p142 = scmp.ne.s32.totalorder %s130, %s131
      %p143 = scmp.eq.s32.totalorder %s25, 3
      %p144 = por %p142, %p143
      %p146 = scmp.ne.s32.totalorder %s131, %s145
      %p147 = scmp.eq.s32.totalorder %s25, 0
      %p148 = por %p146, %p147
      %s149 = ssub.s32 %s26, %s38
      %s150 = ssub.s32 %s27, %s34
      %s151 = sor.u32 %s149, %s150
      %p152 = scmp.eq.s32.totalorder %s151, 0
      %s154 = sadd.s32 %s153, 1
      %s155 = scalar_select %p152, %s153, %s154
      %p158 = pneg %p152
      %p159 = scmp.eq.s32.totalorder %s19, 3
      %p160 = por %p158, %p159
      %p161 = scmp.ne.s32.totalorder %s153, %s156
      %p162 = scmp.eq.s32.totalorder %s19, 0
      %p163 = por %p161, %p162
      %p164 = scmp.ne.s32.totalorder %s153, %s156
      %p165 = scmp.eq.s32.totalorder %s24, 3
      %p166 = por %p164, %p165
      %p167 = scmp.ne.s32.totalorder %s156, %s157
      %p168 = scmp.eq.s32.totalorder %s24, 0
      %p169 = por %p167, %p168
      %p170 = scmp.ne.s32.totalorder %s156, %s157
      %p171 = scmp.eq.s32.totalorder %s25, 3
      %p172 = por %p170, %p171
      %p174 = scmp.ne.s32.totalorder %s157, %s173
      %p175 = scmp.eq.s32.totalorder %s25, 0
      %p176 = por %p174, %p175
      %p177 = scmp.le.s32.totalorder 1, %s19
      %p178 = scmp.lt.s32.totalorder %s19, 5
      %p179 = pnand %p177, %p178
      %p180 = pneg %p179
      // Predicated region
      $region9: #{tpu_custom_call.1} parent=5 // pred_check
        _
      $region10: #{tpu_custom_call.1} parent=5 // pred_check_branch
        %182 = sbr.rel (%p179) target = $region12
      $region11: #{tpu_custom_call.1} parent=5 // pred_region
        %s183 = ssub.s32 %s19, 1
        // Predicated region
        $region13: #{tpu_custom_call.1} parent=11 // pred_check
          %p184 = pneg %p78
        $region14: #{tpu_custom_call.1} parent=11 // pred_check_branch
          %186 = sbr.rel (%p184) target = $region16
        $region15: #{tpu_custom_call.1} parent=11 // pred_region
          %s188 = ssub.s32 12288, 12288
          %189 = vsyncadd [#allocation8], %s188
          %s190 = sshll.u32 [#allocation7], 4
          %s191 = int_to_ptr.vmem [resolvable:$true] %s190
          %196 = dma.hbm_to_vmem [thread:$0]  %s1, 12288, %s191, [#allocation8], 384, 384, 24
        $region16: #{tpu_custom_call.1} parent=11 // pred_fallthru
          _
        // Predicated region
        $region17: #{tpu_custom_call.1} parent=11 // pred_check
          %p197 = pneg %p99
        $region18: #{tpu_custom_call.1} parent=11 // pred_check_branch
          %199 = sbr.rel (%p197) target = $region20
        $region19: #{tpu_custom_call.1} parent=11 // pred_region
          %s201 = ssub.s32 96, 96
          %202 = vsyncadd [#allocation8], %s201
          %s204 = sshll.u32 [#allocation9], 4
          %s205 = int_to_ptr.vmem [resolvable:$true] %s204
          %207 = dma.hbm_to_vmem [thread:$0]  %s2, 96, %s205, [#allocation8]
        $region20: #{tpu_custom_call.1} parent=11 // pred_fallthru
          _
        // Predicated region
        $region21: #{tpu_custom_call.1} parent=11 // pred_check
          %p208 = pneg %p120
        $region22: #{tpu_custom_call.1} parent=11 // pred_check_branch
          %210 = sbr.rel (%p208) target = $region24
        $region23: #{tpu_custom_call.1} parent=11 // pred_region
          %s212 = ssub.s32 4096, 4096
          %213 = vsyncadd [#allocation11], %s212
          %s214 = sshll.u32 [#allocation10], 4
          %s215 = int_to_ptr.vmem [resolvable:$true] %s214
          %220 = dma.hbm_to_vmem [thread:$0]  %s3, 4096, %s215, [#allocation11], 128, 128, 8
        $region24: #{tpu_custom_call.1} parent=11 // pred_fallthru
          _
        // Predicated region
        $region25: #{tpu_custom_call.1} parent=11 // pred_check
          %p221 = pneg %p141
        $region26: #{tpu_custom_call.1} parent=11 // pred_check_branch
          %223 = sbr.rel (%p221) target = $region28
        $region27: #{tpu_custom_call.1} parent=11 // pred_region
          _
        $region28: #{tpu_custom_call.1} parent=11 // pred_fallthru
          _
      $region12: #{tpu_custom_call.1} parent=5 // pred_fallthru
        _
      %p224 = scmp.lt.s32.totalorder %s19, 4
      // Predicated region
      $region29: #{tpu_custom_call.1} parent=5 // pred_check
        %p225 = pneg %p224
      $region30: #{tpu_custom_call.1} parent=5 // pred_check_branch
        %227 = sbr.rel (%p225) target = $region32
      $region31: #{tpu_custom_call.1} parent=5 // pred_region
        // Predicated region
        $region33: #{tpu_custom_call.1} parent=31 // pred_check
          %p228 = pneg %p51
        $region34: #{tpu_custom_call.1} parent=31 // pred_check_branch
          %230 = sbr.rel (%p228) target = $region36
        $region35: #{tpu_custom_call.1} parent=31 // pred_region
          %s231 = sand.u32 %s41, 1
          %s232 = scalar_lea.sflag [#allocation5], %s231
          %s233 = sand.u32 %s41, 1
          %s234 = smul.addr %s233, 512
          %s235 = scalar_lea.vmem [#allocation4], %s234
          %s237 = ssub.s32 8192, 8192
          %238 = vsyncadd %s232, %s237
          %s239 = smul.addr %s26, 64
          %s240 = smul.addr %s239, 128
          %s241 = scalar_lea.hbm %s0, %s240
          %s242 = sshll.u32 %s235, 4
          %s243 = int_to_ptr.vmem [resolvable:$true] %s242
          %248 = dma.hbm_to_vmem [thread:$0]  %s241, 8192, %s243, %s232, 256, 256, 16
        $region36: #{tpu_custom_call.1} parent=31 // pred_fallthru
          _
      $region32: #{tpu_custom_call.1} parent=5 // pred_fallthru
        _
      %p249 = scmp.le.s32.totalorder 1, %s19
      %p250 = scmp.lt.s32.totalorder %s19, 5
      %p251 = pnand %p249, %p250
      %p252 = pneg %p251
      // Predicated region
      $region37: #{tpu_custom_call.1} parent=5 // pred_check
        _
      $region38: #{tpu_custom_call.1} parent=5 // pred_check_branch
        %254 = sbr.rel (%p251) target = $region40
      $region39: #{tpu_custom_call.1} parent=5 // pred_region
        %s255 = ssub.s32 %s19, 1
        %s256 = sand.u32 %s44, 1
        %s257 = scalar_lea.sflag [#allocation5], %s256
        %s258 = sand.u32 %s44, 1
        %s259 = smul.addr %s258, 512
        %s260 = scalar_lea.vmem [#allocation4], %s259
        // Predicated region
        $region41: #{tpu_custom_call.1} parent=39 // pred_check
          %p261 = pneg %p57
        $region42: #{tpu_custom_call.1} parent=39 // pred_check_branch
          %263 = sbr.rel (%p261) target = $region44
        $region43: #{tpu_custom_call.1} parent=39 // pred_region
          %264 = dma.done %s257, 8192
        $region44: #{tpu_custom_call.1} parent=39 // pred_fallthru
          _
        // Predicated region
        $region45: #{tpu_custom_call.1} parent=39 // pred_check
          %p265 = pneg %p78
        $region46: #{tpu_custom_call.1} parent=39 // pred_check_branch
          %267 = sbr.rel (%p265) target = $region48
        $region47: #{tpu_custom_call.1} parent=39 // pred_region
          %268 = dma.done [#allocation8], 12288
        $region48: #{tpu_custom_call.1} parent=39 // pred_fallthru
          _
        // Predicated region
        $region49: #{tpu_custom_call.1} parent=39 // pred_check
          %p269 = pneg %p99
        $region50: #{tpu_custom_call.1} parent=39 // pred_check_branch
          %271 = sbr.rel (%p269) target = $region52
        $region51: #{tpu_custom_call.1} parent=39 // pred_region
          %272 = dma.done [#allocation8], 96
        $region52: #{tpu_custom_call.1} parent=39 // pred_fallthru
          _
        // Predicated region
        $region53: #{tpu_custom_call.1} parent=39 // pred_check
          %p273 = pneg %p120
        $region54: #{tpu_custom_call.1} parent=39 // pred_check_branch
          %275 = sbr.rel (%p273) target = $region56
        $region55: #{tpu_custom_call.1} parent=39 // pred_region
          %276 = dma.done [#allocation11], 4096
        $region56: #{tpu_custom_call.1} parent=39 // pred_fallthru
          _
        %s277 = sand.u32 %s44, 1
        %s278 = scalar_lea.sflag [#allocation5], %s277
        %s279 = sand.u32 %s44, 1
        %s280 = smul.addr %s279, 512
        %s281 = scalar_lea.vmem [#allocation4], %s280
        %p282 = pneg %p57
        %p283 = pneg %p54
        %p284 = pneg %p78
        %p285 = pneg %p75
        %p286 = pneg %p99
        %p287 = pneg %p96
        %p288 = pneg %p120
        %p289 = pneg %p117
        %p290 = pneg %p141
        %p291 = pneg %p138
        %p292 = pneg %p169
        %p293 = pneg %p166
        %s294 = sand.u32 %s156, 1
        %s295 = scalar_lea.sflag [#allocation6], %s294
        %s296 = sand.u32 %s156, 1
        %s297 = smul.addr %s296, 256
        %s298 = scalar_lea.vmem [#allocation12], %s297
        %s299 = smul.u32 16, %s29
        %p301 = scmp.eq.s32.totalorder %s29, 0
        // Predicated region
        $region57: #{tpu_custom_call.1} parent=39 // pred_check
          %p302 = pneg %p301
        $region58: #{tpu_custom_call.1} parent=39 // pred_check_branch
          %304 = sbr.rel (%p302) target = $region60
        $region59: #{tpu_custom_call.1} parent=39 // pred_region
          %v305 = vld [vmem:[%s260] sm:$0xff]
          %v306 = vld [vmem:[%s260 + $0x8] sm:$0xff]
          %v307 = vld [vmem:[%s260 + $0x10] sm:$0xff]
          %v308 = vld [vmem:[%s260 + $0x18] sm:$0xff]
          %v309 = vld [vmem:[%s260 + $0x20] sm:$0xff]
          %v310 = vld [vmem:[%s260 + $0x28] sm:$0xff]
          %v311 = vld [vmem:[%s260 + $0x30] sm:$0xff]
          %v312 = vld [vmem:[%s260 + $0x38] sm:$0xff]
          %v313 = vld [vmem:[%s260 + $0x40] sm:$0xff]
          %v314 = vld [vmem:[%s260 + $0x48] sm:$0xff]
          %v315 = vld [vmem:[%s260 + $0x50] sm:$0xff]
          %v316 = vld [vmem:[%s260 + $0x58] sm:$0xff]
          %v317 = vld [vmem:[%s260 + $0x60] sm:$0xff]
          %v318 = vld [vmem:[%s260 + $0x68] sm:$0xff]
          %v319 = vld [vmem:[%s260 + $0x70] sm:$0xff]
          %v320 = vld [vmem:[%s260 + $0x78] sm:$0xff]
          %v321 = vld [vmem:[%s260 + $0x80] sm:$0xff]
          %v322 = vld [vmem:[%s260 + $0x88] sm:$0xff]
          %v323 = vld [vmem:[%s260 + $0x90] sm:$0xff]
          %v324 = vld [vmem:[%s260 + $0x98] sm:$0xff]
          %v325 = vld [vmem:[%s260 + $0xa0] sm:$0xff]
          %v326 = vld [vmem:[%s260 + $0xa8] sm:$0xff]
          %v327 = vld [vmem:[%s260 + $0xb0] sm:$0xff]
          %v328 = vld [vmem:[%s260 + $0xb8] sm:$0xff]
          %v329 = vld [vmem:[%s260 + $0xc0] sm:$0xff]
          %v330 = vld [vmem:[%s260 + $0xc8] sm:$0xff]
          %v331 = vld [vmem:[%s260 + $0xd0] sm:$0xff]
          %v332 = vld [vmem:[%s260 + $0xd8] sm:$0xff]
          %v333 = vld [vmem:[%s260 + $0xe0] sm:$0xff]
          %v334 = vld [vmem:[%s260 + $0xe8] sm:$0xff]
          %v335 = vld [vmem:[%s260 + $0xf0] sm:$0xff]
          %v336 = vld [vmem:[%s260 + $0xf8] sm:$0xff]
          %v337 = vld [vmem:[%s260 + $0x100] sm:$0xff]
          %v338 = vld [vmem:[%s260 + $0x108] sm:$0xff]
          %v339 = vld [vmem:[%s260 + $0x110] sm:$0xff]
          %v340 = vld [vmem:[%s260 + $0x118] sm:$0xff]
          %v341 = vld [vmem:[%s260 + $0x120] sm:$0xff]
          %v342 = vld [vmem:[%s260 + $0x128] sm:$0xff]
          %v343 = vld [vmem:[%s260 + $0x130] sm:$0xff]
          %v344 = vld [vmem:[%s260 + $0x138] sm:$0xff]
          %v345 = vld [vmem:[%s260 + $0x140] sm:$0xff]
          %v346 = vld [vmem:[%s260 + $0x148] sm:$0xff]
          %v347 = vld [vmem:[%s260 + $0x150] sm:$0xff]
          %v348 = vld [vmem:[%s260 + $0x158] sm:$0xff]
          %v349 = vld [vmem:[%s260 + $0x160] sm:$0xff]
          %v350 = vld [vmem:[%s260 + $0x168] sm:$0xff]
          %v351 = vld [vmem:[%s260 + $0x170] sm:$0xff]
          %v352 = vld [vmem:[%s260 + $0x178] sm:$0xff]
          %v353 = vld [vmem:[%s260 + $0x180] sm:$0xff]
          %v354 = vld [vmem:[%s260 + $0x188] sm:$0xff]
          %v355 = vld [vmem:[%s260 + $0x190] sm:$0xff]
          %v356 = vld [vmem:[%s260 + $0x198] sm:$0xff]
          %v357 = vld [vmem:[%s260 + $0x1a0] sm:$0xff]
          %v358 = vld [vmem:[%s260 + $0x1a8] sm:$0xff]
          %v359 = vld [vmem:[%s260 + $0x1b0] sm:$0xff]
          %v360 = vld [vmem:[%s260 + $0x1b8] sm:$0xff]
          %v361 = vld [vmem:[%s260 + $0x1c0] sm:$0xff]
          %v362 = vld [vmem:[%s260 + $0x1c8] sm:$0xff]
          %v363 = vld [vmem:[%s260 + $0x1d0] sm:$0xff]
          %v364 = vld [vmem:[%s260 + $0x1d8] sm:$0xff]
          %v365 = vld [vmem:[%s260 + $0x1e0] sm:$0xff]
          %v366 = vld [vmem:[%s260 + $0x1e8] sm:$0xff]
          %v367 = vld [vmem:[%s260 + $0x1f0] sm:$0xff]
          %v368 = vld [vmem:[%s260 + $0x1f8] sm:$0xff]
          %v369 = vpack.c.bf16 %v307, %v305
          %v370 = vpack.c.bf16 %v308, %v306
          %v371 = vpack.c.bf16 %v311, %v309
          %v372 = vpack.c.bf16 %v312, %v310
          %v373 = vpack.c.bf16 %v315, %v313
          %v374 = vpack.c.bf16 %v316, %v314
          %v375 = vpack.c.bf16 %v319, %v317
          %v376 = vpack.c.bf16 %v320, %v318
          %v377 = vpack.c.bf16 %v323, %v321
          %v378 = vpack.c.bf16 %v324, %v322
          %v379 = vpack.c.bf16 %v327, %v325
          %v380 = vpack.c.bf16 %v328, %v326
          %v381 = vpack.c.bf16 %v331, %v329
          %v382 = vpack.c.bf16 %v332, %v330
          %v383 = vpack.c.bf16 %v335, %v333
          %v384 = vpack.c.bf16 %v336, %v334
          %v385 = vpack.c.bf16 %v339, %v337
          %v386 = vpack.c.bf16 %v340, %v338
          %v387 = vpack.c.bf16 %v343, %v341
          %v388 = vpack.c.bf16 %v344, %v342
          %v389 = vpack.c.bf16 %v347, %v345
          %v390 = vpack.c.bf16 %v348, %v346
          %v391 = vpack.c.bf16 %v351, %v349
          %v392 = vpack.c.bf16 %v352, %v350
          %v393 = vpack.c.bf16 %v355, %v353
          %v394 = vpack.c.bf16 %v356, %v354
          %v395 = vpack.c.bf16 %v359, %v357
          %v396 = vpack.c.bf16 %v360, %v358
          %v397 = vpack.c.bf16 %v363, %v361
          %v398 = vpack.c.bf16 %v364, %v362
          %v399 = vpack.c.bf16 %v367, %v365
          %v400 = vpack.c.bf16 %v368, %v366
          %v401 = vld [vmem:[#allocation7] sm:$0xff]
          %v402 = vld [vmem:[#allocation7 + $0x8] sm:$0xff]
          %v403 = vld [vmem:[#allocation7 + $0x10] sm:$0xff]
          %v404 = vld [vmem:[#allocation7 + $0x18] sm:$0xff]
          %v405 = vld [vmem:[#allocation7 + $0x20] sm:$0xff]
          %v406 = vld [vmem:[#allocation7 + $0x28] sm:$0xff]
          %v407 = vld [vmem:[#allocation7 + $0x30] sm:$0xff]
          %v408 = vld [vmem:[#allocation7 + $0x38] sm:$0xff]
          %v409 = vld [vmem:[#allocation7 + $0x40] sm:$0xff]
          %v410 = vld [vmem:[#allocation7 + $0x48] sm:$0xff]
          %v411 = vld [vmem:[#allocation7 + $0x50] sm:$0xff]
          %v412 = vld [vmem:[#allocation7 + $0x58] sm:$0xff]
          %v413 = vld [vmem:[#allocation7 + $0x60] sm:$0xff]
          %v414 = vld [vmem:[#allocation7 + $0x68] sm:$0xff]
          %v415 = vld [vmem:[#allocation7 + $0x70] sm:$0xff]
          %v416 = vld [vmem:[#allocation7 + $0x78] sm:$0xff]
          %v417 = vld [vmem:[#allocation7 + $0x80] sm:$0xff]
          %v418 = vld [vmem:[#allocation7 + $0x88] sm:$0xff]
          %v419 = vld [vmem:[#allocation7 + $0x90] sm:$0xff]
          %v420 = vld [vmem:[#allocation7 + $0x98] sm:$0xff]
          %v421 = vld [vmem:[#allocation7 + $0xa0] sm:$0xff]
          %v422 = vld [vmem:[#allocation7 + $0xa8] sm:$0xff]
          %v423 = vld [vmem:[#allocation7 + $0xb0] sm:$0xff]
          %v424 = vld [vmem:[#allocation7 + $0xb8] sm:$0xff]
          %v425 = vld [vmem:[#allocation7 + $0xc0] sm:$0xff]
          %v426 = vld [vmem:[#allocation7 + $0xc8] sm:$0xff]
          %v427 = vld [vmem:[#allocation7 + $0xd0] sm:$0xff]
          %v428 = vld [vmem:[#allocation7 + $0xd8] sm:$0xff]
          %v429 = vld [vmem:[#allocation7 + $0xe0] sm:$0xff]
          %v430 = vld [vmem:[#allocation7 + $0xe8] sm:$0xff]
          %v431 = vld [vmem:[#allocation7 + $0xf0] sm:$0xff]
          %v432 = vld [vmem:[#allocation7 + $0xf8] sm:$0xff]
          %v433 = vld [vmem:[#allocation7 + $0x100] sm:$0xff]
          %v434 = vld [vmem:[#allocation7 + $0x108] sm:$0xff]
          %v435 = vld [vmem:[#allocation7 + $0x110] sm:$0xff]
          %v436 = vld [vmem:[#allocation7 + $0x118] sm:$0xff]
          %v437 = vld [vmem:[#allocation7 + $0x120] sm:$0xff]
          %v438 = vld [vmem:[#allocation7 + $0x128] sm:$0xff]
          %v439 = vld [vmem:[#allocation7 + $0x130] sm:$0xff]
          %v440 = vld [vmem:[#allocation7 + $0x138] sm:$0xff]
          %v441 = vld [vmem:[#allocation7 + $0x140] sm:$0xff]
          %v442 = vld [vmem:[#allocation7 + $0x148] sm:$0xff]
          %v443 = vld [vmem:[#allocation7 + $0x150] sm:$0xff]
          %v444 = vld [vmem:[#allocation7 + $0x158] sm:$0xff]
          %v445 = vld [vmem:[#allocation7 + $0x160] sm:$0xff]
          %v446 = vld [vmem:[#allocation7 + $0x168] sm:$0xff]
          %v447 = vld [vmem:[#allocation7 + $0x170] sm:$0xff]
          %v448 = vld [vmem:[#allocation7 + $0x178] sm:$0xff]
          %v449 = vld [vmem:[#allocation7 + $0x180] sm:$0xff]
          %v450 = vld [vmem:[#allocation7 + $0x188] sm:$0xff]
          %v451 = vld [vmem:[#allocation7 + $0x190] sm:$0xff]
          %v452 = vld [vmem:[#allocation7 + $0x198] sm:$0xff]
          %v453 = vld [vmem:[#allocation7 + $0x1a0] sm:$0xff]
          %v454 = vld [vmem:[#allocation7 + $0x1a8] sm:$0xff]
          %v455 = vld [vmem:[#allocation7 + $0x1b0] sm:$0xff]
          %v456 = vld [vmem:[#allocation7 + $0x1b8] sm:$0xff]
          %v457 = vld [vmem:[#allocation7 + $0x1c0] sm:$0xff]
          %v458 = vld [vmem:[#allocation7 + $0x1c8] sm:$0xff]
          %v459 = vld [vmem:[#allocation7 + $0x1d0] sm:$0xff]
          %v460 = vld [vmem:[#allocation7 + $0x1d8] sm:$0xff]
          %v461 = vld [vmem:[#allocation7 + $0x1e0] sm:$0xff]
          %v462 = vld [vmem:[#allocation7 + $0x1e8] sm:$0xff]
          %v463 = vld [vmem:[#allocation7 + $0x1f0] sm:$0xff]
          %v464 = vld [vmem:[#allocation7 + $0x1f8] sm:$0xff]
          %v465 = vld [vmem:[#allocation7 + $0x200] sm:$0xff]
          %v466 = vld [vmem:[#allocation7 + $0x208] sm:$0xff]
          %v467 = vld [vmem:[#allocation7 + $0x210] sm:$0xff]
          %v468 = vld [vmem:[#allocation7 + $0x218] sm:$0xff]
          %v469 = vld [vmem:[#allocation7 + $0x220] sm:$0xff]
          %v470 = vld [vmem:[#allocation7 + $0x228] sm:$0xff]
          %v471 = vld [vmem:[#allocation7 + $0x230] sm:$0xff]
          %v472 = vld [vmem:[#allocation7 + $0x238] sm:$0xff]
          %v473 = vld [vmem:[#allocation7 + $0x240] sm:$0xff]
          %v474 = vld [vmem:[#allocation7 + $0x248] sm:$0xff]
          %v475 = vld [vmem:[#allocation7 + $0x250] sm:$0xff]
          %v476 = vld [vmem:[#allocation7 + $0x258] sm:$0xff]
          %v477 = vld [vmem:[#allocation7 + $0x260] sm:$0xff]
          %v478 = vld [vmem:[#allocation7 + $0x268] sm:$0xff]
          %v479 = vld [vmem:[#allocation7 + $0x270] sm:$0xff]
          %v480 = vld [vmem:[#allocation7 + $0x278] sm:$0xff]
          %v481 = vld [vmem:[#allocation7 + $0x280] sm:$0xff]
          %v482 = vld [vmem:[#allocation7 + $0x288] sm:$0xff]
          %v483 = vld [vmem:[#allocation7 + $0x290] sm:$0xff]
          %v484 = vld [vmem:[#allocation7 + $0x298] sm:$0xff]
          %v485 = vld [vmem:[#allocation7 + $0x2a0] sm:$0xff]
          %v486 = vld [vmem:[#allocation7 + $0x2a8] sm:$0xff]
          %v487 = vld [vmem:[#allocation7 + $0x2b0] sm:$0xff]
          %v488 = vld [vmem:[#allocation7 + $0x2b8] sm:$0xff]
          %v489 = vld [vmem:[#allocation7 + $0x2c0] sm:$0xff]
          %v490 = vld [vmem:[#allocation7 + $0x2c8] sm:$0xff]
          %v491 = vld [vmem:[#allocation7 + $0x2d0] sm:$0xff]
          %v492 = vld [vmem:[#allocation7 + $0x2d8] sm:$0xff]
          %v493 = vld [vmem:[#allocation7 + $0x2e0] sm:$0xff]
          %v494 = vld [vmem:[#allocation7 + $0x2e8] sm:$0xff]
          %v495 = vld [vmem:[#allocation7 + $0x2f0] sm:$0xff]
          %v496 = vld [vmem:[#allocation7 + $0x2f8] sm:$0xff]
          %v497 = vld [vmem:[#allocation9] sm:$0x3f]
          %v499 = vlaneseq
          %v500 = vshrl.u32 %v499, 7
          %v501 = vsub.s32 0, %v500
          %v502 = vrot.slane %v497, %v501
          %v503 = vlaneseq
          %v504 = vshrl.u32 %v503, 7
          %v505 = vsub.s32 1, %v504
          %v506 = vrot.slane %v497, %v505
          %v507 = vlaneseq
          %v508 = vshrl.u32 %v507, 7
          %v509 = vsub.s32 2, %v508
          %v510 = vrot.slane %v497, %v509
          %v511 = vlaneseq
          %v512 = vshrl.u32 %v511, 7
          %v513 = vsub.s32 3, %v512
          %v514 = vrot.slane %v497, %v513
          %v515 = vlaneseq
          %v516 = vshrl.u32 %v515, 7
          %v517 = vsub.s32 4, %v516
          %v518 = vrot.slane %v497, %v517
          %v519 = vlaneseq
          %v520 = vshrl.u32 %v519, 7
          %v521 = vsub.s32 5, %v520
          %v522 = vrot.slane %v497, %v521
          %v625 = vunpack.c.l.b16 %v401
          %v626 = vunpack.c.h.b16 %v401
          %v627 = vunpack.c.l.b16 %v402
          %v628 = vunpack.c.h.b16 %v402
          %v629 = vunpack.c.l.b16 %v403
          %v630 = vunpack.c.h.b16 %v403
          %v631 = vunpack.c.l.b16 %v404
          %v632 = vunpack.c.h.b16 %v404
          %v633 = vunpack.c.l.b16 %v405
          %v634 = vunpack.c.h.b16 %v405
          %v635 = vunpack.c.l.b16 %v406
          %v636 = vunpack.c.h.b16 %v406
          %v637 = vunpack.c.l.b16 %v407
          %v638 = vunpack.c.h.b16 %v407
          %v639 = vunpack.c.l.b16 %v408
          %v640 = vunpack.c.h.b16 %v408
          %v641 = vunpack.c.l.b16 %v409
          %v642 = vunpack.c.h.b16 %v409
          %v643 = vunpack.c.l.b16 %v410
          %v644 = vunpack.c.h.b16 %v410
          %v645 = vunpack.c.l.b16 %v411
          %v646 = vunpack.c.h.b16 %v411
          %v647 = vunpack.c.l.b16 %v412
          %v648 = vunpack.c.h.b16 %v412
          %v649 = vunpack.c.l.b16 %v413
          %v650 = vunpack.c.h.b16 %v413
          %v651 = vunpack.c.l.b16 %v414
          %v652 = vunpack.c.h.b16 %v414
          %v653 = vunpack.c.l.b16 %v415
          %v654 = vunpack.c.h.b16 %v415
          %v655 = vunpack.c.l.b16 %v416
          %v656 = vunpack.c.h.b16 %v416
          %v657 = vunpack.c.l.b16 %v417
          %v658 = vunpack.c.h.b16 %v417
          %v659 = vunpack.c.l.b16 %v418
          %v660 = vunpack.c.h.b16 %v418
          %v661 = vunpack.c.l.b16 %v419
          %v662 = vunpack.c.h.b16 %v419
          %v663 = vunpack.c.l.b16 %v420
          %v664 = vunpack.c.h.b16 %v420
          %v665 = vunpack.c.l.b16 %v421
          %v666 = vunpack.c.h.b16 %v421
          %v667 = vunpack.c.l.b16 %v422
          %v668 = vunpack.c.h.b16 %v422
          %v669 = vunpack.c.l.b16 %v423
          %v670 = vunpack.c.h.b16 %v423
          %v671 = vunpack.c.l.b16 %v424
          %v672 = vunpack.c.h.b16 %v424
          %v673 = vunpack.c.l.b16 %v425
          %v674 = vunpack.c.h.b16 %v425
          %v675 = vunpack.c.l.b16 %v426
          %v676 = vunpack.c.h.b16 %v426
          %v677 = vunpack.c.l.b16 %v427
          %v678 = vunpack.c.h.b16 %v427
          %v679 = vunpack.c.l.b16 %v428
          %v680 = vunpack.c.h.b16 %v428
          %v681 = vunpack.c.l.b16 %v429
          %v682 = vunpack.c.h.b16 %v429
          %v683 = vunpack.c.l.b16 %v430
          %v684 = vunpack.c.h.b16 %v430
          %v685 = vunpack.c.l.b16 %v431
          %v686 = vunpack.c.h.b16 %v431
          %v687 = vunpack.c.l.b16 %v432
          %v688 = vunpack.c.h.b16 %v432
          %v689 = vunpack.c.l.b16 %v433
          %v690 = vunpack.c.h.b16 %v433
          %v691 = vunpack.c.l.b16 %v434
          %v692 = vunpack.c.h.b16 %v434
          %v693 = vunpack.c.l.b16 %v435
          %v694 = vunpack.c.h.b16 %v435
          %v695 = vunpack.c.l.b16 %v436
          %v696 = vunpack.c.h.b16 %v436
          %v697 = vunpack.c.l.b16 %v437
          %v698 = vunpack.c.h.b16 %v437
          %v699 = vunpack.c.l.b16 %v438
          %v700 = vunpack.c.h.b16 %v438
          %v701 = vunpack.c.l.b16 %v439
          %v702 = vunpack.c.h.b16 %v439
          %v703 = vunpack.c.l.b16 %v440
          %v704 = vunpack.c.h.b16 %v440
          %v705 = vunpack.c.l.b16 %v441
          %v706 = vunpack.c.h.b16 %v441
          %v707 = vunpack.c.l.b16 %v442
          %v708 = vunpack.c.h.b16 %v442
          %v709 = vunpack.c.l.b16 %v443
          %v710 = vunpack.c.h.b16 %v443
          %v711 = vunpack.c.l.b16 %v444
          %v712 = vunpack.c.h.b16 %v444
          %v713 = vunpack.c.l.b16 %v445
          %v714 = vunpack.c.h.b16 %v445
          %v715 = vunpack.c.l.b16 %v446
          %v716 = vunpack.c.h.b16 %v446
          %v717 = vunpack.c.l.b16 %v447
          %v718 = vunpack.c.h.b16 %v447
          %v719 = vunpack.c.l.b16 %v448
          %v720 = vunpack.c.h.b16 %v448
          %v721 = vunpack.c.l.b16 %v449
          %v722 = vunpack.c.h.b16 %v449
          %v723 = vunpack.c.l.b16 %v450
          %v724 = vunpack.c.h.b16 %v450
          %v725 = vunpack.c.l.b16 %v451
          %v726 = vunpack.c.h.b16 %v451
          %v727 = vunpack.c.l.b16 %v452
          %v728 = vunpack.c.h.b16 %v452
          %v729 = vunpack.c.l.b16 %v453
          %v730 = vunpack.c.h.b16 %v453
          %v731 = vunpack.c.l.b16 %v454
          %v732 = vunpack.c.h.b16 %v454
          %v733 = vunpack.c.l.b16 %v455
          %v734 = vunpack.c.h.b16 %v455
          %v735 = vunpack.c.l.b16 %v456
          %v736 = vunpack.c.h.b16 %v456
          %v737 = vunpack.c.l.b16 %v457
          %v738 = vunpack.c.h.b16 %v457
          %v739 = vunpack.c.l.b16 %v458
          %v740 = vunpack.c.h.b16 %v458
          %v741 = vunpack.c.l.b16 %v459
          %v742 = vunpack.c.h.b16 %v459
          %v743 = vunpack.c.l.b16 %v460
          %v744 = vunpack.c.h.b16 %v460
          %v745 = vunpack.c.l.b16 %v461
          %v746 = vunpack.c.h.b16 %v461
          %v747 = vunpack.c.l.b16 %v462
          %v748 = vunpack.c.h.b16 %v462
          %v749 = vunpack.c.l.b16 %v463
          %v750 = vunpack.c.h.b16 %v463
          %v751 = vunpack.c.l.b16 %v464
          %v752 = vunpack.c.h.b16 %v464
          %v753 = vunpack.c.l.b16 %v465
          %v754 = vunpack.c.h.b16 %v465
          %v755 = vunpack.c.l.b16 %v466
          %v756 = vunpack.c.h.b16 %v466
          %v757 = vunpack.c.l.b16 %v467
          %v758 = vunpack.c.h.b16 %v467
          %v759 = vunpack.c.l.b16 %v468
          %v760 = vunpack.c.h.b16 %v468
          %v761 = vunpack.c.l.b16 %v469
          %v762 = vunpack.c.h.b16 %v469
          %v763 = vunpack.c.l.b16 %v470
          %v764 = vunpack.c.h.b16 %v470
          %v765 = vunpack.c.l.b16 %v471
          %v766 = vunpack.c.h.b16 %v471
          %v767 = vunpack.c.l.b16 %v472
          %v768 = vunpack.c.h.b16 %v472
          %v769 = vunpack.c.l.b16 %v473
          %v770 = vunpack.c.h.b16 %v473
          %v771 = vunpack.c.l.b16 %v474
          %v772 = vunpack.c.h.b16 %v474
          %v773 = vunpack.c.l.b16 %v475
          %v774 = vunpack.c.h.b16 %v475
          %v775 = vunpack.c.l.b16 %v476
          %v776 = vunpack.c.h.b16 %v476
          %v777 = vunpack.c.l.b16 %v477
          %v778 = vunpack.c.h.b16 %v477
          %v779 = vunpack.c.l.b16 %v478
          %v780 = vunpack.c.h.b16 %v478
          %v781 = vunpack.c.l.b16 %v479
          %v782 = vunpack.c.h.b16 %v479
          %v783 = vunpack.c.l.b16 %v480
          %v784 = vunpack.c.h.b16 %v480
          %v785 = vunpack.c.l.b16 %v481
          %v786 = vunpack.c.h.b16 %v481
          %v787 = vunpack.c.l.b16 %v482
          %v788 = vunpack.c.h.b16 %v482
          %v789 = vunpack.c.l.b16 %v483
          %v790 = vunpack.c.h.b16 %v483
          %v791 = vunpack.c.l.b16 %v484
          %v792 = vunpack.c.h.b16 %v484
          %v793 = vunpack.c.l.b16 %v485
          %v794 = vunpack.c.h.b16 %v485
          %v795 = vunpack.c.l.b16 %v486
          %v796 = vunpack.c.h.b16 %v486
          %v797 = vunpack.c.l.b16 %v487
          %v798 = vunpack.c.h.b16 %v487
          %v799 = vunpack.c.l.b16 %v488
          %v800 = vunpack.c.h.b16 %v488
          %v801 = vunpack.c.l.b16 %v489
          %v802 = vunpack.c.h.b16 %v489
          %v803 = vunpack.c.l.b16 %v490
          %v804 = vunpack.c.h.b16 %v490
          %v805 = vunpack.c.l.b16 %v491
          %v806 = vunpack.c.h.b16 %v491
          %v807 = vunpack.c.l.b16 %v492
          %v808 = vunpack.c.h.b16 %v492
          %v809 = vunpack.c.l.b16 %v493
          %v810 = vunpack.c.h.b16 %v493
          %v811 = vunpack.c.l.b16 %v494
          %v812 = vunpack.c.h.b16 %v494
          %v813 = vunpack.c.l.b16 %v495
          %v814 = vunpack.c.h.b16 %v495
          %v815 = vunpack.c.l.b16 %v496
          %v816 = vunpack.c.h.b16 %v496
          %v817 = vpack.c.b16 %v631, %v625
          %v818 = vpack.c.b16 %v632, %v626
          %v819 = vpack.c.b16 %v633, %v627
          %v820 = vpack.c.b16 %v634, %v628
          %v821 = vpack.c.b16 %v635, %v629
          %v822 = vpack.c.b16 %v636, %v630
          %v823 = vpack.c.b16 %v643, %v637
          %v824 = vpack.c.b16 %v644, %v638
          %v825 = vpack.c.b16 %v645, %v639
          %v826 = vpack.c.b16 %v646, %v640
          %v827 = vpack.c.b16 %v647, %v641
          %v828 = vpack.c.b16 %v648, %v642
          %v829 = vpack.c.b16 %v655, %v649
          %v830 = vpack.c.b16 %v656, %v650
          %v831 = vpack.c.b16 %v657, %v651
          %v832 = vpack.c.b16 %v658, %v652
          %v833 = vpack.c.b16 %v659, %v653
          %v834 = vpack.c.b16 %v660, %v654
          %v835 = vpack.c.b16 %v667, %v661
          %v836 = vpack.c.b16 %v668, %v662
          %v837 = vpack.c.b16 %v669, %v663
          %v838 = vpack.c.b16 %v670, %v664
          %v839 = vpack.c.b16 %v671, %v665
          %v840 = vpack.c.b16 %v672, %v666
          %v841 = vpack.c.b16 %v679, %v673
          %v842 = vpack.c.b16 %v680, %v674
          %v843 = vpack.c.b16 %v681, %v675
          %v844 = vpack.c.b16 %v682, %v676
          %v845 = vpack.c.b16 %v683, %v677
          %v846 = vpack.c.b16 %v684, %v678
          %v847 = vpack.c.b16 %v691, %v685
          %v848 = vpack.c.b16 %v692, %v686
          %v849 = vpack.c.b16 %v693, %v687
          %v850 = vpack.c.b16 %v694, %v688
          %v851 = vpack.c.b16 %v695, %v689
          %v852 = vpack.c.b16 %v696, %v690
          %v853 = vpack.c.b16 %v703, %v697
          %v854 = vpack.c.b16 %v704, %v698
          %v855 = vpack.c.b16 %v705, %v699
          %v856 = vpack.c.b16 %v706, %v700
          %v857 = vpack.c.b16 %v707, %v701
          %v858 = vpack.c.b16 %v708, %v702
          %v859 = vpack.c.b16 %v715, %v709
          %v860 = vpack.c.b16 %v716, %v710
          %v861 = vpack.c.b16 %v717, %v711
          %v862 = vpack.c.b16 %v718, %v712
          %v863 = vpack.c.b16 %v719, %v713
          %v864 = vpack.c.b16 %v720, %v714
          %v865 = vpack.c.b16 %v727, %v721
          %v866 = vpack.c.b16 %v728, %v722
          %v867 = vpack.c.b16 %v729, %v723
          %v868 = vpack.c.b16 %v730, %v724
          %v869 = vpack.c.b16 %v731, %v725
          %v870 = vpack.c.b16 %v732, %v726
          %v871 = vpack.c.b16 %v739, %v733
          %v872 = vpack.c.b16 %v740, %v734
          %v873 = vpack.c.b16 %v741, %v735
          %v874 = vpack.c.b16 %v742, %v736
          %v875 = vpack.c.b16 %v743, %v737
          %v876 = vpack.c.b16 %v744, %v738
          %v877 = vpack.c.b16 %v751, %v745
          %v878 = vpack.c.b16 %v752, %v746
          %v879 = vpack.c.b16 %v753, %v747
          %v880 = vpack.c.b16 %v754, %v748
          %v881 = vpack.c.b16 %v755, %v749
          %v882 = vpack.c.b16 %v756, %v750
          %v883 = vpack.c.b16 %v763, %v757
          %v884 = vpack.c.b16 %v764, %v758
          %v885 = vpack.c.b16 %v765, %v759
          %v886 = vpack.c.b16 %v766, %v760
          %v887 = vpack.c.b16 %v767, %v761
          %v888 = vpack.c.b16 %v768, %v762
          %v889 = vpack.c.b16 %v775, %v769
          %v890 = vpack.c.b16 %v776, %v770
          %v891 = vpack.c.b16 %v777, %v771
          %v892 = vpack.c.b16 %v778, %v772
          %v893 = vpack.c.b16 %v779, %v773
          %v894 = vpack.c.b16 %v780, %v774
          %v895 = vpack.c.b16 %v787, %v781
          %v896 = vpack.c.b16 %v788, %v782
          %v897 = vpack.c.b16 %v789, %v783
          %v898 = vpack.c.b16 %v790, %v784
          %v899 = vpack.c.b16 %v791, %v785
          %v900 = vpack.c.b16 %v792, %v786
          %v901 = vpack.c.b16 %v799, %v793
          %v902 = vpack.c.b16 %v800, %v794
          %v903 = vpack.c.b16 %v801, %v795
          %v904 = vpack.c.b16 %v802, %v796
          %v905 = vpack.c.b16 %v803, %v797
          %v906 = vpack.c.b16 %v804, %v798
          %v907 = vpack.c.b16 %v811, %v805
          %v908 = vpack.c.b16 %v812, %v806
          %v909 = vpack.c.b16 %v813, %v807
          %v910 = vpack.c.b16 %v814, %v808
          %v911 = vpack.c.b16 %v815, %v809
          %v912 = vpack.c.b16 %v816, %v810
          %1009 = vmatprep.subr.bf16.mxu0 %v860
          %1010 = vmatpush1.bf16.msra.mxu0 %v859
          %1011 = vmatprep.subr.bf16.mxu0 %v854
          %1012 = vmatpush1.bf16.msra.mxu0 %v853
          %1013 = vmatprep.subr.bf16.mxu0 %v848
          %1014 = vmatpush1.bf16.msra.mxu0 %v847
          %1015 = vmatprep.subr.bf16.mxu0 %v842
          %1016 = vmatpush1.bf16.msra.mxu0 %v841
          %1017 = vmatprep.subr.bf16.mxu0 %v836
          %1018 = vmatpush1.bf16.msra.mxu0 %v835
          %1019 = vmatprep.subr.bf16.mxu0 %v830
          %1020 = vmatpush1.bf16.msra.mxu0 %v829
          %1021 = vmatprep.subr.bf16.mxu0 %v824
          %1022 = vmatpush1.bf16.msra.mxu0 %v823
          %1023 = vmatprep.subr.bf16.mxu0 %v818
          %1024 = vmatpush1.bf16.msra.mxu0 %v817
          %1025 = vmatprep.subr.bf16.mxu0 %v908
          %1026 = vmatpush2.bf16.msra.mxu0 %v907
          %1027 = vmatprep.subr.bf16.mxu0 %v902
          %1028 = vmatpush2.bf16.msra.mxu0 %v901
          %1029 = vmatprep.subr.bf16.mxu0 %v896
          %1030 = vmatpush2.bf16.msra.mxu0 %v895
          %1031 = vmatprep.subr.bf16.mxu0 %v890
          %1032 = vmatpush2.bf16.msra.mxu0 %v889
          %1033 = vmatprep.subr.bf16.mxu0 %v884
          %1034 = vmatpush2.bf16.msra.mxu0 %v883
          %1035 = vmatprep.subr.bf16.mxu0 %v878
          %1036 = vmatpush2.bf16.msra.mxu0 %v877
          %1037 = vmatprep.subr.bf16.mxu0 %v872
          %1038 = vmatpush2.bf16.msra.mxu0 %v871
          %1039 = vmatprep.subr.bf16.mxu0 %v866
          %1040 = vmatpush2.bf16.msra.mxu0 %v865
          %1041 = vmatprep.mubr.bf16.mxu0 %v370
          %1042 = vmatmul.mubr.bf16.gmra.mxu0 %v369
          %v1043 = vpop.f32.mrf.mxu0
          %v1044 = vadd.f32 %v502, %v1043
          %v1045 = vpop.f32.mrf.mxu0
          %v1046 = vadd.f32 %v506, %v1045
          %v1047 = vpop.f32.mrf.mxu0
          %v1048 = vadd.f32 %v502, %v1047
          %v1049 = vpop.f32.mrf.mxu0
          %v1050 = vadd.f32 %v506, %v1049
          %1051 = vmatprep.mubr.bf16.mxu0 %v372
          %1052 = vmatmul.mubr.bf16.gmra.mxu0 %v371
          %v1053 = vpop.f32.mrf.mxu0
          %v1054 = vadd.f32 %v502, %v1053
          %v1055 = vpop.f32.mrf.mxu0
          %v1056 = vadd.f32 %v506, %v1055
          %v1057 = vpop.f32.mrf.mxu0
          %v1058 = vadd.f32 %v502, %v1057
          %v1059 = vpop.f32.mrf.mxu0
          %v1060 = vadd.f32 %v506, %v1059
          %1061 = vmatprep.mubr.bf16.mxu0 %v374
          %1062 = vmatmul.mubr.bf16.gmra.mxu0 %v373
          %v1063 = vpop.f32.mrf.mxu0
          %v1064 = vadd.f32 %v502, %v1063
          %v1065 = vpop.f32.mrf.mxu0
          %v1066 = vadd.f32 %v506, %v1065
          %v1067 = vpop.f32.mrf.mxu0
          %v1068 = vadd.f32 %v502, %v1067
          %v1069 = vpop.f32.mrf.mxu0
          %v1070 = vadd.f32 %v506, %v1069
          %1071 = vmatprep.mubr.bf16.mxu0 %v376
          %1072 = vmatmul.mubr.bf16.gmra.mxu0 %v375
          %v1073 = vpop.f32.mrf.mxu0
          %v1074 = vadd.f32 %v502, %v1073
          %v1075 = vpop.f32.mrf.mxu0
          %v1076 = vadd.f32 %v506, %v1075
          %v1077 = vpop.f32.mrf.mxu0
          %v1078 = vadd.f32 %v502, %v1077
          %v1079 = vpop.f32.mrf.mxu0
          %v1080 = vadd.f32 %v506, %v1079
          %1081 = vmatprep.mubr.bf16.mxu0 %v378
          %1082 = vmatmul.mubr.bf16.gmra.mxu0 %v377
          %v1083 = vpop.f32.mrf.mxu0
          %v1084 = vadd.f32 %v502, %v1083
          %v1085 = vpop.f32.mrf.mxu0
          %v1086 = vadd.f32 %v506, %v1085
          %v1087 = vpop.f32.mrf.mxu0
          %v1088 = vadd.f32 %v502, %v1087
          %v1089 = vpop.f32.mrf.mxu0
          %v1090 = vadd.f32 %v506, %v1089
          %1091 = vmatprep.mubr.bf16.mxu0 %v380
          %1092 = vmatmul.mubr.bf16.gmra.mxu0 %v379
          %v1093 = vpop.f32.mrf.mxu0
          %v1094 = vadd.f32 %v502, %v1093
          %v1095 = vpop.f32.mrf.mxu0
          %v1096 = vadd.f32 %v506, %v1095
          %v1097 = vpop.f32.mrf.mxu0
          %v1098 = vadd.f32 %v502, %v1097
          %v1099 = vpop.f32.mrf.mxu0
          %v1100 = vadd.f32 %v506, %v1099
          %1101 = vmatprep.mubr.bf16.mxu0 %v382
          %1102 = vmatmul.mubr.bf16.gmra.mxu0 %v381
          %v1103 = vpop.f32.mrf.mxu0
          %v1104 = vadd.f32 %v502, %v1103
          %v1105 = vpop.f32.mrf.mxu0
          %v1106 = vadd.f32 %v506, %v1105
          %v1107 = vpop.f32.mrf.mxu0
          %v1108 = vadd.f32 %v502, %v1107
          %v1109 = vpop.f32.mrf.mxu0
          %v1110 = vadd.f32 %v506, %v1109
          %1111 = vmatprep.mubr.bf16.mxu0 %v384
          %1112 = vmatmul.mubr.bf16.gmra.mxu0 %v383
          %v1113 = vpop.f32.mrf.mxu0
          %v1114 = vadd.f32 %v502, %v1113
          %v1115 = vpop.f32.mrf.mxu0
          %v1116 = vadd.f32 %v506, %v1115
          %v1117 = vpop.f32.mrf.mxu0
          %v1118 = vadd.f32 %v502, %v1117
          %v1119 = vpop.f32.mrf.mxu0
          %v1120 = vadd.f32 %v506, %v1119
          %1121 = vmatprep.mubr.bf16.mxu0 %v386
          %1122 = vmatmul.mubr.bf16.gmra.mxu0 %v385
          %v1123 = vpop.f32.mrf.mxu0
          %v1124 = vadd.f32 %v502, %v1123
          %v1125 = vpop.f32.mrf.mxu0
          %v1126 = vadd.f32 %v506, %v1125
          %v1127 = vpop.f32.mrf.mxu0
          %v1128 = vadd.f32 %v502, %v1127
          %v1129 = vpop.f32.mrf.mxu0
          %v1130 = vadd.f32 %v506, %v1129
          %1131 = vmatprep.mubr.bf16.mxu0 %v388
          %1132 = vmatmul.mubr.bf16.gmra.mxu0 %v387
          %v1133 = vpop.f32.mrf.mxu0
          %v1134 = vadd.f32 %v502, %v1133
          %v1135 = vpop.f32.mrf.mxu0
          %v1136 = vadd.f32 %v506, %v1135
          %v1137 = vpop.f32.mrf.mxu0
          %v1138 = vadd.f32 %v502, %v1137
          %v1139 = vpop.f32.mrf.mxu0
          %v1140 = vadd.f32 %v506, %v1139
          %1141 = vmatprep.mubr.bf16.mxu0 %v390
          %1142 = vmatmul.mubr.bf16.gmra.mxu0 %v389
          %v1143 = vpop.f32.mrf.mxu0
          %v1144 = vadd.f32 %v502, %v1143
          %v1145 = vpop.f32.mrf.mxu0
          %v1146 = vadd.f32 %v506, %v1145
          %v1147 = vpop.f32.mrf.mxu0
          %v1148 = vadd.f32 %v502, %v1147
          %v1149 = vpop.f32.mrf.mxu0
          %v1150 = vadd.f32 %v506, %v1149
          %1151 = vmatprep.mubr.bf16.mxu0 %v392
          %1152 = vmatmul.mubr.bf16.gmra.mxu0 %v391
          %v1153 = vpop.f32.mrf.mxu0
          %v1154 = vadd.f32 %v502, %v1153
          %v1155 = vpop.f32.mrf.mxu0
          %v1156 = vadd.f32 %v506, %v1155
          %v1157 = vpop.f32.mrf.mxu0
          %v1158 = vadd.f32 %v502, %v1157
          %v1159 = vpop.f32.mrf.mxu0
          %v1160 = vadd.f32 %v506, %v1159
          %1161 = vmatprep.mubr.bf16.mxu0 %v394
          %1162 = vmatmul.mubr.bf16.gmra.mxu0 %v393
          %v1163 = vpop.f32.mrf.mxu0
          %v1164 = vadd.f32 %v502, %v1163
          %v1165 = vpop.f32.mrf.mxu0
          %v1166 = vadd.f32 %v506, %v1165
          %v1167 = vpop.f32.mrf.mxu0
          %v1168 = vadd.f32 %v502, %v1167
          %v1169 = vpop.f32.mrf.mxu0
          %v1170 = vadd.f32 %v506, %v1169
          %1171 = vmatprep.mubr.bf16.mxu0 %v396
          %1172 = vmatmul.mubr.bf16.gmra.mxu0 %v395
          %v1173 = vpop.f32.mrf.mxu0
          %v1174 = vadd.f32 %v502, %v1173
          %v1175 = vpop.f32.mrf.mxu0
          %v1176 = vadd.f32 %v506, %v1175
          %v1177 = vpop.f32.mrf.mxu0
          %v1178 = vadd.f32 %v502, %v1177
          %v1179 = vpop.f32.mrf.mxu0
          %v1180 = vadd.f32 %v506, %v1179
          %1181 = vmatprep.mubr.bf16.mxu0 %v398
          %1182 = vmatmul.mubr.bf16.gmra.mxu0 %v397
          %v1183 = vpop.f32.mrf.mxu0
          %v1184 = vadd.f32 %v502, %v1183
          %v1185 = vpop.f32.mrf.mxu0
          %v1186 = vadd.f32 %v506, %v1185
          %v1187 = vpop.f32.mrf.mxu0
          %v1188 = vadd.f32 %v502, %v1187
          %v1189 = vpop.f32.mrf.mxu0
          %v1190 = vadd.f32 %v506, %v1189
          %1191 = vmatprep.mubr.bf16.mxu0 %v400
          %1192 = vmatmul.mubr.bf16.gmra.mxu0 %v399
          %v1193 = vpop.f32.mrf.mxu0
          %v1194 = vadd.f32 %v502, %v1193
          %v1195 = vpop.f32.mrf.mxu0
          %v1196 = vadd.f32 %v506, %v1195
          %v1197 = vpop.f32.mrf.mxu0
          %v1198 = vadd.f32 %v502, %v1197
          %v1199 = vpop.f32.mrf.mxu0
          %v1200 = vadd.f32 %v506, %v1199
          %1201 = vdwg.mxu0
          %1202 = vmatprep.subr.bf16.mxu0 %v862
          %1203 = vmatpush1.bf16.msra.mxu0 %v861
          %1204 = vmatprep.subr.bf16.mxu0 %v856
          %1205 = vmatpush1.bf16.msra.mxu0 %v855
          %1206 = vmatprep.subr.bf16.mxu0 %v850
          %1207 = vmatpush1.bf16.msra.mxu0 %v849
          %1208 = vmatprep.subr.bf16.mxu0 %v844
          %1209 = vmatpush1.bf16.msra.mxu0 %v843
          %1210 = vmatprep.subr.bf16.mxu0 %v838
          %1211 = vmatpush1.bf16.msra.mxu0 %v837
          %1212 = vmatprep.subr.bf16.mxu0 %v832
          %1213 = vmatpush1.bf16.msra.mxu0 %v831
          %1214 = vmatprep.subr.bf16.mxu0 %v826
          %1215 = vmatpush1.bf16.msra.mxu0 %v825
          %1216 = vmatprep.subr.bf16.mxu0 %v820
          %1217 = vmatpush1.bf16.msra.mxu0 %v819
          %1218 = vmatprep.subr.bf16.mxu0 %v910
          %1219 = vmatpush2.bf16.msra.mxu0 %v909
          %1220 = vmatprep.subr.bf16.mxu0 %v904
          %1221 = vmatpush2.bf16.msra.mxu0 %v903
          %1222 = vmatprep.subr.bf16.mxu0 %v898
          %1223 = vmatpush2.bf16.msra.mxu0 %v897
          %1224 = vmatprep.subr.bf16.mxu0 %v892
          %1225 = vmatpush2.bf16.msra.mxu0 %v891
          %1226 = vmatprep.subr.bf16.mxu0 %v886
          %1227 = vmatpush2.bf16.msra.mxu0 %v885
          %1228 = vmatprep.subr.bf16.mxu0 %v880
          %1229 = vmatpush2.bf16.msra.mxu0 %v879
          %1230 = vmatprep.subr.bf16.mxu0 %v874
          %1231 = vmatpush2.bf16.msra.mxu0 %v873
          %1232 = vmatprep.subr.bf16.mxu0 %v868
          %1233 = vmatpush2.bf16.msra.mxu0 %v867
          %1234 = vmatprep.mubr.bf16.mxu0 %v370
          %1235 = vmatmul.mubr.bf16.gmra.mxu0 %v369
          %v1236 = vpop.f32.mrf.mxu0
          %v1237 = vadd.f32 %v510, %v1236
          %v1238 = vpop.f32.mrf.mxu0
          %v1239 = vadd.f32 %v514, %v1238
          %v1240 = vpop.f32.mrf.mxu0
          %v1241 = vadd.f32 %v510, %v1240
          %v1242 = vpop.f32.mrf.mxu0
          %v1243 = vadd.f32 %v514, %v1242
          %1244 = vmatprep.mubr.bf16.mxu0 %v372
          %1245 = vmatmul.mubr.bf16.gmra.mxu0 %v371
          %v1246 = vpop.f32.mrf.mxu0
          %v1247 = vadd.f32 %v510, %v1246
          %v1248 = vpop.f32.mrf.mxu0
          %v1249 = vadd.f32 %v514, %v1248
          %v1250 = vpop.f32.mrf.mxu0
          %v1251 = vadd.f32 %v510, %v1250
          %v1252 = vpop.f32.mrf.mxu0
          %v1253 = vadd.f32 %v514, %v1252
          %1254 = vmatprep.mubr.bf16.mxu0 %v374
          %1255 = vmatmul.mubr.bf16.gmra.mxu0 %v373
          %v1256 = vpop.f32.mrf.mxu0
          %v1257 = vadd.f32 %v510, %v1256
          %v1258 = vpop.f32.mrf.mxu0
          %v1259 = vadd.f32 %v514, %v1258
          %v1260 = vpop.f32.mrf.mxu0
          %v1261 = vadd.f32 %v510, %v1260
          %v1262 = vpop.f32.mrf.mxu0
          %v1263 = vadd.f32 %v514, %v1262
          %1264 = vmatprep.mubr.bf16.mxu0 %v376
          %1265 = vmatmul.mubr.bf16.gmra.mxu0 %v375
          %v1266 = vpop.f32.mrf.mxu0
          %v1267 = vadd.f32 %v510, %v1266
          %v1268 = vpop.f32.mrf.mxu0
          %v1269 = vadd.f32 %v514, %v1268
          %v1270 = vpop.f32.mrf.mxu0
          %v1271 = vadd.f32 %v510, %v1270
          %v1272 = vpop.f32.mrf.mxu0
          %v1273 = vadd.f32 %v514, %v1272
          %1274 = vmatprep.mubr.bf16.mxu0 %v378
          %1275 = vmatmul.mubr.bf16.gmra.mxu0 %v377
          %v1276 = vpop.f32.mrf.mxu0
          %v1277 = vadd.f32 %v510, %v1276
          %v1278 = vpop.f32.mrf.mxu0
          %v1279 = vadd.f32 %v514, %v1278
          %v1280 = vpop.f32.mrf.mxu0
          %v1281 = vadd.f32 %v510, %v1280
          %v1282 = vpop.f32.mrf.mxu0
          %v1283 = vadd.f32 %v514, %v1282
          %1284 = vmatprep.mubr.bf16.mxu0 %v380
          %1285 = vmatmul.mubr.bf16.gmra.mxu0 %v379
          %v1286 = vpop.f32.mrf.mxu0
          %v1287 = vadd.f32 %v510, %v1286
          %v1288 = vpop.f32.mrf.mxu0
          %v1289 = vadd.f32 %v514, %v1288
          %v1290 = vpop.f32.mrf.mxu0
          %v1291 = vadd.f32 %v510, %v1290
          %v1292 = vpop.f32.mrf.mxu0
          %v1293 = vadd.f32 %v514, %v1292
          %1294 = vmatprep.mubr.bf16.mxu0 %v382
          %1295 = vmatmul.mubr.bf16.gmra.mxu0 %v381
          %v1296 = vpop.f32.mrf.mxu0
          %v1297 = vadd.f32 %v510, %v1296
          %v1298 = vpop.f32.mrf.mxu0
          %v1299 = vadd.f32 %v514, %v1298
          %v1300 = vpop.f32.mrf.mxu0
          %v1301 = vadd.f32 %v510, %v1300
          %v1302 = vpop.f32.mrf.mxu0
          %v1303 = vadd.f32 %v514, %v1302
          %1304 = vmatprep.mubr.bf16.mxu0 %v384
          %1305 = vmatmul.mubr.bf16.gmra.mxu0 %v383
          %v1306 = vpop.f32.mrf.mxu0
          %v1307 = vadd.f32 %v510, %v1306
          %v1308 = vpop.f32.mrf.mxu0
          %v1309 = vadd.f32 %v514, %v1308
          %v1310 = vpop.f32.mrf.mxu0
          %v1311 = vadd.f32 %v510, %v1310
          %v1312 = vpop.f32.mrf.mxu0
          %v1313 = vadd.f32 %v514, %v1312
          %1314 = vmatprep.mubr.bf16.mxu0 %v386
          %1315 = vmatmul.mubr.bf16.gmra.mxu0 %v385
          %v1316 = vpop.f32.mrf.mxu0
          %v1317 = vadd.f32 %v510, %v1316
          %v1318 = vpop.f32.mrf.mxu0
          %v1319 = vadd.f32 %v514, %v1318
          %v1320 = vpop.f32.mrf.mxu0
          %v1321 = vadd.f32 %v510, %v1320
          %v1322 = vpop.f32.mrf.mxu0
          %v1323 = vadd.f32 %v514, %v1322
          %1324 = vmatprep.mubr.bf16.mxu0 %v388
          %1325 = vmatmul.mubr.bf16.gmra.mxu0 %v387
          %v1326 = vpop.f32.mrf.mxu0
          %v1327 = vadd.f32 %v510, %v1326
          %v1328 = vpop.f32.mrf.mxu0
          %v1329 = vadd.f32 %v514, %v1328
          %v1330 = vpop.f32.mrf.mxu0
          %v1331 = vadd.f32 %v510, %v1330
          %v1332 = vpop.f32.mrf.mxu0
          %v1333 = vadd.f32 %v514, %v1332
          %1334 = vmatprep.mubr.bf16.mxu0 %v390
          %1335 = vmatmul.mubr.bf16.gmra.mxu0 %v389
          %v1336 = vpop.f32.mrf.mxu0
          %v1337 = vadd.f32 %v510, %v1336
          %v1338 = vpop.f32.mrf.mxu0
          %v1339 = vadd.f32 %v514, %v1338
          %v1340 = vpop.f32.mrf.mxu0
          %v1341 = vadd.f32 %v510, %v1340
          %v1342 = vpop.f32.mrf.mxu0
          %v1343 = vadd.f32 %v514, %v1342
          %1344 = vmatprep.mubr.bf16.mxu0 %v392
          %1345 = vmatmul.mubr.bf16.gmra.mxu0 %v391
          %v1346 = vpop.f32.mrf.mxu0
          %v1347 = vadd.f32 %v510, %v1346
          %v1348 = vpop.f32.mrf.mxu0
          %v1349 = vadd.f32 %v514, %v1348
          %v1350 = vpop.f32.mrf.mxu0
          %v1351 = vadd.f32 %v510, %v1350
          %v1352 = vpop.f32.mrf.mxu0
          %v1353 = vadd.f32 %v514, %v1352
          %1354 = vmatprep.mubr.bf16.mxu0 %v394
          %1355 = vmatmul.mubr.bf16.gmra.mxu0 %v393
          %v1356 = vpop.f32.mrf.mxu0
          %v1357 = vadd.f32 %v510, %v1356
          %v1358 = vpop.f32.mrf.mxu0
          %v1359 = vadd.f32 %v514, %v1358
          %v1360 = vpop.f32.mrf.mxu0
          %v1361 = vadd.f32 %v510, %v1360
          %v1362 = vpop.f32.mrf.mxu0
          %v1363 = vadd.f32 %v514, %v1362
          %1364 = vmatprep.mubr.bf16.mxu0 %v396
          %1365 = vmatmul.mubr.bf16.gmra.mxu0 %v395
          %v1366 = vpop.f32.mrf.mxu0
          %v1367 = vadd.f32 %v510, %v1366
          %v1368 = vpop.f32.mrf.mxu0
          %v1369 = vadd.f32 %v514, %v1368
          %v1370 = vpop.f32.mrf.mxu0
          %v1371 = vadd.f32 %v510, %v1370
          %v1372 = vpop.f32.mrf.mxu0
          %v1373 = vadd.f32 %v514, %v1372
          %1374 = vmatprep.mubr.bf16.mxu0 %v398
          %1375 = vmatmul.mubr.bf16.gmra.mxu0 %v397
          %v1376 = vpop.f32.mrf.mxu0
          %v1377 = vadd.f32 %v510, %v1376
          %v1378 = vpop.f32.mrf.mxu0
          %v1379 = vadd.f32 %v514, %v1378
          %v1380 = vpop.f32.mrf.mxu0
          %v1381 = vadd.f32 %v510, %v1380
          %v1382 = vpop.f32.mrf.mxu0
          %v1383 = vadd.f32 %v514, %v1382
          %1384 = vmatprep.mubr.bf16.mxu0 %v400
          %1385 = vmatmul.mubr.bf16.gmra.mxu0 %v399
          %v1386 = vpop.f32.mrf.mxu0
          %v1387 = vadd.f32 %v510, %v1386
          %v1388 = vpop.f32.mrf.mxu0
          %v1389 = vadd.f32 %v514, %v1388
          %v1390 = vpop.f32.mrf.mxu0
          %v1391 = vadd.f32 %v510, %v1390
          %v1392 = vpop.f32.mrf.mxu0
          %v1393 = vadd.f32 %v514, %v1392
          %1394 = vdwg.mxu0
          %1395 = vmatprep.subr.bf16.mxu0 %v864
          %1396 = vmatpush1.bf16.msra.mxu0 %v863
          %1397 = vmatprep.subr.bf16.mxu0 %v858
          %1398 = vmatpush1.bf16.msra.mxu0 %v857
          %1399 = vmatprep.subr.bf16.mxu0 %v852
          %1400 = vmatpush1.bf16.msra.mxu0 %v851
          %1401 = vmatprep.subr.bf16.mxu0 %v846
          %1402 = vmatpush1.bf16.msra.mxu0 %v845
          %1403 = vmatprep.subr.bf16.mxu0 %v840
          %1404 = vmatpush1.bf16.msra.mxu0 %v839
          %1405 = vmatprep.subr.bf16.mxu0 %v834
          %1406 = vmatpush1.bf16.msra.mxu0 %v833
          %1407 = vmatprep.subr.bf16.mxu0 %v828
          %1408 = vmatpush1.bf16.msra.mxu0 %v827
          %1409 = vmatprep.subr.bf16.mxu0 %v822
          %1410 = vmatpush1.bf16.msra.mxu0 %v821
          %1411 = vmatprep.subr.bf16.mxu0 %v912
          %1412 = vmatpush2.bf16.msra.mxu0 %v911
          %1413 = vmatprep.subr.bf16.mxu0 %v906
          %1414 = vmatpush2.bf16.msra.mxu0 %v905
          %1415 = vmatprep.subr.bf16.mxu0 %v900
          %1416 = vmatpush2.bf16.msra.mxu0 %v899
          %1417 = vmatprep.subr.bf16.mxu0 %v894
          %1418 = vmatpush2.bf16.msra.mxu0 %v893
          %1419 = vmatprep.subr.bf16.mxu0 %v888
          %1420 = vmatpush2.bf16.msra.mxu0 %v887
          %1421 = vmatprep.subr.bf16.mxu0 %v882
          %1422 = vmatpush2.bf16.msra.mxu0 %v881
          %1423 = vmatprep.subr.bf16.mxu0 %v876
          %1424 = vmatpush2.bf16.msra.mxu0 %v875
          %1425 = vmatprep.subr.bf16.mxu0 %v870
          %1426 = vmatpush2.bf16.msra.mxu0 %v869
          %1427 = vmatprep.mubr.bf16.mxu0 %v370
          %1428 = vmatmul.mubr.bf16.gmra.mxu0 %v369
          %v1429 = vpop.f32.mrf.mxu0
          %v1430 = vadd.f32 %v518, %v1429
          %v1431 = vpop.f32.mrf.mxu0
          %v1432 = vadd.f32 %v522, %v1431
          %v1433 = vpop.f32.mrf.mxu0
          %v1434 = vadd.f32 %v518, %v1433
          %v1435 = vpop.f32.mrf.mxu0
          %v1436 = vadd.f32 %v522, %v1435
          %1437 = vmatprep.mubr.bf16.mxu0 %v372
          %1438 = vmatmul.mubr.bf16.gmra.mxu0 %v371
          %v1439 = vpop.f32.mrf.mxu0
          %v1440 = vadd.f32 %v518, %v1439
          %v1441 = vpop.f32.mrf.mxu0
          %v1442 = vadd.f32 %v522, %v1441
          %v1443 = vpop.f32.mrf.mxu0
          %v1444 = vadd.f32 %v518, %v1443
          %v1445 = vpop.f32.mrf.mxu0
          %v1446 = vadd.f32 %v522, %v1445
          %1447 = vmatprep.mubr.bf16.mxu0 %v374
          %1448 = vmatmul.mubr.bf16.gmra.mxu0 %v373
          %v1449 = vpop.f32.mrf.mxu0
          %v1450 = vadd.f32 %v518, %v1449
          %v1451 = vpop.f32.mrf.mxu0
          %v1452 = vadd.f32 %v522, %v1451
          %v1453 = vpop.f32.mrf.mxu0
          %v1454 = vadd.f32 %v518, %v1453
          %v1455 = vpop.f32.mrf.mxu0
          %v1456 = vadd.f32 %v522, %v1455
          %1457 = vmatprep.mubr.bf16.mxu0 %v376
          %1458 = vmatmul.mubr.bf16.gmra.mxu0 %v375
          %v1459 = vpop.f32.mrf.mxu0
          %v1460 = vadd.f32 %v518, %v1459
          %v1461 = vpop.f32.mrf.mxu0
          %v1462 = vadd.f32 %v522, %v1461
          %v1463 = vpop.f32.mrf.mxu0
          %v1464 = vadd.f32 %v518, %v1463
          %v1465 = vpop.f32.mrf.mxu0
          %v1466 = vadd.f32 %v522, %v1465
          %1467 = vmatprep.mubr.bf16.mxu0 %v378
          %1468 = vmatmul.mubr.bf16.gmra.mxu0 %v377
          %v1469 = vpop.f32.mrf.mxu0
          %v1470 = vadd.f32 %v518, %v1469
          %v1471 = vpop.f32.mrf.mxu0
          %v1472 = vadd.f32 %v522, %v1471
          %v1473 = vpop.f32.mrf.mxu0
          %v1474 = vadd.f32 %v518, %v1473
          %v1475 = vpop.f32.mrf.mxu0
          %v1476 = vadd.f32 %v522, %v1475
          %1477 = vmatprep.mubr.bf16.mxu0 %v380
          %1478 = vmatmul.mubr.bf16.gmra.mxu0 %v379
          %v1479 = vpop.f32.mrf.mxu0
          %v1480 = vadd.f32 %v518, %v1479
          %v1481 = vpop.f32.mrf.mxu0
          %v1482 = vadd.f32 %v522, %v1481
          %v1483 = vpop.f32.mrf.mxu0
          %v1484 = vadd.f32 %v518, %v1483
          %v1485 = vpop.f32.mrf.mxu0
          %v1486 = vadd.f32 %v522, %v1485
          %1487 = vmatprep.mubr.bf16.mxu0 %v382
          %1488 = vmatmul.mubr.bf16.gmra.mxu0 %v381
          %v1489 = vpop.f32.mrf.mxu0
          %v1490 = vadd.f32 %v518, %v1489
          %v1491 = vpop.f32.mrf.mxu0
          %v1492 = vadd.f32 %v522, %v1491
          %v1493 = vpop.f32.mrf.mxu0
          %v1494 = vadd.f32 %v518, %v1493
          %v1495 = vpop.f32.mrf.mxu0
          %v1496 = vadd.f32 %v522, %v1495
          %1497 = vmatprep.mubr.bf16.mxu0 %v384
          %1498 = vmatmul.mubr.bf16.gmra.mxu0 %v383
          %v1499 = vpop.f32.mrf.mxu0
          %v1500 = vadd.f32 %v518, %v1499
          %v1501 = vpop.f32.mrf.mxu0
          %v1502 = vadd.f32 %v522, %v1501
          %v1503 = vpop.f32.mrf.mxu0
          %v1504 = vadd.f32 %v518, %v1503
          %v1505 = vpop.f32.mrf.mxu0
          %v1506 = vadd.f32 %v522, %v1505
          %1507 = vmatprep.mubr.bf16.mxu0 %v386
          %1508 = vmatmul.mubr.bf16.gmra.mxu0 %v385
          %v1509 = vpop.f32.mrf.mxu0
          %v1510 = vadd.f32 %v518, %v1509
          %v1511 = vpop.f32.mrf.mxu0
          %v1512 = vadd.f32 %v522, %v1511
          %v1513 = vpop.f32.mrf.mxu0
          %v1514 = vadd.f32 %v518, %v1513
          %v1515 = vpop.f32.mrf.mxu0
          %v1516 = vadd.f32 %v522, %v1515
          %1517 = vmatprep.mubr.bf16.mxu0 %v388
          %1518 = vmatmul.mubr.bf16.gmra.mxu0 %v387
          %v1519 = vpop.f32.mrf.mxu0
          %v1520 = vadd.f32 %v518, %v1519
          %v1521 = vpop.f32.mrf.mxu0
          %v1522 = vadd.f32 %v522, %v1521
          %v1523 = vpop.f32.mrf.mxu0
          %v1524 = vadd.f32 %v518, %v1523
          %v1525 = vpop.f32.mrf.mxu0
          %v1526 = vadd.f32 %v522, %v1525
          %1527 = vmatprep.mubr.bf16.mxu0 %v390
          %1528 = vmatmul.mubr.bf16.gmra.mxu0 %v389
          %v1529 = vpop.f32.mrf.mxu0
          %v1530 = vadd.f32 %v518, %v1529
          %v1531 = vpop.f32.mrf.mxu0
          %v1532 = vadd.f32 %v522, %v1531
          %v1533 = vpop.f32.mrf.mxu0
          %v1534 = vadd.f32 %v518, %v1533
          %v1535 = vpop.f32.mrf.mxu0
          %v1536 = vadd.f32 %v522, %v1535
          %1537 = vmatprep.mubr.bf16.mxu0 %v392
          %1538 = vmatmul.mubr.bf16.gmra.mxu0 %v391
          %v1539 = vpop.f32.mrf.mxu0
          %v1540 = vadd.f32 %v518, %v1539
          %v1541 = vpop.f32.mrf.mxu0
          %v1542 = vadd.f32 %v522, %v1541
          %v1543 = vpop.f32.mrf.mxu0
          %v1544 = vadd.f32 %v518, %v1543
          %v1545 = vpop.f32.mrf.mxu0
          %v1546 = vadd.f32 %v522, %v1545
          %1547 = vmatprep.mubr.bf16.mxu0 %v394
          %1548 = vmatmul.mubr.bf16.gmra.mxu0 %v393
          %v1549 = vpop.f32.mrf.mxu0
          %v1550 = vadd.f32 %v518, %v1549
          %v1551 = vpop.f32.mrf.mxu0
          %v1552 = vadd.f32 %v522, %v1551
          %v1553 = vpop.f32.mrf.mxu0
          %v1554 = vadd.f32 %v518, %v1553
          %v1555 = vpop.f32.mrf.mxu0
          %v1556 = vadd.f32 %v522, %v1555
          %1557 = vmatprep.mubr.bf16.mxu0 %v396
          %1558 = vmatmul.mubr.bf16.gmra.mxu0 %v395
          %v1559 = vpop.f32.mrf.mxu0
          %v1560 = vadd.f32 %v518, %v1559
          %v1561 = vpop.f32.mrf.mxu0
          %v1562 = vadd.f32 %v522, %v1561
          %v1563 = vpop.f32.mrf.mxu0
          %v1564 = vadd.f32 %v518, %v1563
          %v1565 = vpop.f32.mrf.mxu0
          %v1566 = vadd.f32 %v522, %v1565
          %1567 = vmatprep.mubr.bf16.mxu0 %v398
          %1568 = vmatmul.mubr.bf16.gmra.mxu0 %v397
          %v1569 = vpop.f32.mrf.mxu0
          %v1570 = vadd.f32 %v518, %v1569
          %v1571 = vpop.f32.mrf.mxu0
          %v1572 = vadd.f32 %v522, %v1571
          %v1573 = vpop.f32.mrf.mxu0
          %v1574 = vadd.f32 %v518, %v1573
          %v1575 = vpop.f32.mrf.mxu0
          %v1576 = vadd.f32 %v522, %v1575
          %1577 = vmatprep.mubr.bf16.mxu0 %v400
          %1578 = vmatmul.mubr.bf16.gmra.mxu0 %v399
          %v1579 = vpop.f32.mrf.mxu0
          %v1580 = vadd.f32 %v518, %v1579
          %v1581 = vpop.f32.mrf.mxu0
          %v1582 = vadd.f32 %v522, %v1581
          %v1583 = vpop.f32.mrf.mxu0
          %v1584 = vadd.f32 %v518, %v1583
          %v1585 = vpop.f32.mrf.mxu0
          %v1586 = vadd.f32 %v522, %v1585
          %1587 = vdwg.mxu0
          %v1588 = vpack.c.bf16 %v1048, %v1044
          %v1589 = vpack.c.bf16 %v1050, %v1046
          %v1590 = vpack.c.bf16 %v1241, %v1237
          %v1591 = vpack.c.bf16 %v1243, %v1239
          %v1592 = vpack.c.bf16 %v1434, %v1430
          %v1593 = vpack.c.bf16 %v1436, %v1432
          %v1594 = vpack.c.bf16 %v1058, %v1054
          %v1595 = vpack.c.bf16 %v1060, %v1056
          %v1596 = vpack.c.bf16 %v1251, %v1247
          %v1597 = vpack.c.bf16 %v1253, %v1249
          %v1598 = vpack.c.bf16 %v1444, %v1440
          %v1599 = vpack.c.bf16 %v1446, %v1442
          %v1600 = vpack.c.bf16 %v1068, %v1064
          %v1601 = vpack.c.bf16 %v1070, %v1066
          %v1602 = vpack.c.bf16 %v1261, %v1257
          %v1603 = vpack.c.bf16 %v1263, %v1259
          %v1604 = vpack.c.bf16 %v1454, %v1450
          %v1605 = vpack.c.bf16 %v1456, %v1452
          %v1606 = vpack.c.bf16 %v1078, %v1074
          %v1607 = vpack.c.bf16 %v1080, %v1076
          %v1608 = vpack.c.bf16 %v1271, %v1267
          %v1609 = vpack.c.bf16 %v1273, %v1269
          %v1610 = vpack.c.bf16 %v1464, %v1460
          %v1611 = vpack.c.bf16 %v1466, %v1462
          %v1612 = vpack.c.bf16 %v1088, %v1084
          %v1613 = vpack.c.bf16 %v1090, %v1086
          %v1614 = vpack.c.bf16 %v1281, %v1277
          %v1615 = vpack.c.bf16 %v1283, %v1279
          %v1616 = vpack.c.bf16 %v1474, %v1470
          %v1617 = vpack.c.bf16 %v1476, %v1472
          %v1618 = vpack.c.bf16 %v1098, %v1094
          %v1619 = vpack.c.bf16 %v1100, %v1096
          %v1620 = vpack.c.bf16 %v1291, %v1287
          %v1621 = vpack.c.bf16 %v1293, %v1289
          %v1622 = vpack.c.bf16 %v1484, %v1480
          %v1623 = vpack.c.bf16 %v1486, %v1482
          %v1624 = vpack.c.bf16 %v1108, %v1104
          %v1625 = vpack.c.bf16 %v1110, %v1106
          %v1626 = vpack.c.bf16 %v1301, %v1297
          %v1627 = vpack.c.bf16 %v1303, %v1299
          %v1628 = vpack.c.bf16 %v1494, %v1490
          %v1629 = vpack.c.bf16 %v1496, %v1492
          %v1630 = vpack.c.bf16 %v1118, %v1114
          %v1631 = vpack.c.bf16 %v1120, %v1116
          %v1632 = vpack.c.bf16 %v1311, %v1307
          %v1633 = vpack.c.bf16 %v1313, %v1309
          %v1634 = vpack.c.bf16 %v1504, %v1500
          %v1635 = vpack.c.bf16 %v1506, %v1502
          %v1636 = vpack.c.bf16 %v1128, %v1124
          %v1637 = vpack.c.bf16 %v1130, %v1126
          %v1638 = vpack.c.bf16 %v1321, %v1317
          %v1639 = vpack.c.bf16 %v1323, %v1319
          %v1640 = vpack.c.bf16 %v1514, %v1510
          %v1641 = vpack.c.bf16 %v1516, %v1512
          %v1642 = vpack.c.bf16 %v1138, %v1134
          %v1643 = vpack.c.bf16 %v1140, %v1136
          %v1644 = vpack.c.bf16 %v1331, %v1327
          %v1645 = vpack.c.bf16 %v1333, %v1329
          %v1646 = vpack.c.bf16 %v1524, %v1520
          %v1647 = vpack.c.bf16 %v1526, %v1522
          %v1648 = vpack.c.bf16 %v1148, %v1144
          %v1649 = vpack.c.bf16 %v1150, %v1146
          %v1650 = vpack.c.bf16 %v1341, %v1337
          %v1651 = vpack.c.bf16 %v1343, %v1339
          %v1652 = vpack.c.bf16 %v1534, %v1530
          %v1653 = vpack.c.bf16 %v1536, %v1532
          %v1654 = vpack.c.bf16 %v1158, %v1154
          %v1655 = vpack.c.bf16 %v1160, %v1156
          %v1656 = vpack.c.bf16 %v1351, %v1347
          %v1657 = vpack.c.bf16 %v1353, %v1349
          %v1658 = vpack.c.bf16 %v1544, %v1540
          %v1659 = vpack.c.bf16 %v1546, %v1542
          %v1660 = vpack.c.bf16 %v1168, %v1164
          %v1661 = vpack.c.bf16 %v1170, %v1166
          %v1662 = vpack.c.bf16 %v1361, %v1357
          %v1663 = vpack.c.bf16 %v1363, %v1359
          %v1664 = vpack.c.bf16 %v1554, %v1550
          %v1665 = vpack.c.bf16 %v1556, %v1552
          %v1666 = vpack.c.bf16 %v1178, %v1174
          %v1667 = vpack.c.bf16 %v1180, %v1176
          %v1668 = vpack.c.bf16 %v1371, %v1367
          %v1669 = vpack.c.bf16 %v1373, %v1369
          %v1670 = vpack.c.bf16 %v1564, %v1560
          %v1671 = vpack.c.bf16 %v1566, %v1562
          %v1672 = vpack.c.bf16 %v1188, %v1184
          %v1673 = vpack.c.bf16 %v1190, %v1186
          %v1674 = vpack.c.bf16 %v1381, %v1377
          %v1675 = vpack.c.bf16 %v1383, %v1379
          %v1676 = vpack.c.bf16 %v1574, %v1570
          %v1677 = vpack.c.bf16 %v1576, %v1572
          %v1678 = vpack.c.bf16 %v1198, %v1194
          %v1679 = vpack.c.bf16 %v1200, %v1196
          %v1680 = vpack.c.bf16 %v1391, %v1387
          %v1681 = vpack.c.bf16 %v1393, %v1389
          %v1682 = vpack.c.bf16 %v1584, %v1580
          %v1683 = vpack.c.bf16 %v1586, %v1582
          %v1780 = vunpack.c.l.b16 %v1588
          %v1781 = vunpack.c.l.b16 %v1589
          %v1782 = vunpack.c.l.b16 %v1590
          %v1783 = vunpack.c.l.b16 %v1591
          %v1784 = vunpack.c.l.b16 %v1592
          %v1785 = vunpack.c.l.b16 %v1593
          %v1786 = vunpack.c.h.b16 %v1588
          %v1787 = vunpack.c.h.b16 %v1589
          %v1788 = vunpack.c.h.b16 %v1590
          %v1789 = vunpack.c.h.b16 %v1591
          %v1790 = vunpack.c.h.b16 %v1592
          %v1791 = vunpack.c.h.b16 %v1593
          %v1792 = vunpack.c.l.b16 %v1594
          %v1793 = vunpack.c.l.b16 %v1595
          %v1794 = vunpack.c.l.b16 %v1596
          %v1795 = vunpack.c.l.b16 %v1597
          %v1796 = vunpack.c.l.b16 %v1598
          %v1797 = vunpack.c.l.b16 %v1599
          %v1798 = vunpack.c.h.b16 %v1594
          %v1799 = vunpack.c.h.b16 %v1595
          %v1800 = vunpack.c.h.b16 %v1596
          %v1801 = vunpack.c.h.b16 %v1597
          %v1802 = vunpack.c.h.b16 %v1598
          %v1803 = vunpack.c.h.b16 %v1599
          %v1804 = vunpack.c.l.b16 %v1600
          %v1805 = vunpack.c.l.b16 %v1601
          %v1806 = vunpack.c.l.b16 %v1602
          %v1807 = vunpack.c.l.b16 %v1603
          %v1808 = vunpack.c.l.b16 %v1604
          %v1809 = vunpack.c.l.b16 %v1605
          %v1810 = vunpack.c.h.b16 %v1600
          %v1811 = vunpack.c.h.b16 %v1601
          %v1812 = vunpack.c.h.b16 %v1602
          %v1813 = vunpack.c.h.b16 %v1603
          %v1814 = vunpack.c.h.b16 %v1604
          %v1815 = vunpack.c.h.b16 %v1605
          %v1816 = vunpack.c.l.b16 %v1606
          %v1817 = vunpack.c.l.b16 %v1607
          %v1818 = vunpack.c.l.b16 %v1608
          %v1819 = vunpack.c.l.b16 %v1609
          %v1820 = vunpack.c.l.b16 %v1610
          %v1821 = vunpack.c.l.b16 %v1611
          %v1822 = vunpack.c.h.b16 %v1606
          %v1823 = vunpack.c.h.b16 %v1607
          %v1824 = vunpack.c.h.b16 %v1608
          %v1825 = vunpack.c.h.b16 %v1609
          %v1826 = vunpack.c.h.b16 %v1610
          %v1827 = vunpack.c.h.b16 %v1611
          %v1828 = vunpack.c.l.b16 %v1612
          %v1829 = vunpack.c.l.b16 %v1613
          %v1830 = vunpack.c.l.b16 %v1614
          %v1831 = vunpack.c.l.b16 %v1615
          %v1832 = vunpack.c.l.b16 %v1616
          %v1833 = vunpack.c.l.b16 %v1617
          %v1834 = vunpack.c.h.b16 %v1612
          %v1835 = vunpack.c.h.b16 %v1613
          %v1836 = vunpack.c.h.b16 %v1614
          %v1837 = vunpack.c.h.b16 %v1615
          %v1838 = vunpack.c.h.b16 %v1616
          %v1839 = vunpack.c.h.b16 %v1617
          %v1840 = vunpack.c.l.b16 %v1618
          %v1841 = vunpack.c.l.b16 %v1619
          %v1842 = vunpack.c.l.b16 %v1620
          %v1843 = vunpack.c.l.b16 %v1621
          %v1844 = vunpack.c.l.b16 %v1622
          %v1845 = vunpack.c.l.b16 %v1623
          %v1846 = vunpack.c.h.b16 %v1618
          %v1847 = vunpack.c.h.b16 %v1619
          %v1848 = vunpack.c.h.b16 %v1620
          %v1849 = vunpack.c.h.b16 %v1621
          %v1850 = vunpack.c.h.b16 %v1622
          %v1851 = vunpack.c.h.b16 %v1623
          %v1852 = vunpack.c.l.b16 %v1624
          %v1853 = vunpack.c.l.b16 %v1625
          %v1854 = vunpack.c.l.b16 %v1626
          %v1855 = vunpack.c.l.b16 %v1627
          %v1856 = vunpack.c.l.b16 %v1628
          %v1857 = vunpack.c.l.b16 %v1629
          %v1858 = vunpack.c.h.b16 %v1624
          %v1859 = vunpack.c.h.b16 %v1625
          %v1860 = vunpack.c.h.b16 %v1626
          %v1861 = vunpack.c.h.b16 %v1627
          %v1862 = vunpack.c.h.b16 %v1628
          %v1863 = vunpack.c.h.b16 %v1629
          %v1864 = vunpack.c.l.b16 %v1630
          %v1865 = vunpack.c.l.b16 %v1631
          %v1866 = vunpack.c.l.b16 %v1632
          %v1867 = vunpack.c.l.b16 %v1633
          %v1868 = vunpack.c.l.b16 %v1634
          %v1869 = vunpack.c.l.b16 %v1635
          %v1870 = vunpack.c.h.b16 %v1630
          %v1871 = vunpack.c.h.b16 %v1631
          %v1872 = vunpack.c.h.b16 %v1632
          %v1873 = vunpack.c.h.b16 %v1633
          %v1874 = vunpack.c.h.b16 %v1634
          %v1875 = vunpack.c.h.b16 %v1635
          %v1876 = vunpack.c.l.b16 %v1636
          %v1877 = vunpack.c.l.b16 %v1637
          %v1878 = vunpack.c.l.b16 %v1638
          %v1879 = vunpack.c.l.b16 %v1639
          %v1880 = vunpack.c.l.b16 %v1640
          %v1881 = vunpack.c.l.b16 %v1641
          %v1882 = vunpack.c.h.b16 %v1636
          %v1883 = vunpack.c.h.b16 %v1637
          %v1884 = vunpack.c.h.b16 %v1638
          %v1885 = vunpack.c.h.b16 %v1639
          %v1886 = vunpack.c.h.b16 %v1640
          %v1887 = vunpack.c.h.b16 %v1641
          %v1888 = vunpack.c.l.b16 %v1642
          %v1889 = vunpack.c.l.b16 %v1643
          %v1890 = vunpack.c.l.b16 %v1644
          %v1891 = vunpack.c.l.b16 %v1645
          %v1892 = vunpack.c.l.b16 %v1646
          %v1893 = vunpack.c.l.b16 %v1647
          %v1894 = vunpack.c.h.b16 %v1642
          %v1895 = vunpack.c.h.b16 %v1643
          %v1896 = vunpack.c.h.b16 %v1644
          %v1897 = vunpack.c.h.b16 %v1645
          %v1898 = vunpack.c.h.b16 %v1646
          %v1899 = vunpack.c.h.b16 %v1647
          %v1900 = vunpack.c.l.b16 %v1648
          %v1901 = vunpack.c.l.b16 %v1649
          %v1902 = vunpack.c.l.b16 %v1650
          %v1903 = vunpack.c.l.b16 %v1651
          %v1904 = vunpack.c.l.b16 %v1652
          %v1905 = vunpack.c.l.b16 %v1653
          %v1906 = vunpack.c.h.b16 %v1648
          %v1907 = vunpack.c.h.b16 %v1649
          %v1908 = vunpack.c.h.b16 %v1650
          %v1909 = vunpack.c.h.b16 %v1651
          %v1910 = vunpack.c.h.b16 %v1652
          %v1911 = vunpack.c.h.b16 %v1653
          %v1912 = vunpack.c.l.b16 %v1654
          %v1913 = vunpack.c.l.b16 %v1655
          %v1914 = vunpack.c.l.b16 %v1656
          %v1915 = vunpack.c.l.b16 %v1657
          %v1916 = vunpack.c.l.b16 %v1658
          %v1917 = vunpack.c.l.b16 %v1659
          %v1918 = vunpack.c.h.b16 %v1654
          %v1919 = vunpack.c.h.b16 %v1655
          %v1920 = vunpack.c.h.b16 %v1656
          %v1921 = vunpack.c.h.b16 %v1657
          %v1922 = vunpack.c.h.b16 %v1658
          %v1923 = vunpack.c.h.b16 %v1659
          %v1924 = vunpack.c.l.b16 %v1660
          %v1925 = vunpack.c.l.b16 %v1661
          %v1926 = vunpack.c.l.b16 %v1662
          %v1927 = vunpack.c.l.b16 %v1663
          %v1928 = vunpack.c.l.b16 %v1664
          %v1929 = vunpack.c.l.b16 %v1665
          %v1930 = vunpack.c.h.b16 %v1660
          %v1931 = vunpack.c.h.b16 %v1661
          %v1932 = vunpack.c.h.b16 %v1662
          %v1933 = vunpack.c.h.b16 %v1663
          %v1934 = vunpack.c.h.b16 %v1664
          %v1935 = vunpack.c.h.b16 %v1665
          %v1936 = vunpack.c.l.b16 %v1666
          %v1937 = vunpack.c.l.b16 %v1667
          %v1938 = vunpack.c.l.b16 %v1668
          %v1939 = vunpack.c.l.b16 %v1669
          %v1940 = vunpack.c.l.b16 %v1670
          %v1941 = vunpack.c.l.b16 %v1671
          %v1942 = vunpack.c.h.b16 %v1666
          %v1943 = vunpack.c.h.b16 %v1667
          %v1944 = vunpack.c.h.b16 %v1668
          %v1945 = vunpack.c.h.b16 %v1669
          %v1946 = vunpack.c.h.b16 %v1670
          %v1947 = vunpack.c.h.b16 %v1671
          %v1948 = vunpack.c.l.b16 %v1672
          %v1949 = vunpack.c.l.b16 %v1673
          %v1950 = vunpack.c.l.b16 %v1674
          %v1951 = vunpack.c.l.b16 %v1675
          %v1952 = vunpack.c.l.b16 %v1676
          %v1953 = vunpack.c.l.b16 %v1677
          %v1954 = vunpack.c.h.b16 %v1672
          %v1955 = vunpack.c.h.b16 %v1673
          %v1956 = vunpack.c.h.b16 %v1674
          %v1957 = vunpack.c.h.b16 %v1675
          %v1958 = vunpack.c.h.b16 %v1676
          %v1959 = vunpack.c.h.b16 %v1677
          %v1960 = vunpack.c.l.b16 %v1678
          %v1961 = vunpack.c.l.b16 %v1679
          %v1962 = vunpack.c.l.b16 %v1680
          %v1963 = vunpack.c.l.b16 %v1681
          %v1964 = vunpack.c.l.b16 %v1682
          %v1965 = vunpack.c.l.b16 %v1683
          %v1966 = vunpack.c.h.b16 %v1678
          %v1967 = vunpack.c.h.b16 %v1679
          %v1968 = vunpack.c.h.b16 %v1680
          %v1969 = vunpack.c.h.b16 %v1681
          %v1970 = vunpack.c.h.b16 %v1682
          %v1971 = vunpack.c.h.b16 %v1683
          %v1972 = vpack.c.b16 %v1781, %v1780
          %v1973 = vpack.c.b16 %v1783, %v1782
          %v1974 = vpack.c.b16 %v1785, %v1784
          %v1975 = vpack.c.b16 %v1787, %v1786
          %v1976 = vpack.c.b16 %v1789, %v1788
          %v1977 = vpack.c.b16 %v1791, %v1790
          %v1978 = vpack.c.b16 %v1793, %v1792
          %v1979 = vpack.c.b16 %v1795, %v1794
          %v1980 = vpack.c.b16 %v1797, %v1796
          %v1981 = vpack.c.b16 %v1799, %v1798
          %v1982 = vpack.c.b16 %v1801, %v1800
          %v1983 = vpack.c.b16 %v1803, %v1802
          %v1984 = vpack.c.b16 %v1805, %v1804
          %v1985 = vpack.c.b16 %v1807, %v1806
          %v1986 = vpack.c.b16 %v1809, %v1808
          %v1987 = vpack.c.b16 %v1811, %v1810
          %v1988 = vpack.c.b16 %v1813, %v1812
          %v1989 = vpack.c.b16 %v1815, %v1814
          %v1990 = vpack.c.b16 %v1817, %v1816
          %v1991 = vpack.c.b16 %v1819, %v1818
          %v1992 = vpack.c.b16 %v1821, %v1820
          %v1993 = vpack.c.b16 %v1823, %v1822
          %v1994 = vpack.c.b16 %v1825, %v1824
          %v1995 = vpack.c.b16 %v1827, %v1826
          %v1996 = vpack.c.b16 %v1829, %v1828
          %v1997 = vpack.c.b16 %v1831, %v1830
          %v1998 = vpack.c.b16 %v1833, %v1832
          %v1999 = vpack.c.b16 %v1835, %v1834
          %v2000 = vpack.c.b16 %v1837, %v1836
          %v2001 = vpack.c.b16 %v1839, %v1838
          %v2002 = vpack.c.b16 %v1841, %v1840
          %v2003 = vpack.c.b16 %v1843, %v1842
          %v2004 = vpack.c.b16 %v1845, %v1844
          %v2005 = vpack.c.b16 %v1847, %v1846
          %v2006 = vpack.c.b16 %v1849, %v1848
          %v2007 = vpack.c.b16 %v1851, %v1850
          %v2008 = vpack.c.b16 %v1853, %v1852
          %v2009 = vpack.c.b16 %v1855, %v1854
          %v2010 = vpack.c.b16 %v1857, %v1856
          %v2011 = vpack.c.b16 %v1859, %v1858
          %v2012 = vpack.c.b16 %v1861, %v1860
          %v2013 = vpack.c.b16 %v1863, %v1862
          %v2014 = vpack.c.b16 %v1865, %v1864
          %v2015 = vpack.c.b16 %v1867, %v1866
          %v2016 = vpack.c.b16 %v1869, %v1868
          %v2017 = vpack.c.b16 %v1871, %v1870
          %v2018 = vpack.c.b16 %v1873, %v1872
          %v2019 = vpack.c.b16 %v1875, %v1874
          %v2020 = vpack.c.b16 %v1877, %v1876
          %v2021 = vpack.c.b16 %v1879, %v1878
          %v2022 = vpack.c.b16 %v1881, %v1880
          %v2023 = vpack.c.b16 %v1883, %v1882
          %v2024 = vpack.c.b16 %v1885, %v1884
          %v2025 = vpack.c.b16 %v1887, %v1886
          %v2026 = vpack.c.b16 %v1889, %v1888
          %v2027 = vpack.c.b16 %v1891, %v1890
          %v2028 = vpack.c.b16 %v1893, %v1892
          %v2029 = vpack.c.b16 %v1895, %v1894
          %v2030 = vpack.c.b16 %v1897, %v1896
          %v2031 = vpack.c.b16 %v1899, %v1898
          %v2032 = vpack.c.b16 %v1901, %v1900
          %v2033 = vpack.c.b16 %v1903, %v1902
          %v2034 = vpack.c.b16 %v1905, %v1904
          %v2035 = vpack.c.b16 %v1907, %v1906
          %v2036 = vpack.c.b16 %v1909, %v1908
          %v2037 = vpack.c.b16 %v1911, %v1910
          %v2038 = vpack.c.b16 %v1913, %v1912
          %v2039 = vpack.c.b16 %v1915, %v1914
          %v2040 = vpack.c.b16 %v1917, %v1916
          %v2041 = vpack.c.b16 %v1919, %v1918
          %v2042 = vpack.c.b16 %v1921, %v1920
          %v2043 = vpack.c.b16 %v1923, %v1922
          %v2044 = vpack.c.b16 %v1925, %v1924
          %v2045 = vpack.c.b16 %v1927, %v1926
          %v2046 = vpack.c.b16 %v1929, %v1928
          %v2047 = vpack.c.b16 %v1931, %v1930
          %v2048 = vpack.c.b16 %v1933, %v1932
          %v2049 = vpack.c.b16 %v1935, %v1934
          %v2050 = vpack.c.b16 %v1937, %v1936
          %v2051 = vpack.c.b16 %v1939, %v1938
          %v2052 = vpack.c.b16 %v1941, %v1940
          %v2053 = vpack.c.b16 %v1943, %v1942
          %v2054 = vpack.c.b16 %v1945, %v1944
          %v2055 = vpack.c.b16 %v1947, %v1946
          %v2056 = vpack.c.b16 %v1949, %v1948
          %v2057 = vpack.c.b16 %v1951, %v1950
          %v2058 = vpack.c.b16 %v1953, %v1952
          %v2059 = vpack.c.b16 %v1955, %v1954
          %v2060 = vpack.c.b16 %v1957, %v1956
          %v2061 = vpack.c.b16 %v1959, %v1958
          %v2062 = vpack.c.b16 %v1961, %v1960
          %v2063 = vpack.c.b16 %v1963, %v1962
          %v2064 = vpack.c.b16 %v1965, %v1964
          %v2065 = vpack.c.b16 %v1967, %v1966
          %v2066 = vpack.c.b16 %v1969, %v1968
          %v2067 = vpack.c.b16 %v1971, %v1970
          %2164 = vst [vmem:[#allocation2] sm:$0xff] %v1972
          %2165 = vst [vmem:[#allocation2 + $0x8] sm:$0xff] %v1973
          %2166 = vst [vmem:[#allocation2 + $0x10] sm:$0xff] %v1974
          %2167 = vst [vmem:[#allocation2 + $0x18] sm:$0xff] %v1975
          %2168 = vst [vmem:[#allocation2 + $0x20] sm:$0xff] %v1976
          %2169 = vst [vmem:[#allocation2 + $0x28] sm:$0xff] %v1977
          %2170 = vst [vmem:[#allocation2 + $0x30] sm:$0xff] %v1978
          %2171 = vst [vmem:[#allocation2 + $0x38] sm:$0xff] %v1979
          %2172 = vst [vmem:[#allocation2 + $0x40] sm:$0xff] %v1980
          %2173 = vst [vmem:[#allocation2 + $0x48] sm:$0xff] %v1981
          %2174 = vst [vmem:[#allocation2 + $0x50] sm:$0xff] %v1982
          %2175 = vst [vmem:[#allocation2 + $0x58] sm:$0xff] %v1983
          %2176 = vst [vmem:[#allocation2 + $0x60] sm:$0xff] %v1984
          %2177 = vst [vmem:[#allocation2 + $0x68] sm:$0xff] %v1985
          %2178 = vst [vmem:[#allocation2 + $0x70] sm:$0xff] %v1986
          %2179 = vst [vmem:[#allocation2 + $0x78] sm:$0xff] %v1987
          %2180 = vst [vmem:[#allocation2 + $0x80] sm:$0xff] %v1988
          %2181 = vst [vmem:[#allocation2 + $0x88] sm:$0xff] %v1989
          %2182 = vst [vmem:[#allocation2 + $0x90] sm:$0xff] %v1990
          %2183 = vst [vmem:[#allocation2 + $0x98] sm:$0xff] %v1991
          %2184 = vst [vmem:[#allocation2 + $0xa0] sm:$0xff] %v1992
          %2185 = vst [vmem:[#allocation2 + $0xa8] sm:$0xff] %v1993
          %2186 = vst [vmem:[#allocation2 + $0xb0] sm:$0xff] %v1994
          %2187 = vst [vmem:[#allocation2 + $0xb8] sm:$0xff] %v1995
          %2188 = vst [vmem:[#allocation2 + $0xc0] sm:$0xff] %v1996
          %2189 = vst [vmem:[#allocation2 + $0xc8] sm:$0xff] %v1997
          %2190 = vst [vmem:[#allocation2 + $0xd0] sm:$0xff] %v1998
          %2191 = vst [vmem:[#allocation2 + $0xd8] sm:$0xff] %v1999
          %2192 = vst [vmem:[#allocation2 + $0xe0] sm:$0xff] %v2000
          %2193 = vst [vmem:[#allocation2 + $0xe8] sm:$0xff] %v2001
          %2194 = vst [vmem:[#allocation2 + $0xf0] sm:$0xff] %v2002
          %2195 = vst [vmem:[#allocation2 + $0xf8] sm:$0xff] %v2003
          %2196 = vst [vmem:[#allocation2 + $0x100] sm:$0xff] %v2004
          %2197 = vst [vmem:[#allocation2 + $0x108] sm:$0xff] %v2005
          %2198 = vst [vmem:[#allocation2 + $0x110] sm:$0xff] %v2006
          %2199 = vst [vmem:[#allocation2 + $0x118] sm:$0xff] %v2007
          %2200 = vst [vmem:[#allocation2 + $0x120] sm:$0xff] %v2008
          %2201 = vst [vmem:[#allocation2 + $0x128] sm:$0xff] %v2009
          %2202 = vst [vmem:[#allocation2 + $0x130] sm:$0xff] %v2010
          %2203 = vst [vmem:[#allocation2 + $0x138] sm:$0xff] %v2011
          %2204 = vst [vmem:[#allocation2 + $0x140] sm:$0xff] %v2012
          %2205 = vst [vmem:[#allocation2 + $0x148] sm:$0xff] %v2013
          %2206 = vst [vmem:[#allocation2 + $0x150] sm:$0xff] %v2014
          %2207 = vst [vmem:[#allocation2 + $0x158] sm:$0xff] %v2015
          %2208 = vst [vmem:[#allocation2 + $0x160] sm:$0xff] %v2016
          %2209 = vst [vmem:[#allocation2 + $0x168] sm:$0xff] %v2017
          %2210 = vst [vmem:[#allocation2 + $0x170] sm:$0xff] %v2018
          %2211 = vst [vmem:[#allocation2 + $0x178] sm:$0xff] %v2019
          %2212 = vst [vmem:[#allocation2 + $0x180] sm:$0xff] %v2020
          %2213 = vst [vmem:[#allocation2 + $0x188] sm:$0xff] %v2021
          %2214 = vst [vmem:[#allocation2 + $0x190] sm:$0xff] %v2022
          %2215 = vst [vmem:[#allocation2 + $0x198] sm:$0xff] %v2023
          %2216 = vst [vmem:[#allocation2 + $0x1a0] sm:$0xff] %v2024
          %2217 = vst [vmem:[#allocation2 + $0x1a8] sm:$0xff] %v2025
          %2218 = vst [vmem:[#allocation2 + $0x1b0] sm:$0xff] %v2026
          %2219 = vst [vmem:[#allocation2 + $0x1b8] sm:$0xff] %v2027
          %2220 = vst [vmem:[#allocation2 + $0x1c0] sm:$0xff] %v2028
          %2221 = vst [vmem:[#allocation2 + $0x1c8] sm:$0xff] %v2029
          %2222 = vst [vmem:[#allocation2 + $0x1d0] sm:$0xff] %v2030
          %2223 = vst [vmem:[#allocation2 + $0x1d8] sm:$0xff] %v2031
          %2224 = vst [vmem:[#allocation2 + $0x1e0] sm:$0xff] %v2032
          %2225 = vst [vmem:[#allocation2 + $0x1e8] sm:$0xff] %v2033
          %2226 = vst [vmem:[#allocation2 + $0x1f0] sm:$0xff] %v2034
          %2227 = vst [vmem:[#allocation2 + $0x1f8] sm:$0xff] %v2035
          %2228 = vst [vmem:[#allocation2 + $0x200] sm:$0xff] %v2036
          %2229 = vst [vmem:[#allocation2 + $0x208] sm:$0xff] %v2037
          %2230 = vst [vmem:[#allocation2 + $0x210] sm:$0xff] %v2038
          %2231 = vst [vmem:[#allocation2 + $0x218] sm:$0xff] %v2039
          %2232 = vst [vmem:[#allocation2 + $0x220] sm:$0xff] %v2040
          %2233 = vst [vmem:[#allocation2 + $0x228] sm:$0xff] %v2041
          %2234 = vst [vmem:[#allocation2 + $0x230] sm:$0xff] %v2042
          %2235 = vst [vmem:[#allocation2 + $0x238] sm:$0xff] %v2043
          %2236 = vst [vmem:[#allocation2 + $0x240] sm:$0xff] %v2044
          %2237 = vst [vmem:[#allocation2 + $0x248] sm:$0xff] %v2045
          %2238 = vst [vmem:[#allocation2 + $0x250] sm:$0xff] %v2046
          %2239 = vst [vmem:[#allocation2 + $0x258] sm:$0xff] %v2047
          %2240 = vst [vmem:[#allocation2 + $0x260] sm:$0xff] %v2048
          %2241 = vst [vmem:[#allocation2 + $0x268] sm:$0xff] %v2049
          %2242 = vst [vmem:[#allocation2 + $0x270] sm:$0xff] %v2050
          %2243 = vst [vmem:[#allocation2 + $0x278] sm:$0xff] %v2051
          %2244 = vst [vmem:[#allocation2 + $0x280] sm:$0xff] %v2052
          %2245 = vst [vmem:[#allocation2 + $0x288] sm:$0xff] %v2053
          %2246 = vst [vmem:[#allocation2 + $0x290] sm:$0xff] %v2054
          %2247 = vst [vmem:[#allocation2 + $0x298] sm:$0xff] %v2055
          %2248 = vst [vmem:[#allocation2 + $0x2a0] sm:$0xff] %v2056
          %2249 = vst [vmem:[#allocation2 + $0x2a8] sm:$0xff] %v2057
          %2250 = vst [vmem:[#allocation2 + $0x2b0] sm:$0xff] %v2058
          %2251 = vst [vmem:[#allocation2 + $0x2b8] sm:$0xff] %v2059
          %2252 = vst [vmem:[#allocation2 + $0x2c0] sm:$0xff] %v2060
          %2253 = vst [vmem:[#allocation2 + $0x2c8] sm:$0xff] %v2061
          %2254 = vst [vmem:[#allocation2 + $0x2d0] sm:$0xff] %v2062
          %2255 = vst [vmem:[#allocation2 + $0x2d8] sm:$0xff] %v2063
          %2256 = vst [vmem:[#allocation2 + $0x2e0] sm:$0xff] %v2064
          %2257 = vst [vmem:[#allocation2 + $0x2e8] sm:$0xff] %v2065
          %2258 = vst [vmem:[#allocation2 + $0x2f0] sm:$0xff] %v2066
          %2259 = vst [vmem:[#allocation2 + $0x2f8] sm:$0xff] %v2067
        $region60: #{tpu_custom_call.1} parent=39 // pred_fallthru
          _
        %s2260 = smul.u32 %s29, 128
        %s2261 = sshra.s32 %s2260, 3
        %s2262 = sand.u32 %s2260, 7
        %s2263 = smul.u32 %s2261, 6
        %s2264 = smul.addr %s2263, 4
        %s2265 = scalar_lea.vmem [#allocation2], %s2264
        %v2266 = vld [vmem:[%s2265] sm:$0xff]
        %v2267 = vld [vmem:[%s2265 + $0x18] sm:$0xff]
        %v2268 = vld [vmem:[%s2265 + $0x30] sm:$0xff]
        %v2269 = vld [vmem:[%s2265 + $0x48] sm:$0xff]
        %v2270 = vld [vmem:[%s2265 + $0x60] sm:$0xff]
        %v2271 = vld [vmem:[%s2265 + $0x78] sm:$0xff]
        %v2272 = vld [vmem:[%s2265 + $0x90] sm:$0xff]
        %v2273 = vld [vmem:[%s2265 + $0xa8] sm:$0xff]
        %v2274 = vld [vmem:[%s2265 + $0xc0] sm:$0xff]
        %v2275 = vld [vmem:[%s2265 + $0xd8] sm:$0xff]
        %v2276 = vld [vmem:[%s2265 + $0xf0] sm:$0xff]
        %v2277 = vld [vmem:[%s2265 + $0x108] sm:$0xff]
        %v2278 = vld [vmem:[%s2265 + $0x120] sm:$0xff]
        %v2279 = vld [vmem:[%s2265 + $0x138] sm:$0xff]
        %v2280 = vld [vmem:[%s2265 + $0x150] sm:$0xff]
        %v2281 = vld [vmem:[%s2265 + $0x168] sm:$0xff]
        %v2282 = vld [vmem:[#allocation2 + $0x8] sm:$0xf]
        %v2283 = vld [vmem:[#allocation2 + $0x20] sm:$0xf]
        %v2284 = vld [vmem:[#allocation2 + $0x38] sm:$0xf]
        %v2285 = vld [vmem:[#allocation2 + $0x50] sm:$0xf]
        %v2286 = vld [vmem:[#allocation2 + $0x68] sm:$0xf]
        %v2287 = vld [vmem:[#allocation2 + $0x80] sm:$0xf]
        %v2288 = vld [vmem:[#allocation2 + $0x98] sm:$0xf]
        %v2289 = vld [vmem:[#allocation2 + $0xb0] sm:$0xf]
        %v2290 = vld [vmem:[#allocation2 + $0xc8] sm:$0xf]
        %v2291 = vld [vmem:[#allocation2 + $0xe0] sm:$0xf]
        %v2292 = vld [vmem:[#allocation2 + $0xf8] sm:$0xf]
        %v2293 = vld [vmem:[#allocation2 + $0x110] sm:$0xf]
        %v2294 = vld [vmem:[#allocation2 + $0x128] sm:$0xf]
        %v2295 = vld [vmem:[#allocation2 + $0x140] sm:$0xf]
        %v2296 = vld [vmem:[#allocation2 + $0x158] sm:$0xf]
        %v2297 = vld [vmem:[#allocation2 + $0x170] sm:$0xf]
        %v2298 = vld [vmem:[#allocation2 + $0x188] sm:$0xf]
        %v2299 = vld [vmem:[#allocation2 + $0x1a0] sm:$0xf]
        %v2300 = vld [vmem:[#allocation2 + $0x1b8] sm:$0xf]
        %v2301 = vld [vmem:[#allocation2 + $0x1d0] sm:$0xf]
        %v2302 = vld [vmem:[#allocation2 + $0x1e8] sm:$0xf]
        %v2303 = vld [vmem:[#allocation2 + $0x200] sm:$0xf]
        %v2304 = vld [vmem:[#allocation2 + $0x218] sm:$0xf]
        %v2305 = vld [vmem:[#allocation2 + $0x230] sm:$0xf]
        %v2306 = vld [vmem:[#allocation2 + $0x248] sm:$0xf]
        %v2307 = vld [vmem:[#allocation2 + $0x260] sm:$0xf]
        %v2308 = vld [vmem:[#allocation2 + $0x278] sm:$0xf]
        %v2309 = vld [vmem:[#allocation2 + $0x290] sm:$0xf]
        %v2310 = vld [vmem:[#allocation2 + $0x2a8] sm:$0xf]
        %v2311 = vld [vmem:[#allocation2 + $0x2c0] sm:$0xf]
        %v2312 = vld [vmem:[#allocation2 + $0x2d8] sm:$0xf]
        %v2313 = vld [vmem:[#allocation2 + $0x2f0] sm:$0xf]
        %v2314 = vld [vmem:[#allocation2 + $0x10] sm:$0xf]
        %v2315 = vld [vmem:[#allocation2 + $0x28] sm:$0xf]
        %v2316 = vld [vmem:[#allocation2 + $0x40] sm:$0xf]
        %v2317 = vld [vmem:[#allocation2 + $0x58] sm:$0xf]
        %v2318 = vld [vmem:[#allocation2 + $0x70] sm:$0xf]
        %v2319 = vld [vmem:[#allocation2 + $0x88] sm:$0xf]
        %v2320 = vld [vmem:[#allocation2 + $0xa0] sm:$0xf]
        %v2321 = vld [vmem:[#allocation2 + $0xb8] sm:$0xf]
        %v2322 = vld [vmem:[#allocation2 + $0xd0] sm:$0xf]
        %v2323 = vld [vmem:[#allocation2 + $0xe8] sm:$0xf]
        %v2324 = vld [vmem:[#allocation2 + $0x100] sm:$0xf]
        %v2325 = vld [vmem:[#allocation2 + $0x118] sm:$0xf]
        %v2326 = vld [vmem:[#allocation2 + $0x130] sm:$0xf]
        %v2327 = vld [vmem:[#allocation2 + $0x148] sm:$0xf]
        %v2328 = vld [vmem:[#allocation2 + $0x160] sm:$0xf]
        %v2329 = vld [vmem:[#allocation2 + $0x178] sm:$0xf]
        %v2330 = vld [vmem:[#allocation2 + $0x190] sm:$0xf]
        %v2331 = vld [vmem:[#allocation2 + $0x1a8] sm:$0xf]
        %v2332 = vld [vmem:[#allocation2 + $0x1c0] sm:$0xf]
        %v2333 = vld [vmem:[#allocation2 + $0x1d8] sm:$0xf]
        %v2334 = vld [vmem:[#allocation2 + $0x1f0] sm:$0xf]
        %v2335 = vld [vmem:[#allocation2 + $0x208] sm:$0xf]
        %v2336 = vld [vmem:[#allocation2 + $0x220] sm:$0xf]
        %v2337 = vld [vmem:[#allocation2 + $0x238] sm:$0xf]
        %v2338 = vld [vmem:[#allocation2 + $0x250] sm:$0xf]
        %v2339 = vld [vmem:[#allocation2 + $0x268] sm:$0xf]
        %v2340 = vld [vmem:[#allocation2 + $0x280] sm:$0xf]
        %v2341 = vld [vmem:[#allocation2 + $0x298] sm:$0xf]
        %v2342 = vld [vmem:[#allocation2 + $0x2b0] sm:$0xf]
        %v2343 = vld [vmem:[#allocation2 + $0x2c8] sm:$0xf]
        %v2344 = vld [vmem:[#allocation2 + $0x2e0] sm:$0xf]
        %v2345 = vld [vmem:[#allocation2 + $0x2f8] sm:$0xf]
        %v2362 = vunpack.c.l.b16 %v2266
        %v2363 = vunpack.c.l.b16 %v2267
        %v2364 = vunpack.c.l.b16 %v2268
        %v2365 = vunpack.c.l.b16 %v2269
        %v2366 = vunpack.c.l.b16 %v2270
        %v2367 = vunpack.c.l.b16 %v2271
        %v2368 = vunpack.c.l.b16 %v2272
        %v2369 = vunpack.c.l.b16 %v2273
        %v2370 = vunpack.c.l.b16 %v2274
        %v2371 = vunpack.c.l.b16 %v2275
        %v2372 = vunpack.c.l.b16 %v2276
        %v2373 = vunpack.c.l.b16 %v2277
        %v2374 = vunpack.c.l.b16 %v2278
        %v2375 = vunpack.c.l.b16 %v2279
        %v2376 = vunpack.c.l.b16 %v2280
        %v2377 = vunpack.c.l.b16 %v2281
        %v2378 = vpack.c.b16 %v2363, %v2362
        %v2379 = vpack.c.b16 %v2365, %v2364
        %v2380 = vpack.c.b16 %v2367, %v2366
        %v2381 = vpack.c.b16 %v2369, %v2368
        %v2382 = vpack.c.b16 %v2371, %v2370
        %v2383 = vpack.c.b16 %v2373, %v2372
        %v2384 = vpack.c.b16 %v2375, %v2374
        %v2385 = vpack.c.b16 %v2377, %v2376
        %v2426 = vunpack.c.l.b16 %v2282
        %v2427 = vunpack.c.l.b16 %v2283
        %v2428 = vunpack.c.l.b16 %v2284
        %v2429 = vunpack.c.l.b16 %v2285
        %v2430 = vunpack.c.l.b16 %v2286
        %v2431 = vunpack.c.l.b16 %v2287
        %v2432 = vunpack.c.l.b16 %v2288
        %v2433 = vunpack.c.l.b16 %v2289
        %v2434 = vunpack.c.l.b16 %v2290
        %v2435 = vunpack.c.l.b16 %v2291
        %v2436 = vunpack.c.l.b16 %v2292
        %v2437 = vunpack.c.l.b16 %v2293
        %v2438 = vunpack.c.l.b16 %v2294
        %v2439 = vunpack.c.l.b16 %v2295
        %v2440 = vunpack.c.l.b16 %v2296
        %v2441 = vunpack.c.l.b16 %v2297
        %v2442 = vunpack.c.l.b16 %v2298
        %v2443 = vunpack.c.l.b16 %v2299
        %v2444 = vunpack.c.l.b16 %v2300
        %v2445 = vunpack.c.l.b16 %v2301
        %v2446 = vunpack.c.l.b16 %v2302
        %v2447 = vunpack.c.l.b16 %v2303
        %v2448 = vunpack.c.l.b16 %v2304
        %v2449 = vunpack.c.l.b16 %v2305
        %v2450 = vunpack.c.l.b16 %v2306
        %v2451 = vunpack.c.l.b16 %v2307
        %v2452 = vunpack.c.l.b16 %v2308
        %v2453 = vunpack.c.l.b16 %v2309
        %v2454 = vunpack.c.l.b16 %v2310
        %v2455 = vunpack.c.l.b16 %v2311
        %v2456 = vunpack.c.l.b16 %v2312
        %v2457 = vunpack.c.l.b16 %v2313
        %v2458 = vpack.c.b16 %v2427, %v2426
        %v2459 = vpack.c.b16 %v2429, %v2428
        %v2460 = vpack.c.b16 %v2431, %v2430
        %v2461 = vpack.c.b16 %v2433, %v2432
        %v2462 = vpack.c.b16 %v2435, %v2434
        %v2463 = vpack.c.b16 %v2437, %v2436
        %v2464 = vpack.c.b16 %v2439, %v2438
        %v2465 = vpack.c.b16 %v2441, %v2440
        %v2466 = vpack.c.b16 %v2443, %v2442
        %v2467 = vpack.c.b16 %v2445, %v2444
        %v2468 = vpack.c.b16 %v2447, %v2446
        %v2469 = vpack.c.b16 %v2449, %v2448
        %v2470 = vpack.c.b16 %v2451, %v2450
        %v2471 = vpack.c.b16 %v2453, %v2452
        %v2472 = vpack.c.b16 %v2455, %v2454
        %v2473 = vpack.c.b16 %v2457, %v2456
        %2490 = vmatprep.subr.bf16.mxu0 0
        %2491 = vmatpush1.bf16.xpose.msra.mxu0 %v2465
        %2492 = vmatprep.subr.bf16.mxu0 0
        %2493 = vmatpush1.bf16.xpose.msra.mxu0 %v2464
        %2494 = vmatprep.subr.bf16.mxu0 0
        %2495 = vmatpush1.bf16.xpose.msra.mxu0 %v2463
        %2496 = vmatprep.subr.bf16.mxu0 0
        %2497 = vmatpush1.bf16.xpose.msra.mxu0 %v2462
        %2498 = vmatprep.subr.bf16.mxu0 0
        %2499 = vmatpush1.bf16.xpose.msra.mxu0 %v2461
        %2500 = vmatprep.subr.bf16.mxu0 0
        %2501 = vmatpush1.bf16.xpose.msra.mxu0 %v2460
        %2502 = vmatprep.subr.bf16.mxu0 0
        %2503 = vmatpush1.bf16.xpose.msra.mxu0 %v2459
        %2504 = vmatprep.subr.bf16.mxu0 0
        %2505 = vmatpush1.bf16.xpose.msra.mxu0 %v2458
        %2506 = vmatprep.subr.bf16.mxu0 0
        %2507 = vmatpush2.bf16.xpose.msra.mxu0 %v2473
        %2508 = vmatprep.subr.bf16.mxu0 0
        %2509 = vmatpush2.bf16.xpose.msra.mxu0 %v2472
        %2510 = vmatprep.subr.bf16.mxu0 0
        %2511 = vmatpush2.bf16.xpose.msra.mxu0 %v2471
        %2512 = vmatprep.subr.bf16.mxu0 0
        %2513 = vmatpush2.bf16.xpose.msra.mxu0 %v2470
        %2514 = vmatprep.subr.bf16.mxu0 0
        %2515 = vmatpush2.bf16.xpose.msra.mxu0 %v2469
        %2516 = vmatprep.subr.bf16.mxu0 0
        %2517 = vmatpush2.bf16.xpose.msra.mxu0 %v2468
        %2518 = vmatprep.subr.bf16.mxu0 0
        %2519 = vmatpush2.bf16.xpose.msra.mxu0 %v2467
        %2520 = vmatprep.subr.bf16.mxu0 0
        %2521 = vmatpush2.bf16.xpose.msra.mxu0 %v2466
        %2522 = vmatprep.mubr.bf16.mxu0 0
        %2523 = vmatmul.mubr.bf16.gmra.mxu0 %v2378
        %v2524 = vpop.f32.mrf.mxu0
        %v2525 = vadd.f32 0.0, %v2524
        %v2526 = vpop.f32.mrf.mxu0
        %v2527 = vadd.f32 0.0, %v2526
        %v2528 = vpop.f32.mrf.mxu0
        %v2529 = vadd.f32 0.0, %v2528
        %v2530 = vpop.f32.mrf.mxu0
        %v2531 = vadd.f32 0.0, %v2530
        %2532 = vmatprep.mubr.bf16.mxu0 0
        %2533 = vmatmul.mubr.bf16.gmra.mxu0 %v2379
        %v2534 = vpop.f32.mrf.mxu0
        %v2535 = vadd.f32 0.0, %v2534
        %v2536 = vpop.f32.mrf.mxu0
        %v2537 = vadd.f32 0.0, %v2536
        %v2538 = vpop.f32.mrf.mxu0
        %v2539 = vadd.f32 0.0, %v2538
        %v2540 = vpop.f32.mrf.mxu0
        %v2541 = vadd.f32 0.0, %v2540
        %2542 = vmatprep.mubr.bf16.mxu0 0
        %2543 = vmatmul.mubr.bf16.gmra.mxu0 %v2380
        %v2544 = vpop.f32.mrf.mxu0
        %v2545 = vadd.f32 0.0, %v2544
        %v2546 = vpop.f32.mrf.mxu0
        %v2547 = vadd.f32 0.0, %v2546
        %v2548 = vpop.f32.mrf.mxu0
        %v2549 = vadd.f32 0.0, %v2548
        %v2550 = vpop.f32.mrf.mxu0
        %v2551 = vadd.f32 0.0, %v2550
        %2552 = vmatprep.mubr.bf16.mxu0 0
        %2553 = vmatmul.mubr.bf16.gmra.mxu0 %v2381
        %v2554 = vpop.f32.mrf.mxu0
        %v2555 = vadd.f32 0.0, %v2554
        %v2556 = vpop.f32.mrf.mxu0
        %v2557 = vadd.f32 0.0, %v2556
        %v2558 = vpop.f32.mrf.mxu0
        %v2559 = vadd.f32 0.0, %v2558
        %v2560 = vpop.f32.mrf.mxu0
        %v2561 = vadd.f32 0.0, %v2560
        %2562 = vmatprep.mubr.bf16.mxu0 0
        %2563 = vmatmul.mubr.bf16.gmra.mxu0 %v2382
        %v2564 = vpop.f32.mrf.mxu0
        %v2565 = vadd.f32 0.0, %v2564
        %v2566 = vpop.f32.mrf.mxu0
        %v2567 = vadd.f32 0.0, %v2566
        %v2568 = vpop.f32.mrf.mxu0
        %v2569 = vadd.f32 0.0, %v2568
        %v2570 = vpop.f32.mrf.mxu0
        %v2571 = vadd.f32 0.0, %v2570
        %2572 = vmatprep.mubr.bf16.mxu0 0
        %2573 = vmatmul.mubr.bf16.gmra.mxu0 %v2383
        %v2574 = vpop.f32.mrf.mxu0
        %v2575 = vadd.f32 0.0, %v2574
        %v2576 = vpop.f32.mrf.mxu0
        %v2577 = vadd.f32 0.0, %v2576
        %v2578 = vpop.f32.mrf.mxu0
        %v2579 = vadd.f32 0.0, %v2578
        %v2580 = vpop.f32.mrf.mxu0
        %v2581 = vadd.f32 0.0, %v2580
        %2582 = vmatprep.mubr.bf16.mxu0 0
        %2583 = vmatmul.mubr.bf16.gmra.mxu0 %v2384
        %v2584 = vpop.f32.mrf.mxu0
        %v2585 = vadd.f32 0.0, %v2584
        %v2586 = vpop.f32.mrf.mxu0
        %v2587 = vadd.f32 0.0, %v2586
        %v2588 = vpop.f32.mrf.mxu0
        %v2589 = vadd.f32 0.0, %v2588
        %v2590 = vpop.f32.mrf.mxu0
        %v2591 = vadd.f32 0.0, %v2590
        %2592 = vmatprep.mubr.bf16.mxu0 0
        %2593 = vmatmul.mubr.bf16.gmra.mxu0 %v2385
        %v2594 = vpop.f32.mrf.mxu0
        %v2595 = vadd.f32 0.0, %v2594
        %v2596 = vpop.f32.mrf.mxu0
        %v2597 = vadd.f32 0.0, %v2596
        %v2598 = vpop.f32.mrf.mxu0
        %v2599 = vadd.f32 0.0, %v2598
        %v2600 = vpop.f32.mrf.mxu0
        %v2601 = vadd.f32 0.0, %v2600
        %2602 = vdwg.mxu0
        %v2603 = vmax.f32 %v2525, %v2527
        %2604 = vmax.xlane.f32.xlu0 %v2603
        %v2605 = vpop.xlane.xlu0 %2604
        %v2606 = vmax.f32 %v2529, %v2531
        %2607 = vmax.xlane.f32.xlu0 %v2606
        %v2608 = vpop.xlane.xlu0 %2607
        %v2609 = vmax.f32 %v2535, %v2537
        %2610 = vmax.xlane.f32.xlu0 %v2609
        %v2611 = vpop.xlane.xlu0 %2610
        %v2612 = vmax.f32 %v2539, %v2541
        %2613 = vmax.xlane.f32.xlu0 %v2612
        %v2614 = vpop.xlane.xlu0 %2613
        %v2615 = vmax.f32 %v2545, %v2547
        %2616 = vmax.xlane.f32.xlu0 %v2615
        %v2617 = vpop.xlane.xlu0 %2616
        %v2618 = vmax.f32 %v2549, %v2551
        %2619 = vmax.xlane.f32.xlu0 %v2618
        %v2620 = vpop.xlane.xlu0 %2619
        %v2621 = vmax.f32 %v2555, %v2557
        %2622 = vmax.xlane.f32.xlu0 %v2621
        %v2623 = vpop.xlane.xlu0 %2622
        %v2624 = vmax.f32 %v2559, %v2561
        %2625 = vmax.xlane.f32.xlu0 %v2624
        %v2626 = vpop.xlane.xlu0 %2625
        %v2627 = vmax.f32 %v2565, %v2567
        %2628 = vmax.xlane.f32.xlu0 %v2627
        %v2629 = vpop.xlane.xlu0 %2628
        %v2630 = vmax.f32 %v2569, %v2571
        %2631 = vmax.xlane.f32.xlu0 %v2630
        %v2632 = vpop.xlane.xlu0 %2631
        %v2633 = vmax.f32 %v2575, %v2577
        %2634 = vmax.xlane.f32.xlu0 %v2633
        %v2635 = vpop.xlane.xlu0 %2634
        %v2636 = vmax.f32 %v2579, %v2581
        %2637 = vmax.xlane.f32.xlu0 %v2636
        %v2638 = vpop.xlane.xlu0 %2637
        %v2639 = vmax.f32 %v2585, %v2587
        %2640 = vmax.xlane.f32.xlu0 %v2639
        %v2641 = vpop.xlane.xlu0 %2640
        %v2642 = vmax.f32 %v2589, %v2591
        %2643 = vmax.xlane.f32.xlu0 %v2642
        %v2644 = vpop.xlane.xlu0 %2643
        %v2645 = vmax.f32 %v2595, %v2597
        %2646 = vmax.xlane.f32.xlu0 %v2645
        %v2647 = vpop.xlane.xlu0 %2646
        %v2648 = vmax.f32 %v2599, %v2601
        %2649 = vmax.xlane.f32.xlu0 %v2648
        %v2650 = vpop.xlane.xlu0 %2649
        %v2651 = vsub.f32 %v2525, %v2605
        %v2652 = vsub.f32 %v2527, %v2605
        %v2653 = vsub.f32 %v2529, %v2608
        %v2654 = vsub.f32 %v2531, %v2608
        %v2655 = vsub.f32 %v2535, %v2611
        %v2656 = vsub.f32 %v2537, %v2611
        %v2657 = vsub.f32 %v2539, %v2614
        %v2658 = vsub.f32 %v2541, %v2614
        %v2659 = vsub.f32 %v2545, %v2617
        %v2660 = vsub.f32 %v2547, %v2617
        %v2661 = vsub.f32 %v2549, %v2620
        %v2662 = vsub.f32 %v2551, %v2620
        %v2663 = vsub.f32 %v2555, %v2623
        %v2664 = vsub.f32 %v2557, %v2623
        %v2665 = vsub.f32 %v2559, %v2626
        %v2666 = vsub.f32 %v2561, %v2626
        %v2667 = vsub.f32 %v2565, %v2629
        %v2668 = vsub.f32 %v2567, %v2629
        %v2669 = vsub.f32 %v2569, %v2632
        %v2670 = vsub.f32 %v2571, %v2632
        %v2671 = vsub.f32 %v2575, %v2635
        %v2672 = vsub.f32 %v2577, %v2635
        %v2673 = vsub.f32 %v2579, %v2638
        %v2674 = vsub.f32 %v2581, %v2638
        %v2675 = vsub.f32 %v2585, %v2641
        %v2676 = vsub.f32 %v2587, %v2641
        %v2677 = vsub.f32 %v2589, %v2644
        %v2678 = vsub.f32 %v2591, %v2644
        %v2679 = vsub.f32 %v2595, %v2647
        %v2680 = vsub.f32 %v2597, %v2647
        %v2681 = vsub.f32 %v2599, %v2650
        %v2682 = vsub.f32 %v2601, %v2650
        %v2683 = vmul.f32 %v2651, 1.442695
        %v2684 = vpow.pop %v2683
        %v2685 = vmul.f32 %v2652, 1.442695
        %v2686 = vpow.pop %v2685
        %v2687 = vmul.f32 %v2653, 1.442695
        %v2688 = vpow.pop %v2687
        %v2689 = vmul.f32 %v2654, 1.442695
        %v2690 = vpow.pop %v2689
        %v2691 = vmul.f32 %v2655, 1.442695
        %v2692 = vpow.pop %v2691
        %v2693 = vmul.f32 %v2656, 1.442695
        %v2694 = vpow.pop %v2693
        %v2695 = vmul.f32 %v2657, 1.442695
        %v2696 = vpow.pop %v2695
        %v2697 = vmul.f32 %v2658, 1.442695
        %v2698 = vpow.pop %v2697
        %v2699 = vmul.f32 %v2659, 1.442695
        %v2700 = vpow.pop %v2699
        %v2701 = vmul.f32 %v2660, 1.442695
        %v2702 = vpow.pop %v2701
        %v2703 = vmul.f32 %v2661, 1.442695
        %v2704 = vpow.pop %v2703
        %v2705 = vmul.f32 %v2662, 1.442695
        %v2706 = vpow.pop %v2705
        %v2707 = vmul.f32 %v2663, 1.442695
        %v2708 = vpow.pop %v2707
        %v2709 = vmul.f32 %v2664, 1.442695
        %v2710 = vpow.pop %v2709
        %v2711 = vmul.f32 %v2665, 1.442695
        %v2712 = vpow.pop %v2711
        %v2713 = vmul.f32 %v2666, 1.442695
        %v2714 = vpow.pop %v2713
        %v2715 = vmul.f32 %v2667, 1.442695
        %v2716 = vpow.pop %v2715
        %v2717 = vmul.f32 %v2668, 1.442695
        %v2718 = vpow.pop %v2717
        %v2719 = vmul.f32 %v2669, 1.442695
        %v2720 = vpow.pop %v2719
        %v2721 = vmul.f32 %v2670, 1.442695
        %v2722 = vpow.pop %v2721
        %v2723 = vmul.f32 %v2671, 1.442695
        %v2724 = vpow.pop %v2723
        %v2725 = vmul.f32 %v2672, 1.442695
        %v2726 = vpow.pop %v2725
        %v2727 = vmul.f32 %v2673, 1.442695
        %v2728 = vpow.pop %v2727
        %v2729 = vmul.f32 %v2674, 1.442695
        %v2730 = vpow.pop %v2729
        %v2731 = vmul.f32 %v2675, 1.442695
        %v2732 = vpow.pop %v2731
        %v2733 = vmul.f32 %v2676, 1.442695
        %v2734 = vpow.pop %v2733
        %v2735 = vmul.f32 %v2677, 1.442695
        %v2736 = vpow.pop %v2735
        %v2737 = vmul.f32 %v2678, 1.442695
        %v2738 = vpow.pop %v2737
        %v2739 = vmul.f32 %v2679, 1.442695
        %v2740 = vpow.pop %v2739
        %v2741 = vmul.f32 %v2680, 1.442695
        %v2742 = vpow.pop %v2741
        %v2743 = vmul.f32 %v2681, 1.442695
        %v2744 = vpow.pop %v2743
        %v2745 = vmul.f32 %v2682, 1.442695
        %v2746 = vpow.pop %v2745
        %v2747 = vadd.f32 %v2684, %v2686
        %2748 = vadd.xlane.f32.xlu0 %v2747
        %v2749 = vpop.xlane.xlu0 %2748
        %v2750 = vadd.f32 %v2688, %v2690
        %2751 = vadd.xlane.f32.xlu0 %v2750
        %v2752 = vpop.xlane.xlu0 %2751
        %v2753 = vadd.f32 %v2692, %v2694
        %2754 = vadd.xlane.f32.xlu0 %v2753
        %v2755 = vpop.xlane.xlu0 %2754
        %v2756 = vadd.f32 %v2696, %v2698
        %2757 = vadd.xlane.f32.xlu0 %v2756
        %v2758 = vpop.xlane.xlu0 %2757
        %v2759 = vadd.f32 %v2700, %v2702
        %2760 = vadd.xlane.f32.xlu0 %v2759
        %v2761 = vpop.xlane.xlu0 %2760
        %v2762 = vadd.f32 %v2704, %v2706
        %2763 = vadd.xlane.f32.xlu0 %v2762
        %v2764 = vpop.xlane.xlu0 %2763
        %v2765 = vadd.f32 %v2708, %v2710
        %2766 = vadd.xlane.f32.xlu0 %v2765
        %v2767 = vpop.xlane.xlu0 %2766
        %v2768 = vadd.f32 %v2712, %v2714
        %2769 = vadd.xlane.f32.xlu0 %v2768
        %v2770 = vpop.xlane.xlu0 %2769
        %v2771 = vadd.f32 %v2716, %v2718
        %2772 = vadd.xlane.f32.xlu0 %v2771
        %v2773 = vpop.xlane.xlu0 %2772
        %v2774 = vadd.f32 %v2720, %v2722
        %2775 = vadd.xlane.f32.xlu0 %v2774
        %v2776 = vpop.xlane.xlu0 %2775
        %v2777 = vadd.f32 %v2724, %v2726
        %2778 = vadd.xlane.f32.xlu0 %v2777
        %v2779 = vpop.xlane.xlu0 %2778
        %v2780 = vadd.f32 %v2728, %v2730
        %2781 = vadd.xlane.f32.xlu0 %v2780
        %v2782 = vpop.xlane.xlu0 %2781
        %v2783 = vadd.f32 %v2732, %v2734
        %2784 = vadd.xlane.f32.xlu0 %v2783
        %v2785 = vpop.xlane.xlu0 %2784
        %v2786 = vadd.f32 %v2736, %v2738
        %2787 = vadd.xlane.f32.xlu0 %v2786
        %v2788 = vpop.xlane.xlu0 %2787
        %v2789 = vadd.f32 %v2740, %v2742
        %2790 = vadd.xlane.f32.xlu0 %v2789
        %v2791 = vpop.xlane.xlu0 %2790
        %v2792 = vadd.f32 %v2744, %v2746
        %2793 = vadd.xlane.f32.xlu0 %v2792
        %v2794 = vpop.xlane.xlu0 %2793
        %v2795 = vpack.c.bf16 %v2688, %v2684
        %v2796 = vpack.c.bf16 %v2690, %v2686
        %v2797 = vpack.c.bf16 %v2696, %v2692
        %v2798 = vpack.c.bf16 %v2698, %v2694
        %v2799 = vpack.c.bf16 %v2704, %v2700
        %v2800 = vpack.c.bf16 %v2706, %v2702
        %v2801 = vpack.c.bf16 %v2712, %v2708
        %v2802 = vpack.c.bf16 %v2714, %v2710
        %v2803 = vpack.c.bf16 %v2720, %v2716
        %v2804 = vpack.c.bf16 %v2722, %v2718
        %v2805 = vpack.c.bf16 %v2728, %v2724
        %v2806 = vpack.c.bf16 %v2730, %v2726
        %v2807 = vpack.c.bf16 %v2736, %v2732
        %v2808 = vpack.c.bf16 %v2738, %v2734
        %v2809 = vpack.c.bf16 %v2744, %v2740
        %v2810 = vpack.c.bf16 %v2746, %v2742
        %v2843 = vunpack.c.l.b16 %v2314
        %v2844 = vunpack.c.l.b16 %v2315
        %v2845 = vunpack.c.l.b16 %v2316
        %v2846 = vunpack.c.l.b16 %v2317
        %v2847 = vunpack.c.l.b16 %v2318
        %v2848 = vunpack.c.l.b16 %v2319
        %v2849 = vunpack.c.l.b16 %v2320
        %v2850 = vunpack.c.l.b16 %v2321
        %v2851 = vunpack.c.l.b16 %v2322
        %v2852 = vunpack.c.l.b16 %v2323
        %v2853 = vunpack.c.l.b16 %v2324
        %v2854 = vunpack.c.l.b16 %v2325
        %v2855 = vunpack.c.l.b16 %v2326
        %v2856 = vunpack.c.l.b16 %v2327
        %v2857 = vunpack.c.l.b16 %v2328
        %v2858 = vunpack.c.l.b16 %v2329
        %v2859 = vunpack.c.l.b16 %v2330
        %v2860 = vunpack.c.l.b16 %v2331
        %v2861 = vunpack.c.l.b16 %v2332
        %v2862 = vunpack.c.l.b16 %v2333
        %v2863 = vunpack.c.l.b16 %v2334
        %v2864 = vunpack.c.l.b16 %v2335
        %v2865 = vunpack.c.l.b16 %v2336
        %v2866 = vunpack.c.l.b16 %v2337
        %v2867 = vunpack.c.l.b16 %v2338
        %v2868 = vunpack.c.l.b16 %v2339
        %v2869 = vunpack.c.l.b16 %v2340
        %v2870 = vunpack.c.l.b16 %v2341
        %v2871 = vunpack.c.l.b16 %v2342
        %v2872 = vunpack.c.l.b16 %v2343
        %v2873 = vunpack.c.l.b16 %v2344
        %v2874 = vunpack.c.l.b16 %v2345
        %v2875 = vpack.c.b16 %v2844, %v2843
        %v2876 = vpack.c.b16 %v2846, %v2845
        %v2877 = vpack.c.b16 %v2848, %v2847
        %v2878 = vpack.c.b16 %v2850, %v2849
        %v2879 = vpack.c.b16 %v2852, %v2851
        %v2880 = vpack.c.b16 %v2854, %v2853
        %v2881 = vpack.c.b16 %v2856, %v2855
        %v2882 = vpack.c.b16 %v2858, %v2857
        %v2883 = vpack.c.b16 %v2860, %v2859
        %v2884 = vpack.c.b16 %v2862, %v2861
        %v2885 = vpack.c.b16 %v2864, %v2863
        %v2886 = vpack.c.b16 %v2866, %v2865
        %v2887 = vpack.c.b16 %v2868, %v2867
        %v2888 = vpack.c.b16 %v2870, %v2869
        %v2889 = vpack.c.b16 %v2872, %v2871
        %v2890 = vpack.c.b16 %v2874, %v2873
        %2907 = vmatprep.subr.bf16.mxu0 0
        %2908 = vmatpush1.bf16.msra.mxu0 %v2882
        %2909 = vmatprep.subr.bf16.mxu0 0
        %2910 = vmatpush1.bf16.msra.mxu0 %v2881
        %2911 = vmatprep.subr.bf16.mxu0 0
        %2912 = vmatpush1.bf16.msra.mxu0 %v2880
        %2913 = vmatprep.subr.bf16.mxu0 0
        %2914 = vmatpush1.bf16.msra.mxu0 %v2879
        %2915 = vmatprep.subr.bf16.mxu0 0
        %2916 = vmatpush1.bf16.msra.mxu0 %v2878
        %2917 = vmatprep.subr.bf16.mxu0 0
        %2918 = vmatpush1.bf16.msra.mxu0 %v2877
        %2919 = vmatprep.subr.bf16.mxu0 0
        %2920 = vmatpush1.bf16.msra.mxu0 %v2876
        %2921 = vmatprep.subr.bf16.mxu0 0
        %2922 = vmatpush1.bf16.msra.mxu0 %v2875
        %2923 = vmatprep.subr.bf16.mxu0 0
        %2924 = vmatpush2.bf16.msra.mxu0 %v2890
        %2925 = vmatprep.subr.bf16.mxu0 0
        %2926 = vmatpush2.bf16.msra.mxu0 %v2889
        %2927 = vmatprep.subr.bf16.mxu0 0
        %2928 = vmatpush2.bf16.msra.mxu0 %v2888
        %2929 = vmatprep.subr.bf16.mxu0 0
        %2930 = vmatpush2.bf16.msra.mxu0 %v2887
        %2931 = vmatprep.subr.bf16.mxu0 0
        %2932 = vmatpush2.bf16.msra.mxu0 %v2886
        %2933 = vmatprep.subr.bf16.mxu0 0
        %2934 = vmatpush2.bf16.msra.mxu0 %v2885
        %2935 = vmatprep.subr.bf16.mxu0 0
        %2936 = vmatpush2.bf16.msra.mxu0 %v2884
        %2937 = vmatprep.subr.bf16.mxu0 0
        %2938 = vmatpush2.bf16.msra.mxu0 %v2883
        %2939 = vmatprep.mubr.bf16.mxu0 %v2796
        %2940 = vmatmul.mubr.bf16.gmra.mxu0 %v2795
        %v2941 = vpop.f32.mrf.mxu0
        %v2942 = vadd.f32 0.0, %v2941
        %v2943 = vpop.f32.mrf.mxu0
        %v2944 = vpop.f32.mrf.mxu0
        %v2945 = vadd.f32 0.0, %v2944
        %v2946 = vpop.f32.mrf.mxu0
        %2947 = vmatprep.mubr.bf16.mxu0 %v2798
        %2948 = vmatmul.mubr.bf16.gmra.mxu0 %v2797
        %v2949 = vpop.f32.mrf.mxu0
        %v2950 = vadd.f32 0.0, %v2949
        %v2951 = vpop.f32.mrf.mxu0
        %v2952 = vpop.f32.mrf.mxu0
        %v2953 = vadd.f32 0.0, %v2952
        %v2954 = vpop.f32.mrf.mxu0
        %2955 = vmatprep.mubr.bf16.mxu0 %v2800
        %2956 = vmatmul.mubr.bf16.gmra.mxu0 %v2799
        %v2957 = vpop.f32.mrf.mxu0
        %v2958 = vadd.f32 0.0, %v2957
        %v2959 = vpop.f32.mrf.mxu0
        %v2960 = vpop.f32.mrf.mxu0
        %v2961 = vadd.f32 0.0, %v2960
        %v2962 = vpop.f32.mrf.mxu0
        %2963 = vmatprep.mubr.bf16.mxu0 %v2802
        %2964 = vmatmul.mubr.bf16.gmra.mxu0 %v2801
        %v2965 = vpop.f32.mrf.mxu0
        %v2966 = vadd.f32 0.0, %v2965
        %v2967 = vpop.f32.mrf.mxu0
        %v2968 = vpop.f32.mrf.mxu0
        %v2969 = vadd.f32 0.0, %v2968
        %v2970 = vpop.f32.mrf.mxu0
        %2971 = vmatprep.mubr.bf16.mxu0 %v2804
        %2972 = vmatmul.mubr.bf16.gmra.mxu0 %v2803
        %v2973 = vpop.f32.mrf.mxu0
        %v2974 = vadd.f32 0.0, %v2973
        %v2975 = vpop.f32.mrf.mxu0
        %v2976 = vpop.f32.mrf.mxu0
        %v2977 = vadd.f32 0.0, %v2976
        %v2978 = vpop.f32.mrf.mxu0
        %2979 = vmatprep.mubr.bf16.mxu0 %v2806
        %2980 = vmatmul.mubr.bf16.gmra.mxu0 %v2805
        %v2981 = vpop.f32.mrf.mxu0
        %v2982 = vadd.f32 0.0, %v2981
        %v2983 = vpop.f32.mrf.mxu0
        %v2984 = vpop.f32.mrf.mxu0
        %v2985 = vadd.f32 0.0, %v2984
        %v2986 = vpop.f32.mrf.mxu0
        %2987 = vmatprep.mubr.bf16.mxu0 %v2808
        %2988 = vmatmul.mubr.bf16.gmra.mxu0 %v2807
        %v2989 = vpop.f32.mrf.mxu0
        %v2990 = vadd.f32 0.0, %v2989
        %v2991 = vpop.f32.mrf.mxu0
        %v2992 = vpop.f32.mrf.mxu0
        %v2993 = vadd.f32 0.0, %v2992
        %v2994 = vpop.f32.mrf.mxu0
        %2995 = vmatprep.mubr.bf16.mxu0 %v2810
        %2996 = vmatmul.mubr.bf16.gmra.mxu0 %v2809
        %v2997 = vpop.f32.mrf.mxu0
        %v2998 = vadd.f32 0.0, %v2997
        %v2999 = vpop.f32.mrf.mxu0
        %v3000 = vpop.f32.mrf.mxu0
        %v3001 = vadd.f32 0.0, %v3000
        %v3002 = vpop.f32.mrf.mxu0
        %3003 = vdwg.mxu0
        %v3004 = vrcp.pop %v2749
        %v3005 = vrcp.pop %v2752
        %v3006 = vrcp.pop %v2755
        %v3007 = vrcp.pop %v2758
        %v3008 = vrcp.pop %v2761
        %v3009 = vrcp.pop %v2764
        %v3010 = vrcp.pop %v2767
        %v3011 = vrcp.pop %v2770
        %v3012 = vrcp.pop %v2773
        %v3013 = vrcp.pop %v2776
        %v3014 = vrcp.pop %v2779
        %v3015 = vrcp.pop %v2782
        %v3016 = vrcp.pop %v2785
        %v3017 = vrcp.pop %v2788
        %v3018 = vrcp.pop %v2791
        %v3019 = vrcp.pop %v2794
        %v3020 = vmul.f32 %v2942, %v3004
        %v3021 = vmul.f32 %v2945, %v3005
        %v3022 = vmul.f32 %v2950, %v3006
        %v3023 = vmul.f32 %v2953, %v3007
        %v3024 = vmul.f32 %v2958, %v3008
        %v3025 = vmul.f32 %v2961, %v3009
        %v3026 = vmul.f32 %v2966, %v3010
        %v3027 = vmul.f32 %v2969, %v3011
        %v3028 = vmul.f32 %v2974, %v3012
        %v3029 = vmul.f32 %v2977, %v3013
        %v3030 = vmul.f32 %v2982, %v3014
        %v3031 = vmul.f32 %v2985, %v3015
        %v3032 = vmul.f32 %v2990, %v3016
        %v3033 = vmul.f32 %v2993, %v3017
        %v3034 = vmul.f32 %v2998, %v3018
        %v3035 = vmul.f32 %v3001, %v3019
        %v3036 = vpack.c.bf16 %v3021, %v3020
        %v3037 = vpack.c.bf16 %v3023, %v3022
        %v3038 = vpack.c.bf16 %v3025, %v3024
        %v3039 = vpack.c.bf16 %v3027, %v3026
        %v3040 = vpack.c.bf16 %v3029, %v3028
        %v3041 = vpack.c.bf16 %v3031, %v3030
        %v3042 = vpack.c.bf16 %v3033, %v3032
        %v3043 = vpack.c.bf16 %v3035, %v3034
        %v3052 = vunpack.c.l.b16 %v3036
        %v3053 = vunpack.c.h.b16 %v3036
        %v3054 = vunpack.c.l.b16 %v3037
        %v3055 = vunpack.c.h.b16 %v3037
        %v3056 = vunpack.c.l.b16 %v3038
        %v3057 = vunpack.c.h.b16 %v3038
        %v3058 = vunpack.c.l.b16 %v3039
        %v3059 = vunpack.c.h.b16 %v3039
        %v3060 = vunpack.c.l.b16 %v3040
        %v3061 = vunpack.c.h.b16 %v3040
        %v3062 = vunpack.c.l.b16 %v3041
        %v3063 = vunpack.c.h.b16 %v3041
        %v3064 = vunpack.c.l.b16 %v3042
        %v3065 = vunpack.c.h.b16 %v3042
        %v3066 = vunpack.c.l.b16 %v3043
        %v3067 = vunpack.c.h.b16 %v3043
        %v3068 = vpack.c.b16 %v3052, %v3052
        %v3069 = vpack.c.b16 %v3053, %v3053
        %v3070 = vpack.c.b16 %v3054, %v3054
        %v3071 = vpack.c.b16 %v3055, %v3055
        %v3072 = vpack.c.b16 %v3056, %v3056
        %v3073 = vpack.c.b16 %v3057, %v3057
        %v3074 = vpack.c.b16 %v3058, %v3058
        %v3075 = vpack.c.b16 %v3059, %v3059
        %v3076 = vpack.c.b16 %v3060, %v3060
        %v3077 = vpack.c.b16 %v3061, %v3061
        %v3078 = vpack.c.b16 %v3062, %v3062
        %v3079 = vpack.c.b16 %v3063, %v3063
        %v3080 = vpack.c.b16 %v3064, %v3064
        %v3081 = vpack.c.b16 %v3065, %v3065
        %v3082 = vpack.c.b16 %v3066, %v3066
        %v3083 = vpack.c.b16 %v3067, %v3067
        %3100 = vst [vmem:[#allocation3] sm:$0xf] %v3068
        %3101 = vst [vmem:[#allocation3 + $0x8] sm:$0xf] %v3069
        %3102 = vst [vmem:[#allocation3 + $0x10] sm:$0xf] %v3070
        %3103 = vst [vmem:[#allocation3 + $0x18] sm:$0xf] %v3071
        %3104 = vst [vmem:[#allocation3 + $0x20] sm:$0xf] %v3072
        %3105 = vst [vmem:[#allocation3 + $0x28] sm:$0xf] %v3073
        %3106 = vst [vmem:[#allocation3 + $0x30] sm:$0xf] %v3074
        %3107 = vst [vmem:[#allocation3 + $0x38] sm:$0xf] %v3075
        %3108 = vst [vmem:[#allocation3 + $0x40] sm:$0xf] %v3076
        %3109 = vst [vmem:[#allocation3 + $0x48] sm:$0xf] %v3077
        %3110 = vst [vmem:[#allocation3 + $0x50] sm:$0xf] %v3078
        %3111 = vst [vmem:[#allocation3 + $0x58] sm:$0xf] %v3079
        %3112 = vst [vmem:[#allocation3 + $0x60] sm:$0xf] %v3080
        %3113 = vst [vmem:[#allocation3 + $0x68] sm:$0xf] %v3081
        %3114 = vst [vmem:[#allocation3 + $0x70] sm:$0xf] %v3082
        %3115 = vst [vmem:[#allocation3 + $0x78] sm:$0xf] %v3083
        %v3116 = vld [vmem:[#allocation2 + $0xc] sm:$0xf]
        %v3117 = vld [vmem:[#allocation2 + $0x24] sm:$0xf]
        %v3118 = vld [vmem:[#allocation2 + $0x3c] sm:$0xf]
        %v3119 = vld [vmem:[#allocation2 + $0x54] sm:$0xf]
        %v3120 = vld [vmem:[#allocation2 + $0x6c] sm:$0xf]
        %v3121 = vld [vmem:[#allocation2 + $0x84] sm:$0xf]
        %v3122 = vld [vmem:[#allocation2 + $0x9c] sm:$0xf]
        %v3123 = vld [vmem:[#allocation2 + $0xb4] sm:$0xf]
        %v3124 = vld [vmem:[#allocation2 + $0xcc] sm:$0xf]
        %v3125 = vld [vmem:[#allocation2 + $0xe4] sm:$0xf]
        %v3126 = vld [vmem:[#allocation2 + $0xfc] sm:$0xf]
        %v3127 = vld [vmem:[#allocation2 + $0x114] sm:$0xf]
        %v3128 = vld [vmem:[#allocation2 + $0x12c] sm:$0xf]
        %v3129 = vld [vmem:[#allocation2 + $0x144] sm:$0xf]
        %v3130 = vld [vmem:[#allocation2 + $0x15c] sm:$0xf]
        %v3131 = vld [vmem:[#allocation2 + $0x174] sm:$0xf]
        %v3132 = vld [vmem:[#allocation2 + $0x18c] sm:$0xf]
        %v3133 = vld [vmem:[#allocation2 + $0x1a4] sm:$0xf]
        %v3134 = vld [vmem:[#allocation2 + $0x1bc] sm:$0xf]
        %v3135 = vld [vmem:[#allocation2 + $0x1d4] sm:$0xf]
        %v3136 = vld [vmem:[#allocation2 + $0x1ec] sm:$0xf]
        %v3137 = vld [vmem:[#allocation2 + $0x204] sm:$0xf]
        %v3138 = vld [vmem:[#allocation2 + $0x21c] sm:$0xf]
        %v3139 = vld [vmem:[#allocation2 + $0x234] sm:$0xf]
        %v3140 = vld [vmem:[#allocation2 + $0x24c] sm:$0xf]
        %v3141 = vld [vmem:[#allocation2 + $0x264] sm:$0xf]
        %v3142 = vld [vmem:[#allocation2 + $0x27c] sm:$0xf]
        %v3143 = vld [vmem:[#allocation2 + $0x294] sm:$0xf]
        %v3144 = vld [vmem:[#allocation2 + $0x2ac] sm:$0xf]
        %v3145 = vld [vmem:[#allocation2 + $0x2c4] sm:$0xf]
        %v3146 = vld [vmem:[#allocation2 + $0x2dc] sm:$0xf]
        %v3147 = vld [vmem:[#allocation2 + $0x2f4] sm:$0xf]
        %v3148 = vld [vmem:[#allocation2 + $0x14] sm:$0xf]
        %v3149 = vld [vmem:[#allocation2 + $0x2c] sm:$0xf]
        %v3150 = vld [vmem:[#allocation2 + $0x44] sm:$0xf]
        %v3151 = vld [vmem:[#allocation2 + $0x5c] sm:$0xf]
        %v3152 = vld [vmem:[#allocation2 + $0x74] sm:$0xf]
        %v3153 = vld [vmem:[#allocation2 + $0x8c] sm:$0xf]
        %v3154 = vld [vmem:[#allocation2 + $0xa4] sm:$0xf]
        %v3155 = vld [vmem:[#allocation2 + $0xbc] sm:$0xf]
        %v3156 = vld [vmem:[#allocation2 + $0xd4] sm:$0xf]
        %v3157 = vld [vmem:[#allocation2 + $0xec] sm:$0xf]
        %v3158 = vld [vmem:[#allocation2 + $0x104] sm:$0xf]
        %v3159 = vld [vmem:[#allocation2 + $0x11c] sm:$0xf]
        %v3160 = vld [vmem:[#allocation2 + $0x134] sm:$0xf]
        %v3161 = vld [vmem:[#allocation2 + $0x14c] sm:$0xf]
        %v3162 = vld [vmem:[#allocation2 + $0x164] sm:$0xf]
        %v3163 = vld [vmem:[#allocation2 + $0x17c] sm:$0xf]
        %v3164 = vld [vmem:[#allocation2 + $0x194] sm:$0xf]
        %v3165 = vld [vmem:[#allocation2 + $0x1ac] sm:$0xf]
        %v3166 = vld [vmem:[#allocation2 + $0x1c4] sm:$0xf]
        %v3167 = vld [vmem:[#allocation2 + $0x1dc] sm:$0xf]
        %v3168 = vld [vmem:[#allocation2 + $0x1f4] sm:$0xf]
        %v3169 = vld [vmem:[#allocation2 + $0x20c] sm:$0xf]
        %v3170 = vld [vmem:[#allocation2 + $0x224] sm:$0xf]
        %v3171 = vld [vmem:[#allocation2 + $0x23c] sm:$0xf]
        %v3172 = vld [vmem:[#allocation2 + $0x254] sm:$0xf]
        %v3173 = vld [vmem:[#allocation2 + $0x26c] sm:$0xf]
        %v3174 = vld [vmem:[#allocation2 + $0x284] sm:$0xf]
        %v3175 = vld [vmem:[#allocation2 + $0x29c] sm:$0xf]
        %v3176 = vld [vmem:[#allocation2 + $0x2b4] sm:$0xf]
        %v3177 = vld [vmem:[#allocation2 + $0x2cc] sm:$0xf]
        %v3178 = vld [vmem:[#allocation2 + $0x2e4] sm:$0xf]
        %v3179 = vld [vmem:[#allocation2 + $0x2fc] sm:$0xf]
        %v3180 = vunpack.c.h.b16 %v2266
        %v3181 = vunpack.c.h.b16 %v2267
        %v3182 = vunpack.c.h.b16 %v2268
        %v3183 = vunpack.c.h.b16 %v2269
        %v3184 = vunpack.c.h.b16 %v2270
        %v3185 = vunpack.c.h.b16 %v2271
        %v3186 = vunpack.c.h.b16 %v2272
        %v3187 = vunpack.c.h.b16 %v2273
        %v3188 = vunpack.c.h.b16 %v2274
        %v3189 = vunpack.c.h.b16 %v2275
        %v3190 = vunpack.c.h.b16 %v2276
        %v3191 = vunpack.c.h.b16 %v2277
        %v3192 = vunpack.c.h.b16 %v2278
        %v3193 = vunpack.c.h.b16 %v2279
        %v3194 = vunpack.c.h.b16 %v2280
        %v3195 = vunpack.c.h.b16 %v2281
        %v3196 = vpack.c.b16 %v3181, %v3180
        %v3197 = vpack.c.b16 %v3183, %v3182
        %v3198 = vpack.c.b16 %v3185, %v3184
        %v3199 = vpack.c.b16 %v3187, %v3186
        %v3200 = vpack.c.b16 %v3189, %v3188
        %v3201 = vpack.c.b16 %v3191, %v3190
        %v3202 = vpack.c.b16 %v3193, %v3192
        %v3203 = vpack.c.b16 %v3195, %v3194
        %v3244 = vunpack.c.l.b16 %v3116
        %v3245 = vunpack.c.l.b16 %v3117
        %v3246 = vunpack.c.l.b16 %v3118
        %v3247 = vunpack.c.l.b16 %v3119
        %v3248 = vunpack.c.l.b16 %v3120
        %v3249 = vunpack.c.l.b16 %v3121
        %v3250 = vunpack.c.l.b16 %v3122
        %v3251 = vunpack.c.l.b16 %v3123
        %v3252 = vunpack.c.l.b16 %v3124
        %v3253 = vunpack.c.l.b16 %v3125
        %v3254 = vunpack.c.l.b16 %v3126
        %v3255 = vunpack.c.l.b16 %v3127
        %v3256 = vunpack.c.l.b16 %v3128
        %v3257 = vunpack.c.l.b16 %v3129
        %v3258 = vunpack.c.l.b16 %v3130
        %v3259 = vunpack.c.l.b16 %v3131
        %v3260 = vunpack.c.l.b16 %v3132
        %v3261 = vunpack.c.l.b16 %v3133
        %v3262 = vunpack.c.l.b16 %v3134
        %v3263 = vunpack.c.l.b16 %v3135
        %v3264 = vunpack.c.l.b16 %v3136
        %v3265 = vunpack.c.l.b16 %v3137
        %v3266 = vunpack.c.l.b16 %v3138
        %v3267 = vunpack.c.l.b16 %v3139
        %v3268 = vunpack.c.l.b16 %v3140
        %v3269 = vunpack.c.l.b16 %v3141
        %v3270 = vunpack.c.l.b16 %v3142
        %v3271 = vunpack.c.l.b16 %v3143
        %v3272 = vunpack.c.l.b16 %v3144
        %v3273 = vunpack.c.l.b16 %v3145
        %v3274 = vunpack.c.l.b16 %v3146
        %v3275 = vunpack.c.l.b16 %v3147
        %v3276 = vpack.c.b16 %v3245, %v3244
        %v3277 = vpack.c.b16 %v3247, %v3246
        %v3278 = vpack.c.b16 %v3249, %v3248
        %v3279 = vpack.c.b16 %v3251, %v3250
        %v3280 = vpack.c.b16 %v3253, %v3252
        %v3281 = vpack.c.b16 %v3255, %v3254
        %v3282 = vpack.c.b16 %v3257, %v3256
        %v3283 = vpack.c.b16 %v3259, %v3258
        %v3284 = vpack.c.b16 %v3261, %v3260
        %v3285 = vpack.c.b16 %v3263, %v3262
        %v3286 = vpack.c.b16 %v3265, %v3264
        %v3287 = vpack.c.b16 %v3267, %v3266
        %v3288 = vpack.c.b16 %v3269, %v3268
        %v3289 = vpack.c.b16 %v3271, %v3270
        %v3290 = vpack.c.b16 %v3273, %v3272
        %v3291 = vpack.c.b16 %v3275, %v3274
        %3308 = vmatprep.subr.bf16.mxu0 0
        %3309 = vmatpush1.bf16.xpose.msra.mxu0 %v3283
        %3310 = vmatprep.subr.bf16.mxu0 0
        %3311 = vmatpush1.bf16.xpose.msra.mxu0 %v3282
        %3312 = vmatprep.subr.bf16.mxu0 0
        %3313 = vmatpush1.bf16.xpose.msra.mxu0 %v3281
        %3314 = vmatprep.subr.bf16.mxu0 0
        %3315 = vmatpush1.bf16.xpose.msra.mxu0 %v3280
        %3316 = vmatprep.subr.bf16.mxu0 0
        %3317 = vmatpush1.bf16.xpose.msra.mxu0 %v3279
        %3318 = vmatprep.subr.bf16.mxu0 0
        %3319 = vmatpush1.bf16.xpose.msra.mxu0 %v3278
        %3320 = vmatprep.subr.bf16.mxu0 0
        %3321 = vmatpush1.bf16.xpose.msra.mxu0 %v3277
        %3322 = vmatprep.subr.bf16.mxu0 0
        %3323 = vmatpush1.bf16.xpose.msra.mxu0 %v3276
        %3324 = vmatprep.subr.bf16.mxu0 0
        %3325 = vmatpush2.bf16.xpose.msra.mxu0 %v3291
        %3326 = vmatprep.subr.bf16.mxu0 0
        %3327 = vmatpush2.bf16.xpose.msra.mxu0 %v3290
        %3328 = vmatprep.subr.bf16.mxu0 0
        %3329 = vmatpush2.bf16.xpose.msra.mxu0 %v3289
        %3330 = vmatprep.subr.bf16.mxu0 0
        %3331 = vmatpush2.bf16.xpose.msra.mxu0 %v3288
        %3332 = vmatprep.subr.bf16.mxu0 0
        %3333 = vmatpush2.bf16.xpose.msra.mxu0 %v3287
        %3334 = vmatprep.subr.bf16.mxu0 0
        %3335 = vmatpush2.bf16.xpose.msra.mxu0 %v3286
        %3336 = vmatprep.subr.bf16.mxu0 0
        %3337 = vmatpush2.bf16.xpose.msra.mxu0 %v3285
        %3338 = vmatprep.subr.bf16.mxu0 0
        %3339 = vmatpush2.bf16.xpose.msra.mxu0 %v3284
        %3340 = vmatprep.mubr.bf16.mxu0 0
        %3341 = vmatmul.mubr.bf16.gmra.mxu0 %v3196
        %v3342 = vpop.f32.mrf.mxu0
        %v3343 = vadd.f32 0.0, %v3342
        %v3344 = vpop.f32.mrf.mxu0
        %v3345 = vadd.f32 0.0, %v3344
        %v3346 = vpop.f32.mrf.mxu0
        %v3347 = vadd.f32 0.0, %v3346
        %v3348 = vpop.f32.mrf.mxu0
        %v3349 = vadd.f32 0.0, %v3348
        %3350 = vmatprep.mubr.bf16.mxu0 0
        %3351 = vmatmul.mubr.bf16.gmra.mxu0 %v3197
        %v3352 = vpop.f32.mrf.mxu0
        %v3353 = vadd.f32 0.0, %v3352
        %v3354 = vpop.f32.mrf.mxu0
        %v3355 = vadd.f32 0.0, %v3354
        %v3356 = vpop.f32.mrf.mxu0
        %v3357 = vadd.f32 0.0, %v3356
        %v3358 = vpop.f32.mrf.mxu0
        %v3359 = vadd.f32 0.0, %v3358
        %3360 = vmatprep.mubr.bf16.mxu0 0
        %3361 = vmatmul.mubr.bf16.gmra.mxu0 %v3198
        %v3362 = vpop.f32.mrf.mxu0
        %v3363 = vadd.f32 0.0, %v3362
        %v3364 = vpop.f32.mrf.mxu0
        %v3365 = vadd.f32 0.0, %v3364
        %v3366 = vpop.f32.mrf.mxu0
        %v3367 = vadd.f32 0.0, %v3366
        %v3368 = vpop.f32.mrf.mxu0
        %v3369 = vadd.f32 0.0, %v3368
        %3370 = vmatprep.mubr.bf16.mxu0 0
        %3371 = vmatmul.mubr.bf16.gmra.mxu0 %v3199
        %v3372 = vpop.f32.mrf.mxu0
        %v3373 = vadd.f32 0.0, %v3372
        %v3374 = vpop.f32.mrf.mxu0
        %v3375 = vadd.f32 0.0, %v3374
        %v3376 = vpop.f32.mrf.mxu0
        %v3377 = vadd.f32 0.0, %v3376
        %v3378 = vpop.f32.mrf.mxu0
        %v3379 = vadd.f32 0.0, %v3378
        %3380 = vmatprep.mubr.bf16.mxu0 0
        %3381 = vmatmul.mubr.bf16.gmra.mxu0 %v3200
        %v3382 = vpop.f32.mrf.mxu0
        %v3383 = vadd.f32 0.0, %v3382
        %v3384 = vpop.f32.mrf.mxu0
        %v3385 = vadd.f32 0.0, %v3384
        %v3386 = vpop.f32.mrf.mxu0
        %v3387 = vadd.f32 0.0, %v3386
        %v3388 = vpop.f32.mrf.mxu0
        %v3389 = vadd.f32 0.0, %v3388
        %3390 = vmatprep.mubr.bf16.mxu0 0
        %3391 = vmatmul.mubr.bf16.gmra.mxu0 %v3201
        %v3392 = vpop.f32.mrf.mxu0
        %v3393 = vadd.f32 0.0, %v3392
        %v3394 = vpop.f32.mrf.mxu0
        %v3395 = vadd.f32 0.0, %v3394
        %v3396 = vpop.f32.mrf.mxu0
        %v3397 = vadd.f32 0.0, %v3396
        %v3398 = vpop.f32.mrf.mxu0
        %v3399 = vadd.f32 0.0, %v3398
        %3400 = vmatprep.mubr.bf16.mxu0 0
        %3401 = vmatmul.mubr.bf16.gmra.mxu0 %v3202
        %v3402 = vpop.f32.mrf.mxu0
        %v3403 = vadd.f32 0.0, %v3402
        %v3404 = vpop.f32.mrf.mxu0
        %v3405 = vadd.f32 0.0, %v3404
        %v3406 = vpop.f32.mrf.mxu0
        %v3407 = vadd.f32 0.0, %v3406
        %v3408 = vpop.f32.mrf.mxu0
        %v3409 = vadd.f32 0.0, %v3408
        %3410 = vmatprep.mubr.bf16.mxu0 0
        %3411 = vmatmul.mubr.bf16.gmra.mxu0 %v3203
        %v3412 = vpop.f32.mrf.mxu0
        %v3413 = vadd.f32 0.0, %v3412
        %v3414 = vpop.f32.mrf.mxu0
        %v3415 = vadd.f32 0.0, %v3414
        %v3416 = vpop.f32.mrf.mxu0
        %v3417 = vadd.f32 0.0, %v3416
        %v3418 = vpop.f32.mrf.mxu0
        %v3419 = vadd.f32 0.0, %v3418
        %3420 = vdwg.mxu0
        %v3421 = vmax.f32 %v3343, %v3345
        %3422 = vmax.xlane.f32.xlu0 %v3421
        %v3423 = vpop.xlane.xlu0 %3422
        %v3424 = vmax.f32 %v3347, %v3349
        %3425 = vmax.xlane.f32.xlu0 %v3424
        %v3426 = vpop.xlane.xlu0 %3425
        %v3427 = vmax.f32 %v3353, %v3355
        %3428 = vmax.xlane.f32.xlu0 %v3427
        %v3429 = vpop.xlane.xlu0 %3428
        %v3430 = vmax.f32 %v3357, %v3359
        %3431 = vmax.xlane.f32.xlu0 %v3430
        %v3432 = vpop.xlane.xlu0 %3431
        %v3433 = vmax.f32 %v3363, %v3365
        %3434 = vmax.xlane.f32.xlu0 %v3433
        %v3435 = vpop.xlane.xlu0 %3434
        %v3436 = vmax.f32 %v3367, %v3369
        %3437 = vmax.xlane.f32.xlu0 %v3436
        %v3438 = vpop.xlane.xlu0 %3437
        %v3439 = vmax.f32 %v3373, %v3375
        %3440 = vmax.xlane.f32.xlu0 %v3439
        %v3441 = vpop.xlane.xlu0 %3440
        %v3442 = vmax.f32 %v3377, %v3379
        %3443 = vmax.xlane.f32.xlu0 %v3442
        %v3444 = vpop.xlane.xlu0 %3443
        %v3445 = vmax.f32 %v3383, %v3385
        %3446 = vmax.xlane.f32.xlu0 %v3445
        %v3447 = vpop.xlane.xlu0 %3446
        %v3448 = vmax.f32 %v3387, %v3389
        %3449 = vmax.xlane.f32.xlu0 %v3448
        %v3450 = vpop.xlane.xlu0 %3449
        %v3451 = vmax.f32 %v3393, %v3395
        %3452 = vmax.xlane.f32.xlu0 %v3451
        %v3453 = vpop.xlane.xlu0 %3452
        %v3454 = vmax.f32 %v3397, %v3399
        %3455 = vmax.xlane.f32.xlu0 %v3454
        %v3456 = vpop.xlane.xlu0 %3455
        %v3457 = vmax.f32 %v3403, %v3405
        %3458 = vmax.xlane.f32.xlu0 %v3457
        %v3459 = vpop.xlane.xlu0 %3458
        %v3460 = vmax.f32 %v3407, %v3409
        %3461 = vmax.xlane.f32.xlu0 %v3460
        %v3462 = vpop.xlane.xlu0 %3461
        %v3463 = vmax.f32 %v3413, %v3415
        %3464 = vmax.xlane.f32.xlu0 %v3463
        %v3465 = vpop.xlane.xlu0 %3464
        %v3466 = vmax.f32 %v3417, %v3419
        %3467 = vmax.xlane.f32.xlu0 %v3466
        %v3468 = vpop.xlane.xlu0 %3467
        %v3469 = vsub.f32 %v3343, %v3423
        %v3470 = vsub.f32 %v3345, %v3423
        %v3471 = vsub.f32 %v3347, %v3426
        %v3472 = vsub.f32 %v3349, %v3426
        %v3473 = vsub.f32 %v3353, %v3429
        %v3474 = vsub.f32 %v3355, %v3429
        %v3475 = vsub.f32 %v3357, %v3432
        %v3476 = vsub.f32 %v3359, %v3432
        %v3477 = vsub.f32 %v3363, %v3435
        %v3478 = vsub.f32 %v3365, %v3435
        %v3479 = vsub.f32 %v3367, %v3438
        %v3480 = vsub.f32 %v3369, %v3438
        %v3481 = vsub.f32 %v3373, %v3441
        %v3482 = vsub.f32 %v3375, %v3441
        %v3483 = vsub.f32 %v3377, %v3444
        %v3484 = vsub.f32 %v3379, %v3444
        %v3485 = vsub.f32 %v3383, %v3447
        %v3486 = vsub.f32 %v3385, %v3447
        %v3487 = vsub.f32 %v3387, %v3450
        %v3488 = vsub.f32 %v3389, %v3450
        %v3489 = vsub.f32 %v3393, %v3453
        %v3490 = vsub.f32 %v3395, %v3453
        %v3491 = vsub.f32 %v3397, %v3456
        %v3492 = vsub.f32 %v3399, %v3456
        %v3493 = vsub.f32 %v3403, %v3459
        %v3494 = vsub.f32 %v3405, %v3459
        %v3495 = vsub.f32 %v3407, %v3462
        %v3496 = vsub.f32 %v3409, %v3462
        %v3497 = vsub.f32 %v3413, %v3465
        %v3498 = vsub.f32 %v3415, %v3465
        %v3499 = vsub.f32 %v3417, %v3468
        %v3500 = vsub.f32 %v3419, %v3468
        %v3501 = vmul.f32 %v3469, 1.442695
        %v3502 = vpow.pop %v3501
        %v3503 = vmul.f32 %v3470, 1.442695
        %v3504 = vpow.pop %v3503
        %v3505 = vmul.f32 %v3471, 1.442695
        %v3506 = vpow.pop %v3505
        %v3507 = vmul.f32 %v3472, 1.442695
        %v3508 = vpow.pop %v3507
        %v3509 = vmul.f32 %v3473, 1.442695
        %v3510 = vpow.pop %v3509
        %v3511 = vmul.f32 %v3474, 1.442695
        %v3512 = vpow.pop %v3511
        %v3513 = vmul.f32 %v3475, 1.442695
        %v3514 = vpow.pop %v3513
        %v3515 = vmul.f32 %v3476, 1.442695
        %v3516 = vpow.pop %v3515
        %v3517 = vmul.f32 %v3477, 1.442695
        %v3518 = vpow.pop %v3517
        %v3519 = vmul.f32 %v3478, 1.442695
        %v3520 = vpow.pop %v3519
        %v3521 = vmul.f32 %v3479, 1.442695
        %v3522 = vpow.pop %v3521
        %v3523 = vmul.f32 %v3480, 1.442695
        %v3524 = vpow.pop %v3523
        %v3525 = vmul.f32 %v3481, 1.442695
        %v3526 = vpow.pop %v3525
        %v3527 = vmul.f32 %v3482, 1.442695
        %v3528 = vpow.pop %v3527
        %v3529 = vmul.f32 %v3483, 1.442695
        %v3530 = vpow.pop %v3529
        %v3531 = vmul.f32 %v3484, 1.442695
        %v3532 = vpow.pop %v3531
        %v3533 = vmul.f32 %v3485, 1.442695
        %v3534 = vpow.pop %v3533
        %v3535 = vmul.f32 %v3486, 1.442695
        %v3536 = vpow.pop %v3535
        %v3537 = vmul.f32 %v3487, 1.442695
        %v3538 = vpow.pop %v3537
        %v3539 = vmul.f32 %v3488, 1.442695
        %v3540 = vpow.pop %v3539
        %v3541 = vmul.f32 %v3489, 1.442695
        %v3542 = vpow.pop %v3541
        %v3543 = vmul.f32 %v3490, 1.442695
        %v3544 = vpow.pop %v3543
        %v3545 = vmul.f32 %v3491, 1.442695
        %v3546 = vpow.pop %v3545
        %v3547 = vmul.f32 %v3492, 1.442695
        %v3548 = vpow.pop %v3547
        %v3549 = vmul.f32 %v3493, 1.442695
        %v3550 = vpow.pop %v3549
        %v3551 = vmul.f32 %v3494, 1.442695
        %v3552 = vpow.pop %v3551
        %v3553 = vmul.f32 %v3495, 1.442695
        %v3554 = vpow.pop %v3553
        %v3555 = vmul.f32 %v3496, 1.442695
        %v3556 = vpow.pop %v3555
        %v3557 = vmul.f32 %v3497, 1.442695
        %v3558 = vpow.pop %v3557
        %v3559 = vmul.f32 %v3498, 1.442695
        %v3560 = vpow.pop %v3559
        %v3561 = vmul.f32 %v3499, 1.442695
        %v3562 = vpow.pop %v3561
        %v3563 = vmul.f32 %v3500, 1.442695
        %v3564 = vpow.pop %v3563
        %v3565 = vadd.f32 %v3502, %v3504
        %3566 = vadd.xlane.f32.xlu0 %v3565
        %v3567 = vpop.xlane.xlu0 %3566
        %v3568 = vadd.f32 %v3506, %v3508
        %3569 = vadd.xlane.f32.xlu0 %v3568
        %v3570 = vpop.xlane.xlu0 %3569
        %v3571 = vadd.f32 %v3510, %v3512
        %3572 = vadd.xlane.f32.xlu0 %v3571
        %v3573 = vpop.xlane.xlu0 %3572
        %v3574 = vadd.f32 %v3514, %v3516
        %3575 = vadd.xlane.f32.xlu0 %v3574
        %v3576 = vpop.xlane.xlu0 %3575
        %v3577 = vadd.f32 %v3518, %v3520
        %3578 = vadd.xlane.f32.xlu0 %v3577
        %v3579 = vpop.xlane.xlu0 %3578
        %v3580 = vadd.f32 %v3522, %v3524
        %3581 = vadd.xlane.f32.xlu0 %v3580
        %v3582 = vpop.xlane.xlu0 %3581
        %v3583 = vadd.f32 %v3526, %v3528
        %3584 = vadd.xlane.f32.xlu0 %v3583
        %v3585 = vpop.xlane.xlu0 %3584
        %v3586 = vadd.f32 %v3530, %v3532
        %3587 = vadd.xlane.f32.xlu0 %v3586
        %v3588 = vpop.xlane.xlu0 %3587
        %v3589 = vadd.f32 %v3534, %v3536
        %3590 = vadd.xlane.f32.xlu0 %v3589
        %v3591 = vpop.xlane.xlu0 %3590
        %v3592 = vadd.f32 %v3538, %v3540
        %3593 = vadd.xlane.f32.xlu0 %v3592
        %v3594 = vpop.xlane.xlu0 %3593
        %v3595 = vadd.f32 %v3542, %v3544
        %3596 = vadd.xlane.f32.xlu0 %v3595
        %v3597 = vpop.xlane.xlu0 %3596
        %v3598 = vadd.f32 %v3546, %v3548
        %3599 = vadd.xlane.f32.xlu0 %v3598
        %v3600 = vpop.xlane.xlu0 %3599
        %v3601 = vadd.f32 %v3550, %v3552
        %3602 = vadd.xlane.f32.xlu0 %v3601
        %v3603 = vpop.xlane.xlu0 %3602
        %v3604 = vadd.f32 %v3554, %v3556
        %3605 = vadd.xlane.f32.xlu0 %v3604
        %v3606 = vpop.xlane.xlu0 %3605
        %v3607 = vadd.f32 %v3558, %v3560
        %3608 = vadd.xlane.f32.xlu0 %v3607
        %v3609 = vpop.xlane.xlu0 %3608
        %v3610 = vadd.f32 %v3562, %v3564
        %3611 = vadd.xlane.f32.xlu0 %v3610
        %v3612 = vpop.xlane.xlu0 %3611
        %v3613 = vpack.c.bf16 %v3506, %v3502
        %v3614 = vpack.c.bf16 %v3508, %v3504
        %v3615 = vpack.c.bf16 %v3514, %v3510
        %v3616 = vpack.c.bf16 %v3516, %v3512
        %v3617 = vpack.c.bf16 %v3522, %v3518
        %v3618 = vpack.c.bf16 %v3524, %v3520
        %v3619 = vpack.c.bf16 %v3530, %v3526
        %v3620 = vpack.c.bf16 %v3532, %v3528
        %v3621 = vpack.c.bf16 %v3538, %v3534
        %v3622 = vpack.c.bf16 %v3540, %v3536
        %v3623 = vpack.c.bf16 %v3546, %v3542
        %v3624 = vpack.c.bf16 %v3548, %v3544
        %v3625 = vpack.c.bf16 %v3554, %v3550
        %v3626 = vpack.c.bf16 %v3556, %v3552
        %v3627 = vpack.c.bf16 %v3562, %v3558
        %v3628 = vpack.c.bf16 %v3564, %v3560
        %v3661 = vunpack.c.l.b16 %v3148
        %v3662 = vunpack.c.l.b16 %v3149
        %v3663 = vunpack.c.l.b16 %v3150
        %v3664 = vunpack.c.l.b16 %v3151
        %v3665 = vunpack.c.l.b16 %v3152
        %v3666 = vunpack.c.l.b16 %v3153
        %v3667 = vunpack.c.l.b16 %v3154
        %v3668 = vunpack.c.l.b16 %v3155
        %v3669 = vunpack.c.l.b16 %v3156
        %v3670 = vunpack.c.l.b16 %v3157
        %v3671 = vunpack.c.l.b16 %v3158
        %v3672 = vunpack.c.l.b16 %v3159
        %v3673 = vunpack.c.l.b16 %v3160
        %v3674 = vunpack.c.l.b16 %v3161
        %v3675 = vunpack.c.l.b16 %v3162
        %v3676 = vunpack.c.l.b16 %v3163
        %v3677 = vunpack.c.l.b16 %v3164
        %v3678 = vunpack.c.l.b16 %v3165
        %v3679 = vunpack.c.l.b16 %v3166
        %v3680 = vunpack.c.l.b16 %v3167
        %v3681 = vunpack.c.l.b16 %v3168
        %v3682 = vunpack.c.l.b16 %v3169
        %v3683 = vunpack.c.l.b16 %v3170
        %v3684 = vunpack.c.l.b16 %v3171
        %v3685 = vunpack.c.l.b16 %v3172
        %v3686 = vunpack.c.l.b16 %v3173
        %v3687 = vunpack.c.l.b16 %v3174
        %v3688 = vunpack.c.l.b16 %v3175
        %v3689 = vunpack.c.l.b16 %v3176
        %v3690 = vunpack.c.l.b16 %v3177
        %v3691 = vunpack.c.l.b16 %v3178
        %v3692 = vunpack.c.l.b16 %v3179
        %v3693 = vpack.c.b16 %v3662, %v3661
        %v3694 = vpack.c.b16 %v3664, %v3663
        %v3695 = vpack.c.b16 %v3666, %v3665
        %v3696 = vpack.c.b16 %v3668, %v3667
        %v3697 = vpack.c.b16 %v3670, %v3669
        %v3698 = vpack.c.b16 %v3672, %v3671
        %v3699 = vpack.c.b16 %v3674, %v3673
        %v3700 = vpack.c.b16 %v3676, %v3675
        %v3701 = vpack.c.b16 %v3678, %v3677
        %v3702 = vpack.c.b16 %v3680, %v3679
        %v3703 = vpack.c.b16 %v3682, %v3681
        %v3704 = vpack.c.b16 %v3684, %v3683
        %v3705 = vpack.c.b16 %v3686, %v3685
        %v3706 = vpack.c.b16 %v3688, %v3687
        %v3707 = vpack.c.b16 %v3690, %v3689
        %v3708 = vpack.c.b16 %v3692, %v3691
        %3725 = vmatprep.subr.bf16.mxu0 0
        %3726 = vmatpush1.bf16.msra.mxu0 %v3700
        %3727 = vmatprep.subr.bf16.mxu0 0
        %3728 = vmatpush1.bf16.msra.mxu0 %v3699
        %3729 = vmatprep.subr.bf16.mxu0 0
        %3730 = vmatpush1.bf16.msra.mxu0 %v3698
        %3731 = vmatprep.subr.bf16.mxu0 0
        %3732 = vmatpush1.bf16.msra.mxu0 %v3697
        %3733 = vmatprep.subr.bf16.mxu0 0
        %3734 = vmatpush1.bf16.msra.mxu0 %v3696
        %3735 = vmatprep.subr.bf16.mxu0 0
        %3736 = vmatpush1.bf16.msra.mxu0 %v3695
        %3737 = vmatprep.subr.bf16.mxu0 0
        %3738 = vmatpush1.bf16.msra.mxu0 %v3694
        %3739 = vmatprep.subr.bf16.mxu0 0
        %3740 = vmatpush1.bf16.msra.mxu0 %v3693
        %3741 = vmatprep.subr.bf16.mxu0 0
        %3742 = vmatpush2.bf16.msra.mxu0 %v3708
        %3743 = vmatprep.subr.bf16.mxu0 0
        %3744 = vmatpush2.bf16.msra.mxu0 %v3707
        %3745 = vmatprep.subr.bf16.mxu0 0
        %3746 = vmatpush2.bf16.msra.mxu0 %v3706
        %3747 = vmatprep.subr.bf16.mxu0 0
        %3748 = vmatpush2.bf16.msra.mxu0 %v3705
        %3749 = vmatprep.subr.bf16.mxu0 0
        %3750 = vmatpush2.bf16.msra.mxu0 %v3704
        %3751 = vmatprep.subr.bf16.mxu0 0
        %3752 = vmatpush2.bf16.msra.mxu0 %v3703
        %3753 = vmatprep.subr.bf16.mxu0 0
        %3754 = vmatpush2.bf16.msra.mxu0 %v3702
        %3755 = vmatprep.subr.bf16.mxu0 0
        %3756 = vmatpush2.bf16.msra.mxu0 %v3701
        %3757 = vmatprep.mubr.bf16.mxu0 %v3614
        %3758 = vmatmul.mubr.bf16.gmra.mxu0 %v3613
        %v3759 = vpop.f32.mrf.mxu0
        %v3760 = vadd.f32 0.0, %v3759
        %v3761 = vpop.f32.mrf.mxu0
        %v3762 = vpop.f32.mrf.mxu0
        %v3763 = vadd.f32 0.0, %v3762
        %v3764 = vpop.f32.mrf.mxu0
        %3765 = vmatprep.mubr.bf16.mxu0 %v3616
        %3766 = vmatmul.mubr.bf16.gmra.mxu0 %v3615
        %v3767 = vpop.f32.mrf.mxu0
        %v3768 = vadd.f32 0.0, %v3767
        %v3769 = vpop.f32.mrf.mxu0
        %v3770 = vpop.f32.mrf.mxu0
        %v3771 = vadd.f32 0.0, %v3770
        %v3772 = vpop.f32.mrf.mxu0
        %3773 = vmatprep.mubr.bf16.mxu0 %v3618
        %3774 = vmatmul.mubr.bf16.gmra.mxu0 %v3617
        %v3775 = vpop.f32.mrf.mxu0
        %v3776 = vadd.f32 0.0, %v3775
        %v3777 = vpop.f32.mrf.mxu0
        %v3778 = vpop.f32.mrf.mxu0
        %v3779 = vadd.f32 0.0, %v3778
        %v3780 = vpop.f32.mrf.mxu0
        %3781 = vmatprep.mubr.bf16.mxu0 %v3620
        %3782 = vmatmul.mubr.bf16.gmra.mxu0 %v3619
        %v3783 = vpop.f32.mrf.mxu0
        %v3784 = vadd.f32 0.0, %v3783
        %v3785 = vpop.f32.mrf.mxu0
        %v3786 = vpop.f32.mrf.mxu0
        %v3787 = vadd.f32 0.0, %v3786
        %v3788 = vpop.f32.mrf.mxu0
        %3789 = vmatprep.mubr.bf16.mxu0 %v3622
        %3790 = vmatmul.mubr.bf16.gmra.mxu0 %v3621
        %v3791 = vpop.f32.mrf.mxu0
        %v3792 = vadd.f32 0.0, %v3791
        %v3793 = vpop.f32.mrf.mxu0
        %v3794 = vpop.f32.mrf.mxu0
        %v3795 = vadd.f32 0.0, %v3794
        %v3796 = vpop.f32.mrf.mxu0
        %3797 = vmatprep.mubr.bf16.mxu0 %v3624
        %3798 = vmatmul.mubr.bf16.gmra.mxu0 %v3623
        %v3799 = vpop.f32.mrf.mxu0
        %v3800 = vadd.f32 0.0, %v3799
        %v3801 = vpop.f32.mrf.mxu0
        %v3802 = vpop.f32.mrf.mxu0
        %v3803 = vadd.f32 0.0, %v3802
        %v3804 = vpop.f32.mrf.mxu0
        %3805 = vmatprep.mubr.bf16.mxu0 %v3626
        %3806 = vmatmul.mubr.bf16.gmra.mxu0 %v3625
        %v3807 = vpop.f32.mrf.mxu0
        %v3808 = vadd.f32 0.0, %v3807
        %v3809 = vpop.f32.mrf.mxu0
        %v3810 = vpop.f32.mrf.mxu0
        %v3811 = vadd.f32 0.0, %v3810
        %v3812 = vpop.f32.mrf.mxu0
        %3813 = vmatprep.mubr.bf16.mxu0 %v3628
        %3814 = vmatmul.mubr.bf16.gmra.mxu0 %v3627
        %v3815 = vpop.f32.mrf.mxu0
        %v3816 = vadd.f32 0.0, %v3815
        %v3817 = vpop.f32.mrf.mxu0
        %v3818 = vpop.f32.mrf.mxu0
        %v3819 = vadd.f32 0.0, %v3818
        %v3820 = vpop.f32.mrf.mxu0
        %3821 = vdwg.mxu0
        %v3822 = vrcp.pop %v3567
        %v3823 = vrcp.pop %v3570
        %v3824 = vrcp.pop %v3573
        %v3825 = vrcp.pop %v3576
        %v3826 = vrcp.pop %v3579
        %v3827 = vrcp.pop %v3582
        %v3828 = vrcp.pop %v3585
        %v3829 = vrcp.pop %v3588
        %v3830 = vrcp.pop %v3591
        %v3831 = vrcp.pop %v3594
        %v3832 = vrcp.pop %v3597
        %v3833 = vrcp.pop %v3600
        %v3834 = vrcp.pop %v3603
        %v3835 = vrcp.pop %v3606
        %v3836 = vrcp.pop %v3609
        %v3837 = vrcp.pop %v3612
        %v3838 = vmul.f32 %v3760, %v3822
        %v3839 = vmul.f32 %v3763, %v3823
        %v3840 = vmul.f32 %v3768, %v3824
        %v3841 = vmul.f32 %v3771, %v3825
        %v3842 = vmul.f32 %v3776, %v3826
        %v3843 = vmul.f32 %v3779, %v3827
        %v3844 = vmul.f32 %v3784, %v3828
        %v3845 = vmul.f32 %v3787, %v3829
        %v3846 = vmul.f32 %v3792, %v3830
        %v3847 = vmul.f32 %v3795, %v3831
        %v3848 = vmul.f32 %v3800, %v3832
        %v3849 = vmul.f32 %v3803, %v3833
        %v3850 = vmul.f32 %v3808, %v3834
        %v3851 = vmul.f32 %v3811, %v3835
        %v3852 = vmul.f32 %v3816, %v3836
        %v3853 = vmul.f32 %v3819, %v3837
        %v3854 = vpack.c.bf16 %v3839, %v3838
        %v3855 = vpack.c.bf16 %v3841, %v3840
        %v3856 = vpack.c.bf16 %v3843, %v3842
        %v3857 = vpack.c.bf16 %v3845, %v3844
        %v3858 = vpack.c.bf16 %v3847, %v3846
        %v3859 = vpack.c.bf16 %v3849, %v3848
        %v3860 = vpack.c.bf16 %v3851, %v3850
        %v3861 = vpack.c.bf16 %v3853, %v3852
        %v3870 = vunpack.c.l.b16 %v3854
        %v3871 = vunpack.c.h.b16 %v3854
        %v3872 = vunpack.c.l.b16 %v3855
        %v3873 = vunpack.c.h.b16 %v3855
        %v3874 = vunpack.c.l.b16 %v3856
        %v3875 = vunpack.c.h.b16 %v3856
        %v3876 = vunpack.c.l.b16 %v3857
        %v3877 = vunpack.c.h.b16 %v3857
        %v3878 = vunpack.c.l.b16 %v3858
        %v3879 = vunpack.c.h.b16 %v3858
        %v3880 = vunpack.c.l.b16 %v3859
        %v3881 = vunpack.c.h.b16 %v3859
        %v3882 = vunpack.c.l.b16 %v3860
        %v3883 = vunpack.c.h.b16 %v3860
        %v3884 = vunpack.c.l.b16 %v3861
        %v3885 = vunpack.c.h.b16 %v3861
        %v3886 = vpack.c.b16 %v3870, %v3870
        %v3887 = vpack.c.b16 %v3871, %v3871
        %v3888 = vpack.c.b16 %v3872, %v3872
        %v3889 = vpack.c.b16 %v3873, %v3873
        %v3890 = vpack.c.b16 %v3874, %v3874
        %v3891 = vpack.c.b16 %v3875, %v3875
        %v3892 = vpack.c.b16 %v3876, %v3876
        %v3893 = vpack.c.b16 %v3877, %v3877
        %v3894 = vpack.c.b16 %v3878, %v3878
        %v3895 = vpack.c.b16 %v3879, %v3879
        %v3896 = vpack.c.b16 %v3880, %v3880
        %v3897 = vpack.c.b16 %v3881, %v3881
        %v3898 = vpack.c.b16 %v3882, %v3882
        %v3899 = vpack.c.b16 %v3883, %v3883
        %v3900 = vpack.c.b16 %v3884, %v3884
        %v3901 = vpack.c.b16 %v3885, %v3885
        %3918 = vst [vmem:[#allocation3 + $0x4] sm:$0xf] %v3886
        %3919 = vst [vmem:[#allocation3 + $0xc] sm:$0xf] %v3887
        %3920 = vst [vmem:[#allocation3 + $0x14] sm:$0xf] %v3888
        %3921 = vst [vmem:[#allocation3 + $0x1c] sm:$0xf] %v3889
        %3922 = vst [vmem:[#allocation3 + $0x24] sm:$0xf] %v3890
        %3923 = vst [vmem:[#allocation3 + $0x2c] sm:$0xf] %v3891
        %3924 = vst [vmem:[#allocation3 + $0x34] sm:$0xf] %v3892
        %3925 = vst [vmem:[#allocation3 + $0x3c] sm:$0xf] %v3893
        %3926 = vst [vmem:[#allocation3 + $0x44] sm:$0xf] %v3894
        %3927 = vst [vmem:[#allocation3 + $0x4c] sm:$0xf] %v3895
        %3928 = vst [vmem:[#allocation3 + $0x54] sm:$0xf] %v3896
        %3929 = vst [vmem:[#allocation3 + $0x5c] sm:$0xf] %v3897
        %3930 = vst [vmem:[#allocation3 + $0x64] sm:$0xf] %v3898
        %3931 = vst [vmem:[#allocation3 + $0x6c] sm:$0xf] %v3899
        %3932 = vst [vmem:[#allocation3 + $0x74] sm:$0xf] %v3900
        %3933 = vst [vmem:[#allocation3 + $0x7c] sm:$0xf] %v3901
        %v3934 = vld [vmem:[#allocation3] sm:$0xff]
        %v3935 = vld [vmem:[#allocation3 + $0x8] sm:$0xff]
        %v3936 = vld [vmem:[#allocation3 + $0x10] sm:$0xff]
        %v3937 = vld [vmem:[#allocation3 + $0x18] sm:$0xff]
        %v3938 = vld [vmem:[#allocation3 + $0x20] sm:$0xff]
        %v3939 = vld [vmem:[#allocation3 + $0x28] sm:$0xff]
        %v3940 = vld [vmem:[#allocation3 + $0x30] sm:$0xff]
        %v3941 = vld [vmem:[#allocation3 + $0x38] sm:$0xff]
        %v3942 = vld [vmem:[#allocation3 + $0x40] sm:$0xff]
        %v3943 = vld [vmem:[#allocation3 + $0x48] sm:$0xff]
        %v3944 = vld [vmem:[#allocation3 + $0x50] sm:$0xff]
        %v3945 = vld [vmem:[#allocation3 + $0x58] sm:$0xff]
        %v3946 = vld [vmem:[#allocation3 + $0x60] sm:$0xff]
        %v3947 = vld [vmem:[#allocation3 + $0x68] sm:$0xff]
        %v3948 = vld [vmem:[#allocation3 + $0x70] sm:$0xff]
        %v3949 = vld [vmem:[#allocation3 + $0x78] sm:$0xff]
        %v3950 = vld [vmem:[#allocation10] sm:$0xff]
        %v3951 = vld [vmem:[#allocation10 + $0x8] sm:$0xff]
        %v3952 = vld [vmem:[#allocation10 + $0x10] sm:$0xff]
        %v3953 = vld [vmem:[#allocation10 + $0x18] sm:$0xff]
        %v3954 = vld [vmem:[#allocation10 + $0x20] sm:$0xff]
        %v3955 = vld [vmem:[#allocation10 + $0x28] sm:$0xff]
        %v3956 = vld [vmem:[#allocation10 + $0x30] sm:$0xff]
        %v3957 = vld [vmem:[#allocation10 + $0x38] sm:$0xff]
        %v3958 = vld [vmem:[#allocation10 + $0x40] sm:$0xff]
        %v3959 = vld [vmem:[#allocation10 + $0x48] sm:$0xff]
        %v3960 = vld [vmem:[#allocation10 + $0x50] sm:$0xff]
        %v3961 = vld [vmem:[#allocation10 + $0x58] sm:$0xff]
        %v3962 = vld [vmem:[#allocation10 + $0x60] sm:$0xff]
        %v3963 = vld [vmem:[#allocation10 + $0x68] sm:$0xff]
        %v3964 = vld [vmem:[#allocation10 + $0x70] sm:$0xff]
        %v3965 = vld [vmem:[#allocation10 + $0x78] sm:$0xff]
        %v3966 = vld [vmem:[#allocation10 + $0x80] sm:$0xff]
        %v3967 = vld [vmem:[#allocation10 + $0x88] sm:$0xff]
        %v3968 = vld [vmem:[#allocation10 + $0x90] sm:$0xff]
        %v3969 = vld [vmem:[#allocation10 + $0x98] sm:$0xff]
        %v3970 = vld [vmem:[#allocation10 + $0xa0] sm:$0xff]
        %v3971 = vld [vmem:[#allocation10 + $0xa8] sm:$0xff]
        %v3972 = vld [vmem:[#allocation10 + $0xb0] sm:$0xff]
        %v3973 = vld [vmem:[#allocation10 + $0xb8] sm:$0xff]
        %v3974 = vld [vmem:[#allocation10 + $0xc0] sm:$0xff]
        %v3975 = vld [vmem:[#allocation10 + $0xc8] sm:$0xff]
        %v3976 = vld [vmem:[#allocation10 + $0xd0] sm:$0xff]
        %v3977 = vld [vmem:[#allocation10 + $0xd8] sm:$0xff]
        %v3978 = vld [vmem:[#allocation10 + $0xe0] sm:$0xff]
        %v3979 = vld [vmem:[#allocation10 + $0xe8] sm:$0xff]
        %v3980 = vld [vmem:[#allocation10 + $0xf0] sm:$0xff]
        %v3981 = vld [vmem:[#allocation10 + $0xf8] sm:$0xff]
        %v3982 = vld [vmem:[%s4] sm:$0x3]
        %v3984 = vlaneseq
        %v3985 = vshrl.u32 %v3984, 7
        %v3986 = vsub.s32 0, %v3985
        %v3987 = vrot.slane %v3982, %v3986
        %v3988 = vlaneseq
        %v3989 = vshrl.u32 %v3988, 7
        %v3990 = vsub.s32 1, %v3989
        %v3991 = vrot.slane %v3982, %v3990
        %v4010 = vunpack.c.l.b16 %v3934
        %v4011 = vunpack.c.h.b16 %v3934
        %v4012 = vunpack.c.l.b16 %v3935
        %v4013 = vunpack.c.h.b16 %v3935
        %v4014 = vunpack.c.l.b16 %v3936
        %v4015 = vunpack.c.h.b16 %v3936
        %v4016 = vunpack.c.l.b16 %v3937
        %v4017 = vunpack.c.h.b16 %v3937
        %v4018 = vunpack.c.l.b16 %v3938
        %v4019 = vunpack.c.h.b16 %v3938
        %v4020 = vunpack.c.l.b16 %v3939
        %v4021 = vunpack.c.h.b16 %v3939
        %v4022 = vunpack.c.l.b16 %v3940
        %v4023 = vunpack.c.h.b16 %v3940
        %v4024 = vunpack.c.l.b16 %v3941
        %v4025 = vunpack.c.h.b16 %v3941
        %v4026 = vunpack.c.l.b16 %v3942
        %v4027 = vunpack.c.h.b16 %v3942
        %v4028 = vunpack.c.l.b16 %v3943
        %v4029 = vunpack.c.h.b16 %v3943
        %v4030 = vunpack.c.l.b16 %v3944
        %v4031 = vunpack.c.h.b16 %v3944
        %v4032 = vunpack.c.l.b16 %v3945
        %v4033 = vunpack.c.h.b16 %v3945
        %v4034 = vunpack.c.l.b16 %v3946
        %v4035 = vunpack.c.h.b16 %v3946
        %v4036 = vunpack.c.l.b16 %v3947
        %v4037 = vunpack.c.h.b16 %v3947
        %v4038 = vunpack.c.l.b16 %v3948
        %v4039 = vunpack.c.h.b16 %v3948
        %v4040 = vunpack.c.l.b16 %v3949
        %v4041 = vunpack.c.h.b16 %v3949
        %v4042 = vpack.c.b16 %v4012, %v4010
        %v4043 = vpack.c.b16 %v4013, %v4011
        %v4044 = vpack.c.b16 %v4016, %v4014
        %v4045 = vpack.c.b16 %v4017, %v4015
        %v4046 = vpack.c.b16 %v4020, %v4018
        %v4047 = vpack.c.b16 %v4021, %v4019
        %v4048 = vpack.c.b16 %v4024, %v4022
        %v4049 = vpack.c.b16 %v4025, %v4023
        %v4050 = vpack.c.b16 %v4028, %v4026
        %v4051 = vpack.c.b16 %v4029, %v4027
        %v4052 = vpack.c.b16 %v4032, %v4030
        %v4053 = vpack.c.b16 %v4033, %v4031
        %v4054 = vpack.c.b16 %v4036, %v4034
        %v4055 = vpack.c.b16 %v4037, %v4035
        %v4056 = vpack.c.b16 %v4040, %v4038
        %v4057 = vpack.c.b16 %v4041, %v4039
        %v4106 = vunpack.c.l.b16 %v3950
        %v4107 = vunpack.c.h.b16 %v3950
        %v4108 = vunpack.c.l.b16 %v3951
        %v4109 = vunpack.c.h.b16 %v3951
        %v4110 = vunpack.c.l.b16 %v3952
        %v4111 = vunpack.c.h.b16 %v3952
        %v4112 = vunpack.c.l.b16 %v3953
        %v4113 = vunpack.c.h.b16 %v3953
        %v4114 = vunpack.c.l.b16 %v3954
        %v4115 = vunpack.c.h.b16 %v3954
        %v4116 = vunpack.c.l.b16 %v3955
        %v4117 = vunpack.c.h.b16 %v3955
        %v4118 = vunpack.c.l.b16 %v3956
        %v4119 = vunpack.c.h.b16 %v3956
        %v4120 = vunpack.c.l.b16 %v3957
        %v4121 = vunpack.c.h.b16 %v3957
        %v4122 = vunpack.c.l.b16 %v3958
        %v4123 = vunpack.c.h.b16 %v3958
        %v4124 = vunpack.c.l.b16 %v3959
        %v4125 = vunpack.c.h.b16 %v3959
        %v4126 = vunpack.c.l.b16 %v3960
        %v4127 = vunpack.c.h.b16 %v3960
        %v4128 = vunpack.c.l.b16 %v3961
        %v4129 = vunpack.c.h.b16 %v3961
        %v4130 = vunpack.c.l.b16 %v3962
        %v4131 = vunpack.c.h.b16 %v3962
        %v4132 = vunpack.c.l.b16 %v3963
        %v4133 = vunpack.c.h.b16 %v3963
        %v4134 = vunpack.c.l.b16 %v3964
        %v4135 = vunpack.c.h.b16 %v3964
        %v4136 = vunpack.c.l.b16 %v3965
        %v4137 = vunpack.c.h.b16 %v3965
        %v4138 = vunpack.c.l.b16 %v3966
        %v4139 = vunpack.c.h.b16 %v3966
        %v4140 = vunpack.c.l.b16 %v3967
        %v4141 = vunpack.c.h.b16 %v3967
        %v4142 = vunpack.c.l.b16 %v3968
        %v4143 = vunpack.c.h.b16 %v3968
        %v4144 = vunpack.c.l.b16 %v3969
        %v4145 = vunpack.c.h.b16 %v3969
        %v4146 = vunpack.c.l.b16 %v3970
        %v4147 = vunpack.c.h.b16 %v3970
        %v4148 = vunpack.c.l.b16 %v3971
        %v4149 = vunpack.c.h.b16 %v3971
        %v4150 = vunpack.c.l.b16 %v3972
        %v4151 = vunpack.c.h.b16 %v3972
        %v4152 = vunpack.c.l.b16 %v3973
        %v4153 = vunpack.c.h.b16 %v3973
        %v4154 = vunpack.c.l.b16 %v3974
        %v4155 = vunpack.c.h.b16 %v3974
        %v4156 = vunpack.c.l.b16 %v3975
        %v4157 = vunpack.c.h.b16 %v3975
        %v4158 = vunpack.c.l.b16 %v3976
        %v4159 = vunpack.c.h.b16 %v3976
        %v4160 = vunpack.c.l.b16 %v3977
        %v4161 = vunpack.c.h.b16 %v3977
        %v4162 = vunpack.c.l.b16 %v3978
        %v4163 = vunpack.c.h.b16 %v3978
        %v4164 = vunpack.c.l.b16 %v3979
        %v4165 = vunpack.c.h.b16 %v3979
        %v4166 = vunpack.c.l.b16 %v3980
        %v4167 = vunpack.c.h.b16 %v3980
        %v4168 = vunpack.c.l.b16 %v3981
        %v4169 = vunpack.c.h.b16 %v3981
        %v4170 = vpack.c.b16 %v4108, %v4106
        %v4171 = vpack.c.b16 %v4109, %v4107
        %v4172 = vpack.c.b16 %v4112, %v4110
        %v4173 = vpack.c.b16 %v4113, %v4111
        %v4174 = vpack.c.b16 %v4116, %v4114
        %v4175 = vpack.c.b16 %v4117, %v4115
        %v4176 = vpack.c.b16 %v4120, %v4118
        %v4177 = vpack.c.b16 %v4121, %v4119
        %v4178 = vpack.c.b16 %v4124, %v4122
        %v4179 = vpack.c.b16 %v4125, %v4123
        %v4180 = vpack.c.b16 %v4128, %v4126
        %v4181 = vpack.c.b16 %v4129, %v4127
        %v4182 = vpack.c.b16 %v4132, %v4130
        %v4183 = vpack.c.b16 %v4133, %v4131
        %v4184 = vpack.c.b16 %v4136, %v4134
        %v4185 = vpack.c.b16 %v4137, %v4135
        %v4186 = vpack.c.b16 %v4140, %v4138
        %v4187 = vpack.c.b16 %v4141, %v4139
        %v4188 = vpack.c.b16 %v4144, %v4142
        %v4189 = vpack.c.b16 %v4145, %v4143
        %v4190 = vpack.c.b16 %v4148, %v4146
        %v4191 = vpack.c.b16 %v4149, %v4147
        %v4192 = vpack.c.b16 %v4152, %v4150
        %v4193 = vpack.c.b16 %v4153, %v4151
        %v4194 = vpack.c.b16 %v4156, %v4154
        %v4195 = vpack.c.b16 %v4157, %v4155
        %v4196 = vpack.c.b16 %v4160, %v4158
        %v4197 = vpack.c.b16 %v4161, %v4159
        %v4198 = vpack.c.b16 %v4164, %v4162
        %v4199 = vpack.c.b16 %v4165, %v4163
        %v4200 = vpack.c.b16 %v4168, %v4166
        %v4201 = vpack.c.b16 %v4169, %v4167
        %4234 = vmatprep.subr.bf16.mxu0 %v4185
        %4235 = vmatpush1.bf16.msra.mxu0 %v4184
        %4236 = vmatprep.subr.bf16.mxu0 %v4183
        %4237 = vmatpush1.bf16.msra.mxu0 %v4182
        %4238 = vmatprep.subr.bf16.mxu0 %v4181
        %4239 = vmatpush1.bf16.msra.mxu0 %v4180
        %4240 = vmatprep.subr.bf16.mxu0 %v4179
        %4241 = vmatpush1.bf16.msra.mxu0 %v4178
        %4242 = vmatprep.subr.bf16.mxu0 %v4177
        %4243 = vmatpush1.bf16.msra.mxu0 %v4176
        %4244 = vmatprep.subr.bf16.mxu0 %v4175
        %4245 = vmatpush1.bf16.msra.mxu0 %v4174
        %4246 = vmatprep.subr.bf16.mxu0 %v4173
        %4247 = vmatpush1.bf16.msra.mxu0 %v4172
        %4248 = vmatprep.subr.bf16.mxu0 %v4171
        %4249 = vmatpush1.bf16.msra.mxu0 %v4170
        %4250 = vmatprep.subr.bf16.mxu0 %v4201
        %4251 = vmatpush2.bf16.msra.mxu0 %v4200
        %4252 = vmatprep.subr.bf16.mxu0 %v4199
        %4253 = vmatpush2.bf16.msra.mxu0 %v4198
        %4254 = vmatprep.subr.bf16.mxu0 %v4197
        %4255 = vmatpush2.bf16.msra.mxu0 %v4196
        %4256 = vmatprep.subr.bf16.mxu0 %v4195
        %4257 = vmatpush2.bf16.msra.mxu0 %v4194
        %4258 = vmatprep.subr.bf16.mxu0 %v4193
        %4259 = vmatpush2.bf16.msra.mxu0 %v4192
        %4260 = vmatprep.subr.bf16.mxu0 %v4191
        %4261 = vmatpush2.bf16.msra.mxu0 %v4190
        %4262 = vmatprep.subr.bf16.mxu0 %v4189
        %4263 = vmatpush2.bf16.msra.mxu0 %v4188
        %4264 = vmatprep.subr.bf16.mxu0 %v4187
        %4265 = vmatpush2.bf16.msra.mxu0 %v4186
        %4266 = vmatprep.mubr.bf16.mxu0 %v4043
        %4267 = vmatmul.mubr.bf16.gmra.mxu0 %v4042
        %v4268 = vpop.f32.mrf.mxu0
        %v4269 = vadd.f32 %v3987, %v4268
        %v4270 = vpop.f32.mrf.mxu0
        %v4271 = vadd.f32 %v3991, %v4270
        %v4272 = vpop.f32.mrf.mxu0
        %v4273 = vadd.f32 %v3987, %v4272
        %v4274 = vpop.f32.mrf.mxu0
        %v4275 = vadd.f32 %v3991, %v4274
        %4276 = vmatprep.mubr.bf16.mxu0 %v4045
        %4277 = vmatmul.mubr.bf16.gmra.mxu0 %v4044
        %v4278 = vpop.f32.mrf.mxu0
        %v4279 = vadd.f32 %v3987, %v4278
        %v4280 = vpop.f32.mrf.mxu0
        %v4281 = vadd.f32 %v3991, %v4280
        %v4282 = vpop.f32.mrf.mxu0
        %v4283 = vadd.f32 %v3987, %v4282
        %v4284 = vpop.f32.mrf.mxu0
        %v4285 = vadd.f32 %v3991, %v4284
        %4286 = vmatprep.mubr.bf16.mxu0 %v4047
        %4287 = vmatmul.mubr.bf16.gmra.mxu0 %v4046
        %v4288 = vpop.f32.mrf.mxu0
        %v4289 = vadd.f32 %v3987, %v4288
        %v4290 = vpop.f32.mrf.mxu0
        %v4291 = vadd.f32 %v3991, %v4290
        %v4292 = vpop.f32.mrf.mxu0
        %v4293 = vadd.f32 %v3987, %v4292
        %v4294 = vpop.f32.mrf.mxu0
        %v4295 = vadd.f32 %v3991, %v4294
        %4296 = vmatprep.mubr.bf16.mxu0 %v4049
        %4297 = vmatmul.mubr.bf16.gmra.mxu0 %v4048
        %v4298 = vpop.f32.mrf.mxu0
        %v4299 = vadd.f32 %v3987, %v4298
        %v4300 = vpop.f32.mrf.mxu0
        %v4301 = vadd.f32 %v3991, %v4300
        %v4302 = vpop.f32.mrf.mxu0
        %v4303 = vadd.f32 %v3987, %v4302
        %v4304 = vpop.f32.mrf.mxu0
        %v4305 = vadd.f32 %v3991, %v4304
        %4306 = vmatprep.mubr.bf16.mxu0 %v4051
        %4307 = vmatmul.mubr.bf16.gmra.mxu0 %v4050
        %v4308 = vpop.f32.mrf.mxu0
        %v4309 = vadd.f32 %v3987, %v4308
        %v4310 = vpop.f32.mrf.mxu0
        %v4311 = vadd.f32 %v3991, %v4310
        %v4312 = vpop.f32.mrf.mxu0
        %v4313 = vadd.f32 %v3987, %v4312
        %v4314 = vpop.f32.mrf.mxu0
        %v4315 = vadd.f32 %v3991, %v4314
        %4316 = vmatprep.mubr.bf16.mxu0 %v4053
        %4317 = vmatmul.mubr.bf16.gmra.mxu0 %v4052
        %v4318 = vpop.f32.mrf.mxu0
        %v4319 = vadd.f32 %v3987, %v4318
        %v4320 = vpop.f32.mrf.mxu0
        %v4321 = vadd.f32 %v3991, %v4320
        %v4322 = vpop.f32.mrf.mxu0
        %v4323 = vadd.f32 %v3987, %v4322
        %v4324 = vpop.f32.mrf.mxu0
        %v4325 = vadd.f32 %v3991, %v4324
        %4326 = vmatprep.mubr.bf16.mxu0 %v4055
        %4327 = vmatmul.mubr.bf16.gmra.mxu0 %v4054
        %v4328 = vpop.f32.mrf.mxu0
        %v4329 = vadd.f32 %v3987, %v4328
        %v4330 = vpop.f32.mrf.mxu0
        %v4331 = vadd.f32 %v3991, %v4330
        %v4332 = vpop.f32.mrf.mxu0
        %v4333 = vadd.f32 %v3987, %v4332
        %v4334 = vpop.f32.mrf.mxu0
        %v4335 = vadd.f32 %v3991, %v4334
        %4336 = vmatprep.mubr.bf16.mxu0 %v4057
        %4337 = vmatmul.mubr.bf16.gmra.mxu0 %v4056
        %v4338 = vpop.f32.mrf.mxu0
        %v4339 = vadd.f32 %v3987, %v4338
        %v4340 = vpop.f32.mrf.mxu0
        %v4341 = vadd.f32 %v3991, %v4340
        %v4342 = vpop.f32.mrf.mxu0
        %v4343 = vadd.f32 %v3987, %v4342
        %v4344 = vpop.f32.mrf.mxu0
        %v4345 = vadd.f32 %v3991, %v4344
        %4346 = vdwg.mxu0
        %4347 = vst [vmem:[%s298] sm:$0xff] %v4269
        %4348 = vst [vmem:[%s298 + $0x8] sm:$0xff] %v4271
        %4349 = vst [vmem:[%s298 + $0x10] sm:$0xff] %v4273
        %4350 = vst [vmem:[%s298 + $0x18] sm:$0xff] %v4275
        %4351 = vst [vmem:[%s298 + $0x20] sm:$0xff] %v4279
        %4352 = vst [vmem:[%s298 + $0x28] sm:$0xff] %v4281
        %4353 = vst [vmem:[%s298 + $0x30] sm:$0xff] %v4283
        %4354 = vst [vmem:[%s298 + $0x38] sm:$0xff] %v4285
        %4355 = vst [vmem:[%s298 + $0x40] sm:$0xff] %v4289
        %4356 = vst [vmem:[%s298 + $0x48] sm:$0xff] %v4291
        %4357 = vst [vmem:[%s298 + $0x50] sm:$0xff] %v4293
        %4358 = vst [vmem:[%s298 + $0x58] sm:$0xff] %v4295
        %4359 = vst [vmem:[%s298 + $0x60] sm:$0xff] %v4299
        %4360 = vst [vmem:[%s298 + $0x68] sm:$0xff] %v4301
        %4361 = vst [vmem:[%s298 + $0x70] sm:$0xff] %v4303
        %4362 = vst [vmem:[%s298 + $0x78] sm:$0xff] %v4305
        %4363 = vst [vmem:[%s298 + $0x80] sm:$0xff] %v4309
        %4364 = vst [vmem:[%s298 + $0x88] sm:$0xff] %v4311
        %4365 = vst [vmem:[%s298 + $0x90] sm:$0xff] %v4313
        %4366 = vst [vmem:[%s298 + $0x98] sm:$0xff] %v4315
        %4367 = vst [vmem:[%s298 + $0xa0] sm:$0xff] %v4319
        %4368 = vst [vmem:[%s298 + $0xa8] sm:$0xff] %v4321
        %4369 = vst [vmem:[%s298 + $0xb0] sm:$0xff] %v4323
        %4370 = vst [vmem:[%s298 + $0xb8] sm:$0xff] %v4325
        %4371 = vst [vmem:[%s298 + $0xc0] sm:$0xff] %v4329
        %4372 = vst [vmem:[%s298 + $0xc8] sm:$0xff] %v4331
        %4373 = vst [vmem:[%s298 + $0xd0] sm:$0xff] %v4333
        %4374 = vst [vmem:[%s298 + $0xd8] sm:$0xff] %v4335
        %4375 = vst [vmem:[%s298 + $0xe0] sm:$0xff] %v4339
        %4376 = vst [vmem:[%s298 + $0xe8] sm:$0xff] %v4341
        %4377 = vst [vmem:[%s298 + $0xf0] sm:$0xff] %v4343
        %4378 = vst [vmem:[%s298 + $0xf8] sm:$0xff] %v4345
        %s4379 = sand.u32 %s156, 1
        %s4380 = scalar_lea.sflag [#allocation6], %s4379
        %s4381 = sand.u32 %s156, 1
        %s4382 = smul.addr %s4381, 256
        %s4383 = scalar_lea.vmem [#allocation12], %s4382
        // Predicated region
        $region61: #{tpu_custom_call.1} parent=39 // pred_check
          %p4384 = pneg %p166
        $region62: #{tpu_custom_call.1} parent=39 // pred_check_branch
          %4386 = sbr.rel (%p4384) target = $region64
        $region63: #{tpu_custom_call.1} parent=39 // pred_region
          %s4387 = smul.u32 16, %s29
          %s4389 = ssub.s32 4096, 4096
          %4390 = vsyncadd %s4380, %s4389
          %s4391 = smul.addr %s4387, 2
          %s4392 = smul.addr %s28, 64
          %s4393 = sadd.s32 %s4391, %s4392
          %s4394 = smul.addr %s4393, 128
          %s4395 = scalar_lea.hbm %s5, %s4394
          %s4396 = sshll.u32 %s4383, 4
          %s4397 = int_to_ptr.vmem [resolvable:$true] %s4396
          %4402 = dma.vmem_to_hbm [thread:$0]  %s4397, 4096, %s4395, %s4380, 256, 256, 16
        $region64: #{tpu_custom_call.1} parent=39 // pred_fallthru
          _
      $region40: #{tpu_custom_call.1} parent=5 // pred_fallthru
        _
      %p4403 = scmp.le.s32.totalorder 2, %s19
      // Predicated region
      $region65: #{tpu_custom_call.1} parent=5 // pred_check
        %p4404 = pneg %p4403
      $region66: #{tpu_custom_call.1} parent=5 // pred_check_branch
        %4406 = sbr.rel (%p4404) target = $region68
      $region67: #{tpu_custom_call.1} parent=5 // pred_region
        %s4407 = ssub.s32 %s19, 2
        // Predicated region
        $region69: #{tpu_custom_call.1} parent=67 // pred_check
          %p4408 = pneg %p172
        $region70: #{tpu_custom_call.1} parent=67 // pred_check_branch
          %4410 = sbr.rel (%p4408) target = $region72
        $region71: #{tpu_custom_call.1} parent=67 // pred_region
          %s4411 = sand.u32 %s157, 1
          %s4412 = scalar_lea.sflag [#allocation6], %s4411
          %s4413 = sand.u32 %s157, 1
          %s4414 = smul.addr %s4413, 256
          %s4415 = scalar_lea.vmem [#allocation12], %s4414
          %4416 = dma.done %s4412, 4096
        $region72: #{tpu_custom_call.1} parent=67 // pred_fallthru
          _
      $region68: #{tpu_custom_call.1} parent=5 // pred_fallthru
        _
    $region6: #{tpu_custom_call.1} parent=1 // loop_footer
      %s23 = sadd.s32 1, %s19
    $region7: #{tpu_custom_call.1} parent=1 // loop_footer_branch
      %18 = sbr.rel target = $region3
    $region8: #{tpu_custom_call.1} parent=1 // loop_exit
      _
    %4417 = vsyncpa [#allocation5], 1
    %s4418 = scalar_lea.sflag [#allocation5], 1
    %4419 = vsyncpa %s4418, 1
    %4420 = vsyncpa [#allocation8], 1
    %4421 = vsyncpa [#allocation11], 1
    %4422 = vsyncpa [#allocation6], 1
    %s4423 = scalar_lea.sflag [#allocation6], 1
    %4424 = vsyncpa %s4423, 1

</llo_original>
